<compile_context>
chip_gen: v5e
topology: v5e:2x2
jax: 0.10.0
libtpu: 0.0.40
codegen_flags: <defaults>
</compile_context>

<pallas_src>
import jax
import jax.numpy as jnp
from jax.experimental import pallas as pl
from jax.experimental.pallas import tpu as pltpu

EMB_DIM = 300   # LSTM input_size hardcoded by the PyTorch module
EMB_PAD = 384   # zero-padded, lane-aligned K for the layer-1 input projection


# ---------------------------------------------------------------------------
# Fused kernel
# ---------------------------------------------------------------------------
def classifier_kernel(x_ref, wih1_ref, whh1_ref, b1_ref,
                      wih2_ref, whh2_ref, b2_ref, idx_ref,
                      wl1_ref, bl1_ref, wl2_ref, bl2_ref,
                      out_ref,
                      xp_ref, y1f_ref, y1b_ref, y2f_ref, y2b_ref):
    L, B2, _ = x_ref.shape          # time-major input; B2 = 2*B (both sentences stacked)
    H = whh1_ref.shape[0]
    G = 4 * H                       # per-direction gate width
    B = B2 // 2

    def input_proj(x2d, wih_ref, b_ref):
        # Hoisted input projection: all timesteps and BOTH directions in one matmul,
        # bias folded in here (off the recurrence critical path).
        xp = jnp.dot(x2d, wih_ref[...], preferred_element_type=jnp.float32) + b_ref[...]
        xp_ref[...] = xp.reshape(L, B2, 2 * G)

    def recurrence(whh_ref, yf_ref, yb_ref):
        whh = whh_ref[...]                           # (H, 8H) bf16 = [Whh_f | Whh_b]
        h = jnp.zeros((2 * B2, H), jnp.float32)      # rows [0:B2]=fwd, [B2:]=bwd (f32 state)
        c = jnp.zeros((2 * B2, H), jnp.float32)
        for t in range(L):                           # static unroll: L is small & known
            g_f = xp_ref[t, :, :G]                   # fwd consumes original time t
            g_b = xp_ref[L - 1 - t, :, G:]           # bwd consumes original time L-1-t
            if t > 0:                                # h == 0 at t == 0 -> skip the matmul
                rec = jnp.dot(h.astype(whh.dtype), whh,
                              preferred_element_type=jnp.float32)   # (2*B2, 8H)
                g_f = g_f + rec[:B2, :G]
                g_b = g_b + rec[B2:, G:]
            gates = jnp.concatenate([g_f, g_b], axis=0)              # (2*B2, 4H)
            # gate columns pre-reordered to [i, f, o, g]: one contiguous sigmoid slab
            sig = jax.nn.sigmoid(gates[:, :3 * H])
            i_g = sig[:, :H]
            f_g = sig[:, H:2 * H]
            o_g = sig[:, 2 * H:]
            g_g = jnp.tanh(gates[:, 3 * H:])
            c = f_g * c + i_g * g_g
            h = o_g * jnp.tanh(c)
            yf_ref[t] = h[:B2]                       # fwd output at original time t
            yb_ref[L - 1 - t] = h[B2:]               # bwd output at original time L-1-t

    # ----- layer 1 -----
    input_proj(x_ref[...].reshape(L * B2, x_ref.shape[2]), wih1_ref, b1_ref)
    recurrence(whh1_ref, y1f_ref, y1b_ref)

    # ----- layer 2 (consumes [fwd | bwd] concat of layer 1, kept in VMEM) -----
    y1 = jnp.concatenate([y1f_ref[...], y1b_ref[...]], axis=2)       # (L, B2, 2H)
    input_proj(y1.reshape(L * B2, 2 * H).astype(wih2_ref.dtype), wih2_ref, b2_ref)
    recurrence(whh2_ref, y2f_ref, y2b_ref)

    # ----- in-kernel gathers (one-hot masked reductions over L) -----
    y2 = jnp.concatenate([y2f_ref[...], y2b_ref[...]], axis=2)       # (L, B2, 2H)
    y2_s1 = y2[:, :B, :]                                             # sentence 1 rows
    y2_s2 = y2[:, B:, :]                                             # sentence 2 rows
    idx = idx_ref[...]                                               # (4, B) int32
    tpos = jax.lax.broadcasted_iota(jnp.int32, (L, B), 0)

    def select_time(y, pos_row):
        m = (tpos == pos_row).astype(jnp.float32)[:, :, None]        # (L, B, 1)
        return jnp.sum(y * m, axis=0)                                # (B, C)

    t1 = select_time(y2_s1, idx[0:1, :])               # target-term vectors (full 2H)
    t2 = select_time(y2_s2, idx[1:2, :])
    e1 = select_time(y2_s1[:, :, :H], idx[2:3, :])     # fwd half @ sentence_lengths
    e2 = select_time(y2_s2[:, :, :H], idx[3:4, :])
    s1 = y2_s1[0, :, H:]                               # bwd half @ t = 0
    s2 = y2_s2[0, :, H:]

    # ----- head: |diff| + cosine -> lin1 -> relu -> (folded bn2) -> lin2 -> sigmoid -----
    eps = 1e-6   # torch.nn.CosineSimilarity(dim=1, eps=1e-6)

    def cos(a, b):
        w12 = jnp.sum(a * b, axis=1, keepdims=True)
        wa = jnp.sum(a * a, axis=1, keepdims=True)
        wb = jnp.sum(b * b, axis=1, keepdims=True)
        return w12 / jnp.sqrt(jnp.maximum(wa * wb, eps * eps))

    pad = wl1_ref.shape[0] - (4 * H + 3)               # lane-align the feature dim
    feats = jnp.concatenate(
        [jnp.abs(t1 - t2), jnp.abs(s1 - s2), jnp.abs(e1 - e2),
         cos(t1, t2), cos(s1, s2), cos(e1, e2),
         jnp.zeros((B, pad), jnp.float32)], axis=1)    # (B, FEAT_PAD)
    # dropout is identity in eval mode
    hmid = jnp.dot(feats.astype(wl1_ref.dtype), wl1_ref[...],
                   preferred_element_type=jnp.float32) + bl1_ref[...]
    hmid = jnp.maximum(hmid, 0.0)
    # lin2 (eval-mode BatchNorm folded into the weights) as a lane reduction (N = 1)
    logits = jnp.sum(hmid * wl2_ref[...], axis=1, keepdims=True) + bl2_ref[...]
    out_ref[...] = jnp.concatenate([logits, jax.nn.sigmoid(logits)], axis=1)   # (B, 2)


def classifier_pallas(kp, x, idx):
    L, B2, _ = x.shape
    B = B2 // 2
    H = kp["whh1"].shape[0]
    vmem = pl.BlockSpec(memory_space=pltpu.MemorySpace.VMEM)
    return pl.pallas_call(
        classifier_kernel,
        out_shape=jax.ShapeDtypeStruct((B, 2), jnp.float32),
        in_specs=[vmem] * 12,
        out_specs=vmem,
        scratch_shapes=[
            pltpu.VMEM((L, B2, 8 * H), jnp.float32),   # x-projection (both dirs), reused per layer
            pltpu.VMEM((L, B2, H), jnp.float32),       # layer-1 fwd outputs
            pltpu.VMEM((L, B2, H), jnp.float32),       # layer-1 bwd outputs
            pltpu.VMEM((L, B2, H), jnp.float32),       # layer-2 fwd outputs
            pltpu.VMEM((L, B2, H), jnp.float32),       # layer-2 bwd outputs
        ],
    )(x, kp["wih1"], kp["whh1"], kp["b1"],
      kp["wih2"], kp["whh2"], kp["b2"], idx,
      kp["wl1"], kp["bl1"], kp["wl2"], kp["bl2"])


# ---------------------------------------------------------------------------
# Forward wrapper (embedding lookup / stacking glue is plain XLA)
# ---------------------------------------------------------------------------
@jax.jit
def classifier_forward(kparams, sentences1, sentences2,
                       sentence_lengths1, sentence_lengths2,
                       target_term_indexes1, target_term_indexes2):
    emb = kparams["embedding"]                                    # (V, EMB_PAD) f32
    x1 = jnp.take(emb, sentences1, axis=0)                        # (B, L, EMB_PAD)
    x2 = jnp.take(emb, sentences2, axis=0)
    # time-major, both sentences stacked on the batch axis, bf16 matmul operands
    x = jnp.transpose(jnp.concatenate([x1, x2], axis=0), (1, 0, 2)).astype(jnp.bfloat16)
    idx = jnp.stack([target_term_indexes1, target_term_indexes2,
                     sentence_lengths1, sentence_lengths2]).astype(jnp.int32)   # (4, B)
    out = classifier_pallas(kparams, x, idx)
    return {"logits": out[:, 0], "pred": out[:, 1]}


# ---------------------------------------------------------------------------
# Parameter init (PyTorch layout) and kernel-ready packing
# ---------------------------------------------------------------------------
def init_params(key, vocab_size, n_hidden1, n_hidden2):
    H, H2 = n_hidden1, n_hidden2
    keys = jax.random.split(key, 16)
    ki = iter(keys)
    emb = jax.random.normal(next(ki), (vocab_size, EMB_DIM), jnp.float32) * 0.1

    def lstm_dir(k, din):
        bound = 1.0 / (H ** 0.5)
        k1, k2, k3, k4 = jax.random.split(k, 4)
        return dict(
            w_ih=jax.random.uniform(k1, (4 * H, din), jnp.float32, -bound, bound),
            w_hh=jax.random.uniform(k2, (4 * H, H), jnp.float32, -bound, bound),
            b_ih=jax.random.uniform(k3, (4 * H,), jnp.float32, -bound, bound),
            b_hh=jax.random.uniform(k4, (4 * H,), jnp.float32, -bound, bound))

    lstm = []
    din = EMB_DIM
    for _ in range(2):
        f = lstm_dir(next(ki), din)
        b = lstm_dir(next(ki), din)
        lstm.append(dict(w_ih_f=f["w_ih"], w_hh_f=f["w_hh"], b_ih_f=f["b_ih"], b_hh_f=f["b_hh"],
                         w_ih_b=b["w_ih"], w_hh_b=b["w_hh"], b_ih_b=b["b_ih"], b_hh_b=b["b_hh"]))
        din = 2 * H                     # bidirectional concat feeds the next layer

    feat = 4 * H + 3
    bl1 = 1.0 / (feat ** 0.5)
    bl2 = 1.0 / (H2 ** 0.5)
    return dict(
        embedding=emb, lstm=lstm,
        lin1_w=jax.random.uniform(next(ki), (H2, feat), jnp.float32, -bl1, bl1),
        lin1_b=jax.random.uniform(next(ki), (H2,), jnp.float32, -bl1, bl1),
        lin2_w=jax.random.uniform(next(ki), (1, H2), jnp.float32, -bl2, bl2),
        lin2_b=jax.random.uniform(next(ki), (1,), jnp.float32, -bl2, bl2),
        bn2_gamma=jnp.ones((H2,), jnp.float32),
        bn2_beta=jnp.zeros((H2,), jnp.float32),
        bn2_mean=jnp.zeros((H2,), jnp.float32),
        bn2_var=jnp.ones((H2,), jnp.float32))


def prepare_params(raw, n_hidden1, n_hidden2):
    """Pack PyTorch-layout params into kernel layout: gate reorder [i,f,g,o]->[i,f,o,g],
    direction concat along N, K-dim zero padding, bf16 weights, BN folded into lin2."""
    H = n_hidden1
    perm = jnp.concatenate([jnp.arange(0, 2 * H),        # i, f
                            jnp.arange(3 * H, 4 * H),    # o
                            jnp.arange(2 * H, 3 * H)])   # g

    def pack_layer(p, din_pad):
        def one(wih, whh, bih, bhh):
            wih_t = wih[perm].T                                     # (din, 4H)
            wih_t = jnp.pad(wih_t, ((0, din_pad - wih_t.shape[0]), (0, 0)))
            return wih_t, whh[perm].T, (bih + bhh)[perm]
        wf, hf, bf = one(p["w_ih_f"], p["w_hh_f"], p["b_ih_f"], p["b_hh_f"])
        wb, hb, bb = one(p["w_ih_b"], p["w_hh_b"], p["b_ih_b"], p["b_hh_b"])
        return (jnp.concatenate([wf, wb], axis=1).astype(jnp.bfloat16),   # (din_pad, 8H)
                jnp.concatenate([hf, hb], axis=1).astype(jnp.bfloat16),   # (H, 8H)
                jnp.concatenate([bf, bb])[None, :].astype(jnp.float32))   # (1, 8H)

    wih1, whh1, b1 = pack_layer(raw["lstm"][0], EMB_PAD)
    wih2, whh2, b2 = pack_layer(raw["lstm"][1], 2 * H)

    feat = 4 * H + 3
    feat_pad = ((feat + 127) // 128) * 128
    wl1 = jnp.pad(raw["lin1_w"].T, ((0, feat_pad - feat), (0, 0))).astype(jnp.bfloat16)
    bl1 = raw["lin1_b"][None, :].astype(jnp.float32)

    # Fold eval-mode BatchNorm1d (running stats) into lin2.
    s = raw["bn2_gamma"] / jnp.sqrt(raw["bn2_var"] + 1e-5)
    wl2 = (raw["lin2_w"][0] * s)[None, :].astype(jnp.float32)                 # (1, H2)
    bl2 = (raw["lin2_b"][0]
           + jnp.sum((raw["bn2_beta"] - raw["bn2_mean"] * s) * raw["lin2_w"][0])
           ).reshape(1, 1).astype(jnp.float32)

    emb = jnp.pad(raw["embedding"], ((0, 0), (0, EMB_PAD - EMB_DIM))).astype(jnp.float32)
    return dict(embedding=emb, wih1=wih1, whh1=whh1, b1=b1,
                wih2=wih2, whh2=whh2, b2=b2,
                wl1=wl1, bl1=bl1, wl2=wl2, bl2=bl2)


# ---------------------------------------------------------------------------
# Pure-JAX reference (direct port of the PyTorch forward, f32, PyTorch gate order)
# ---------------------------------------------------------------------------
def reference_forward(raw, s1_ids, s2_ids, len1, len2, tgt1, tgt2, n_hidden1):
    H = n_hidden1

    def lstm_seq(x, w_ih, w_hh, b_ih, b_hh, reverse):
        Bb, Ll, _ = x.shape
        xs = x[:, ::-1, :] if reverse else x
        h = jnp.zeros((Bb, H), jnp.float32)
        c = jnp.zeros((Bb, H), jnp.float32)
        outs = []
        for t in range(Ll):
            gates = xs[:, t] @ w_ih.T + b_ih + h @ w_hh.T + b_hh
            i = jax.nn.sigmoid(gates[:, :H])
            f = jax.nn.sigmoid(gates[:, H:2 * H])
            g = jnp.tanh(gates[:, 2 * H:3 * H])
            o = jax.nn.sigmoid(gates[:, 3 * H:])
            c = f * c + i * g
            h = o * jnp.tanh(c)
            outs.append(h)
        out = jnp.stack(outs, axis=1)
        return out[:, ::-1, :] if reverse else out

    def bilstm(x):
        hcur = x
        for lyr in raw["lstm"]:
            fwd = lstm_seq(hcur, lyr["w_ih_f"], lyr["w_hh_f"], lyr["b_ih_f"], lyr["b_hh_f"], False)
            bwd = lstm_seq(hcur, lyr["w_ih_b"], lyr["w_hh_b"], lyr["b_ih_b"], lyr["b_hh_b"], True)
            hcur = jnp.concatenate([fwd, bwd], axis=-1)
        return hcur

    emb = raw["embedding"]
    r1 = bilstm(jnp.take(emb, s1_ids, axis=0))
    r2 = bilstm(jnp.take(emb, s2_ids, axis=0))
    bidx = jnp.arange(r1.shape[0])
    tv1, tv2 = r1[bidx, tgt1], r2[bidx, tgt2]
    sv1, sv2 = r1[:, 0, H:], r2[:, 0, H:]
    ev1, ev2 = r1[bidx, len1, :H], r2[bidx, len2, :H]

    def cos(a, b):
        w12 = jnp.sum(a * b, axis=1)
        wa = jnp.sum(a * a, axis=1)
        wb = jnp.sum(b * b, axis=1)
        return w12 / jnp.sqrt(jnp.maximum(wa * wb, 1e-12))

    summ = jnp.concatenate([jnp.abs(tv1 - tv2), jnp.abs(sv1 - sv2), jnp.abs(ev1 - ev2),
                            cos(tv1, tv2)[:, None], cos(sv1, sv2)[:, None],
                            cos(ev1, ev2)[:, None]], axis=1)
    h = jnp.maximum(summ @ raw["lin1_w"].T + raw["lin1_b"], 0.0)
    s = raw["bn2_gamma"] / jnp.sqrt(raw["bn2_var"] + 1e-5)
    h = (h - raw["bn2_mean"]) * s + raw["bn2_beta"]
    logits = (h @ raw["lin2_w"].T + raw["lin2_b"])[:, 0]
    return logits, jax.nn.sigmoid(logits)


if __name__ == "__main__":
    B, L, V = 4, 8, 50
    H1, H2 = 32, 32

    key = jax.random.PRNGKey(0)
    kp_key, kd = jax.random.split(key)
    raw = init_params(kp_key, V, H1, H2)
    kparams = prepare_params(raw, H1, H2)

    k1, k2, k3, k4, k5, k6 = jax.random.split(kd, 6)
    sentences1 = jax.random.randint(k1, (B, L), 0, V, dtype=jnp.int32)
    sentences2 = jax.random.randint(k2, (B, L), 0, V, dtype=jnp.int32)
    # the PyTorch code indexes recurrent_out at position `sentence_lengths`, so keep < L
    lengths1 = jax.random.randint(k3, (B,), 1, L, dtype=jnp.int32)
    lengths2 = jax.random.randint(k4, (B,), 1, L, dtype=jnp.int32)
    tgt_idx1 = jax.random.randint(k5, (B,), 0, L, dtype=jnp.int32)
    tgt_idx2 = jax.random.randint(k6, (B,), 0, L, dtype=jnp.int32)

    result = classifier_forward(kparams, sentences1, sentences2,
                                lengths1, lengths2, tgt_idx1, tgt_idx2)
    jax.block_until_ready(result)

    assert result["logits"].shape == (B,)
    assert result["pred"].shape == (B,)
    assert bool(jnp.all(jnp.isfinite(result["logits"])))
    assert bool(jnp.all((result["pred"] >= 0.0) & (result["pred"] <= 1.0)))

    # Numerical check against a pure-JAX f32 reference (bf16 matmuls -> loose tolerance).
    ref_logits, ref_pred = reference_forward(raw, sentences1, sentences2,
                                             lengths1, lengths2, tgt_idx1, tgt_idx2, H1)
    assert float(jnp.max(jnp.abs(result["logits"] - ref_logits))) < 5e-2
    assert float(jnp.max(jnp.abs(result["pred"] - ref_pred))) < 5e-2

    print("KERNEL_OK")
</pallas_src>

<mosaic_0001>
module attributes {stable_mosaic.version = 11 : i64} {
  func.func @classifier_kernel(%arg0: memref<8x8x384xbf16, #tpu.memory_space<vmem>>, %arg1: memref<384x256xbf16, #tpu.memory_space<vmem>>, %arg2: memref<32x256xbf16, #tpu.memory_space<vmem>>, %arg3: memref<1x256xf32, #tpu.memory_space<vmem>>, %arg4: memref<64x256xbf16, #tpu.memory_space<vmem>>, %arg5: memref<32x256xbf16, #tpu.memory_space<vmem>>, %arg6: memref<1x256xf32, #tpu.memory_space<vmem>>, %arg7: memref<4x4xi32, #tpu.memory_space<vmem>>, %arg8: memref<256x32xbf16, #tpu.memory_space<vmem>>, %arg9: memref<1x32xf32, #tpu.memory_space<vmem>>, %arg10: memref<1x32xf32, #tpu.memory_space<vmem>>, %arg11: memref<1x1xf32, #tpu.memory_space<vmem>>, %arg12: memref<4x2xf32, #tpu.memory_space<vmem>>, %arg13: memref<8x8x256xf32, #tpu.memory_space<vmem>>, %arg14: memref<8x8x32xf32, #tpu.memory_space<vmem>>, %arg15: memref<8x8x32xf32, #tpu.memory_space<vmem>>, %arg16: memref<8x8x32xf32, #tpu.memory_space<vmem>>, %arg17: memref<8x8x32xf32, #tpu.memory_space<vmem>>) attributes {dimension_semantics = [], scalar_prefetch = 0 : i64, scratch_operands = 5 : i64, tpu.core_type = #tpu.core_type<tc>} {
    %c0 = arith.constant 0 : index
    %c0_0 = arith.constant 0 : index
    %c0_1 = arith.constant 0 : index
    %0 = vector.load %arg0[%c0, %c0_0, %c0_1] : memref<8x8x384xbf16, #tpu.memory_space<vmem>>, vector<8x8x384xbf16>
    %1 = vector.shape_cast %0 : vector<8x8x384xbf16> to vector<64x384xbf16>
    %c0_2 = arith.constant 0 : index
    %c0_3 = arith.constant 0 : index
    %2 = vector.load %arg1[%c0_2, %c0_3] : memref<384x256xbf16, #tpu.memory_space<vmem>>, vector<384x256xbf16>
    %cst = arith.constant dense<0.000000e+00> : vector<64x256xf32>
    %3 = tpu.matmul %1, %2, %cst {dimension_numbers = #tpu.dot_dimension_numbers<[1], [0], [0], [1], [0, 0, 1, 1], [], []>} : vector<64x384xbf16>, vector<384x256xbf16>, vector<64x256xf32> -> vector<64x256xf32>
    %c0_4 = arith.constant 0 : index
    %c0_5 = arith.constant 0 : index
    %4 = vector.load %arg3[%c0_4, %c0_5] : memref<1x256xf32, #tpu.memory_space<vmem>>, vector<1x256xf32>
    %5 = vector.broadcast %4 : vector<1x256xf32> to vector<64x256xf32>
    %6 = arith.addf %3, %5 : vector<64x256xf32>
    %7 = vector.shape_cast %6 : vector<64x256xf32> to vector<8x8x256xf32>
    %c0_6 = arith.constant 0 : index
    %c0_7 = arith.constant 0 : index
    %c0_8 = arith.constant 0 : index
    %8 = vector.load %arg13[%c0_6, %c0_7, %c0_8] : memref<8x8x256xf32, #tpu.memory_space<vmem>>, vector<8x8x256xf32>
    tpu.vector_store %arg13[%c0_6, %c0_7, %c0_8], %7 {strides = array<i32>} : memref<8x8x256xf32, #tpu.memory_space<vmem>>, vector<8x8x256xf32>,
    %c0_9 = arith.constant 0 : index
    %c0_10 = arith.constant 0 : index
    %9 = vector.load %arg2[%c0_9, %c0_10] : memref<32x256xbf16, #tpu.memory_space<vmem>>, vector<32x256xbf16>
    %cst_11 = arith.constant 0.000000e+00 : f32
    %10 = vector.broadcast %cst_11 : f32 to vector<16x32xf32>
    %c0_12 = arith.constant 0 : index
    %c0_13 = arith.constant 0 : index
    %c0_14 = arith.constant 0 : index
    %11 = vector.load %arg13[%c0_12, %c0_13, %c0_14] : memref<8x8x256xf32, #tpu.memory_space<vmem>>, vector<1x8x128xf32>
    %12 = vector.shape_cast %11 : vector<1x8x128xf32> to vector<8x128xf32>
    %c7 = arith.constant 7 : index
    %c0_15 = arith.constant 0 : index
    %c128 = arith.constant 128 : index
    %13 = vector.load %arg13[%c7, %c0_15, %c128] : memref<8x8x256xf32, #tpu.memory_space<vmem>>, vector<1x8x128xf32>
    %14 = vector.shape_cast %13 : vector<1x8x128xf32> to vector<8x128xf32>
    %15 = tpu.concatenate %12, %14 in 0 : vector<8x128xf32>, vector<8x128xf32> -> vector<16x128xf32>
    %16 = vector.extract_strided_slice %15 {offsets = [0, 0], sizes = [16, 96], strides = [1, 1]} : vector<16x128xf32> to vector<16x96xf32>
    %17 = arith.negf %16 : vector<16x96xf32>
    %18 = math.exp %17 : vector<16x96xf32>
    %cst_16 = arith.constant 1.000000e+00 : f32
    %19 = vector.broadcast %cst_16 : f32 to vector<16x96xf32>
    %20 = arith.addf %19, %18 : vector<16x96xf32>
    %21 = arith.divf %19, %20 : vector<16x96xf32>
    %22 = vector.extract_strided_slice %21 {offsets = [0, 0], sizes = [16, 32], strides = [1, 1]} : vector<16x96xf32> to vector<16x32xf32>
    %23 = vector.extract_strided_slice %21 {offsets = [0, 32], sizes = [16, 32], strides = [1, 1]} : vector<16x96xf32> to vector<16x32xf32>
    %24 = vector.extract_strided_slice %21 {offsets = [0, 64], sizes = [16, 32], strides = [1, 1]} : vector<16x96xf32> to vector<16x32xf32>
    %25 = vector.extract_strided_slice %15 {offsets = [0, 96], sizes = [16, 32], strides = [1, 1]} : vector<16x128xf32> to vector<16x32xf32>
    %26 = math.tanh %25 : vector<16x32xf32>
    %27 = arith.mulf %23, %10 : vector<16x32xf32>
    %28 = arith.mulf %22, %26 : vector<16x32xf32>
    %29 = arith.addf %27, %28 : vector<16x32xf32>
    %30 = math.tanh %29 : vector<16x32xf32>
    %31 = arith.mulf %24, %30 : vector<16x32xf32>
    %32 = vector.extract_strided_slice %31 {offsets = [0, 0], sizes = [8, 32], strides = [1, 1]} : vector<16x32xf32> to vector<8x32xf32>
    %c0_17 = arith.constant 0 : index
    %c0_18 = arith.constant 0 : index
    %c0_19 = arith.constant 0 : index
    %33 = vector.load %arg14[%c0_17, %c0_18, %c0_19] : memref<8x8x32xf32, #tpu.memory_space<vmem>>, vector<1x8x32xf32>
    %34 = vector.shape_cast %33 : vector<1x8x32xf32> to vector<8x32xf32>
    %35 = vector.shape_cast %32 : vector<8x32xf32> to vector<1x8x32xf32>
    tpu.vector_store %arg14[%c0_17, %c0_18, %c0_19], %35 {strides = array<i32>} : memref<8x8x32xf32, #tpu.memory_space<vmem>>, vector<1x8x32xf32>,
    %36 = vector.extract_strided_slice %31 {offsets = [8, 0], sizes = [8, 32], strides = [1, 1]} : vector<16x32xf32> to vector<8x32xf32>
    %c7_20 = arith.constant 7 : index
    %c0_21 = arith.constant 0 : index
    %c0_22 = arith.constant 0 : index
    %37 = vector.load %arg15[%c7_20, %c0_21, %c0_22] : memref<8x8x32xf32, #tpu.memory_space<vmem>>, vector<1x8x32xf32>
    %38 = vector.shape_cast %37 : vector<1x8x32xf32> to vector<8x32xf32>
    %39 = vector.shape_cast %36 : vector<8x32xf32> to vector<1x8x32xf32>
    tpu.vector_store %arg15[%c7_20, %c0_21, %c0_22], %39 {strides = array<i32>} : memref<8x8x32xf32, #tpu.memory_space<vmem>>, vector<1x8x32xf32>,
    %c1 = arith.constant 1 : index
    %c0_23 = arith.constant 0 : index
    %c0_24 = arith.constant 0 : index
    %40 = vector.load %arg13[%c1, %c0_23, %c0_24] : memref<8x8x256xf32, #tpu.memory_space<vmem>>, vector<1x8x128xf32>
    %41 = vector.shape_cast %40 : vector<1x8x128xf32> to vector<8x128xf32>
    %c6 = arith.constant 6 : index
    %c0_25 = arith.constant 0 : index
    %c128_26 = arith.constant 128 : index
    %42 = vector.load %arg13[%c6, %c0_25, %c128_26] : memref<8x8x256xf32, #tpu.memory_space<vmem>>, vector<1x8x128xf32>
    %43 = vector.shape_cast %42 : vector<1x8x128xf32> to vector<8x128xf32>
    %44 = arith.truncf %31 : vector<16x32xf32> to vector<16x32xbf16>
    %cst_27 = arith.constant dense<0.000000e+00> : vector<16x256xf32>
    %45 = tpu.matmul %44, %9, %cst_27 {dimension_numbers = #tpu.dot_dimension_numbers<[1], [0], [0], [1], [0, 0, 1, 1], [], []>} : vector<16x32xbf16>, vector<32x256xbf16>, vector<16x256xf32> -> vector<16x256xf32>
    %46 = vector.extract_strided_slice %45 {offsets = [0, 0], sizes = [8, 128], strides = [1, 1]} : vector<16x256xf32> to vector<8x128xf32>
    %47 = arith.addf %41, %46 : vector<8x128xf32>
    %48 = vector.extract_strided_slice %45 {offsets = [8, 128], sizes = [8, 128], strides = [1, 1]} : vector<16x256xf32> to vector<8x128xf32>
    %49 = arith.addf %43, %48 : vector<8x128xf32>
    %50 = tpu.concatenate %47, %49 in 0 : vector<8x128xf32>, vector<8x128xf32> -> vector<16x128xf32>
    %51 = vector.extract_strided_slice %50 {offsets = [0, 0], sizes = [16, 96], strides = [1, 1]} : vector<16x128xf32> to vector<16x96xf32>
    %52 = arith.negf %51 : vector<16x96xf32>
    %53 = math.exp %52 : vector<16x96xf32>
    %cst_28 = arith.constant 1.000000e+00 : f32
    %54 = vector.broadcast %cst_28 : f32 to vector<16x96xf32>
    %55 = arith.addf %54, %53 : vector<16x96xf32>
    %56 = arith.divf %54, %55 : vector<16x96xf32>
    %57 = vector.extract_strided_slice %56 {offsets = [0, 0], sizes = [16, 32], strides = [1, 1]} : vector<16x96xf32> to vector<16x32xf32>
    %58 = vector.extract_strided_slice %56 {offsets = [0, 32], sizes = [16, 32], strides = [1, 1]} : vector<16x96xf32> to vector<16x32xf32>
    %59 = vector.extract_strided_slice %56 {offsets = [0, 64], sizes = [16, 32], strides = [1, 1]} : vector<16x96xf32> to vector<16x32xf32>
    %60 = vector.extract_strided_slice %50 {offsets = [0, 96], sizes = [16, 32], strides = [1, 1]} : vector<16x128xf32> to vector<16x32xf32>
    %61 = math.tanh %60 : vector<16x32xf32>
    %62 = arith.mulf %58, %29 : vector<16x32xf32>
    %63 = arith.mulf %57, %61 : vector<16x32xf32>
    %64 = arith.addf %62, %63 : vector<16x32xf32>
    %65 = math.tanh %64 : vector<16x32xf32>
    %66 = arith.mulf %59, %65 : vector<16x32xf32>
    %67 = vector.extract_strided_slice %66 {offsets = [0, 0], sizes = [8, 32], strides = [1, 1]} : vector<16x32xf32> to vector<8x32xf32>
    %c1_29 = arith.constant 1 : index
    %c0_30 = arith.constant 0 : index
    %c0_31 = arith.constant 0 : index
    %68 = vector.load %arg14[%c1_29, %c0_30, %c0_31] : memref<8x8x32xf32, #tpu.memory_space<vmem>>, vector<1x8x32xf32>
    %69 = vector.shape_cast %68 : vector<1x8x32xf32> to vector<8x32xf32>
    %70 = vector.shape_cast %67 : vector<8x32xf32> to vector<1x8x32xf32>
    tpu.vector_store %arg14[%c1_29, %c0_30, %c0_31], %70 {strides = array<i32>} : memref<8x8x32xf32, #tpu.memory_space<vmem>>, vector<1x8x32xf32>,
    %71 = vector.extract_strided_slice %66 {offsets = [8, 0], sizes = [8, 32], strides = [1, 1]} : vector<16x32xf32> to vector<8x32xf32>
    %c6_32 = arith.constant 6 : index
    %c0_33 = arith.constant 0 : index
    %c0_34 = arith.constant 0 : index
    %72 = vector.load %arg15[%c6_32, %c0_33, %c0_34] : memref<8x8x32xf32, #tpu.memory_space<vmem>>, vector<1x8x32xf32>
    %73 = vector.shape_cast %72 : vector<1x8x32xf32> to vector<8x32xf32>
    %74 = vector.shape_cast %71 : vector<8x32xf32> to vector<1x8x32xf32>
    tpu.vector_store %arg15[%c6_32, %c0_33, %c0_34], %74 {strides = array<i32>} : memref<8x8x32xf32, #tpu.memory_space<vmem>>, vector<1x8x32xf32>,
    %c2 = arith.constant 2 : index
    %c0_35 = arith.constant 0 : index
    %c0_36 = arith.constant 0 : index
    %75 = vector.load %arg13[%c2, %c0_35, %c0_36] : memref<8x8x256xf32, #tpu.memory_space<vmem>>, vector<1x8x128xf32>
    %76 = vector.shape_cast %75 : vector<1x8x128xf32> to vector<8x128xf32>
    %c5 = arith.constant 5 : index
    %c0_37 = arith.constant 0 : index
    %c128_38 = arith.constant 128 : index
    %77 = vector.load %arg13[%c5, %c0_37, %c128_38] : memref<8x8x256xf32, #tpu.memory_space<vmem>>, vector<1x8x128xf32>
    %78 = vector.shape_cast %77 : vector<1x8x128xf32> to vector<8x128xf32>
    %79 = arith.truncf %66 : vector<16x32xf32> to vector<16x32xbf16>
    %cst_39 = arith.constant dense<0.000000e+00> : vector<16x256xf32>
    %80 = tpu.matmul %79, %9, %cst_39 {dimension_numbers = #tpu.dot_dimension_numbers<[1], [0], [0], [1], [0, 0, 1, 1], [], []>} : vector<16x32xbf16>, vector<32x256xbf16>, vector<16x256xf32> -> vector<16x256xf32>
    %81 = vector.extract_strided_slice %80 {offsets = [0, 0], sizes = [8, 128], strides = [1, 1]} : vector<16x256xf32> to vector<8x128xf32>
    %82 = arith.addf %76, %81 : vector<8x128xf32>
    %83 = vector.extract_strided_slice %80 {offsets = [8, 128], sizes = [8, 128], strides = [1, 1]} : vector<16x256xf32> to vector<8x128xf32>
    %84 = arith.addf %78, %83 : vector<8x128xf32>
    %85 = tpu.concatenate %82, %84 in 0 : vector<8x128xf32>, vector<8x128xf32> -> vector<16x128xf32>
    %86 = vector.extract_strided_slice %85 {offsets = [0, 0], sizes = [16, 96], strides = [1, 1]} : vector<16x128xf32> to vector<16x96xf32>
    %87 = arith.negf %86 : vector<16x96xf32>
    %88 = math.exp %87 : vector<16x96xf32>
    %cst_40 = arith.constant 1.000000e+00 : f32
    %89 = vector.broadcast %cst_40 : f32 to vector<16x96xf32>
    %90 = arith.addf %89, %88 : vector<16x96xf32>
    %91 = arith.divf %89, %90 : vector<16x96xf32>
    %92 = vector.extract_strided_slice %91 {offsets = [0, 0], sizes = [16, 32], strides = [1, 1]} : vector<16x96xf32> to vector<16x32xf32>
    %93 = vector.extract_strided_slice %91 {offsets = [0, 32], sizes = [16, 32], strides = [1, 1]} : vector<16x96xf32> to vector<16x32xf32>
    %94 = vector.extract_strided_slice %91 {offsets = [0, 64], sizes = [16, 32], strides = [1, 1]} : vector<16x96xf32> to vector<16x32xf32>
    %95 = vector.extract_strided_slice %85 {offsets = [0, 96], sizes = [16, 32], strides = [1, 1]} : vector<16x128xf32> to vector<16x32xf32>
    %96 = math.tanh %95 : vector<16x32xf32>
    %97 = arith.mulf %93, %64 : vector<16x32xf32>
    %98 = arith.mulf %92, %96 : vector<16x32xf32>
    %99 = arith.addf %97, %98 : vector<16x32xf32>
    %100 = math.tanh %99 : vector<16x32xf32>
    %101 = arith.mulf %94, %100 : vector<16x32xf32>
    %102 = vector.extract_strided_slice %101 {offsets = [0, 0], sizes = [8, 32], strides = [1, 1]} : vector<16x32xf32> to vector<8x32xf32>
    %c2_41 = arith.constant 2 : index
    %c0_42 = arith.constant 0 : index
    %c0_43 = arith.constant 0 : index
    %103 = vector.load %arg14[%c2_41, %c0_42, %c0_43] : memref<8x8x32xf32, #tpu.memory_space<vmem>>, vector<1x8x32xf32>
    %104 = vector.shape_cast %103 : vector<1x8x32xf32> to vector<8x32xf32>
    %105 = vector.shape_cast %102 : vector<8x32xf32> to vector<1x8x32xf32>
    tpu.vector_store %arg14[%c2_41, %c0_42, %c0_43], %105 {strides = array<i32>} : memref<8x8x32xf32, #tpu.memory_space<vmem>>, vector<1x8x32xf32>,
    %106 = vector.extract_strided_slice %101 {offsets = [8, 0], sizes = [8, 32], strides = [1, 1]} : vector<16x32xf32> to vector<8x32xf32>
    %c5_44 = arith.constant 5 : index
    %c0_45 = arith.constant 0 : index
    %c0_46 = arith.constant 0 : index
    %107 = vector.load %arg15[%c5_44, %c0_45, %c0_46] : memref<8x8x32xf32, #tpu.memory_space<vmem>>, vector<1x8x32xf32>
    %108 = vector.shape_cast %107 : vector<1x8x32xf32> to vector<8x32xf32>
    %109 = vector.shape_cast %106 : vector<8x32xf32> to vector<1x8x32xf32>
    tpu.vector_store %arg15[%c5_44, %c0_45, %c0_46], %109 {strides = array<i32>} : memref<8x8x32xf32, #tpu.memory_space<vmem>>, vector<1x8x32xf32>,
    %c3 = arith.constant 3 : index
    %c0_47 = arith.constant 0 : index
    %c0_48 = arith.constant 0 : index
    %110 = vector.load %arg13[%c3, %c0_47, %c0_48] : memref<8x8x256xf32, #tpu.memory_space<vmem>>, vector<1x8x128xf32>
    %111 = vector.shape_cast %110 : vector<1x8x128xf32> to vector<8x128xf32>
    %c4 = arith.constant 4 : index
    %c0_49 = arith.constant 0 : index
    %c128_50 = arith.constant 128 : index
    %112 = vector.load %arg13[%c4, %c0_49, %c128_50] : memref<8x8x256xf32, #tpu.memory_space<vmem>>, vector<1x8x128xf32>
    %113 = vector.shape_cast %112 : vector<1x8x128xf32> to vector<8x128xf32>
    %114 = arith.truncf %101 : vector<16x32xf32> to vector<16x32xbf16>
    %cst_51 = arith.constant dense<0.000000e+00> : vector<16x256xf32>
    %115 = tpu.matmul %114, %9, %cst_51 {dimension_numbers = #tpu.dot_dimension_numbers<[1], [0], [0], [1], [0, 0, 1, 1], [], []>} : vector<16x32xbf16>, vector<32x256xbf16>, vector<16x256xf32> -> vector<16x256xf32>
    %116 = vector.extract_strided_slice %115 {offsets = [0, 0], sizes = [8, 128], strides = [1, 1]} : vector<16x256xf32> to vector<8x128xf32>
    %117 = arith.addf %111, %116 : vector<8x128xf32>
    %118 = vector.extract_strided_slice %115 {offsets = [8, 128], sizes = [8, 128], strides = [1, 1]} : vector<16x256xf32> to vector<8x128xf32>
    %119 = arith.addf %113, %118 : vector<8x128xf32>
    %120 = tpu.concatenate %117, %119 in 0 : vector<8x128xf32>, vector<8x128xf32> -> vector<16x128xf32>
    %121 = vector.extract_strided_slice %120 {offsets = [0, 0], sizes = [16, 96], strides = [1, 1]} : vector<16x128xf32> to vector<16x96xf32>
    %122 = arith.negf %121 : vector<16x96xf32>
    %123 = math.exp %122 : vector<16x96xf32>
    %cst_52 = arith.constant 1.000000e+00 : f32
    %124 = vector.broadcast %cst_52 : f32 to vector<16x96xf32>
    %125 = arith.addf %124, %123 : vector<16x96xf32>
    %126 = arith.divf %124, %125 : vector<16x96xf32>
    %127 = vector.extract_strided_slice %126 {offsets = [0, 0], sizes = [16, 32], strides = [1, 1]} : vector<16x96xf32> to vector<16x32xf32>
    %128 = vector.extract_strided_slice %126 {offsets = [0, 32], sizes = [16, 32], strides = [1, 1]} : vector<16x96xf32> to vector<16x32xf32>
    %129 = vector.extract_strided_slice %126 {offsets = [0, 64], sizes = [16, 32], strides = [1, 1]} : vector<16x96xf32> to vector<16x32xf32>
    %130 = vector.extract_strided_slice %120 {offsets = [0, 96], sizes = [16, 32], strides = [1, 1]} : vector<16x128xf32> to vector<16x32xf32>
    %131 = math.tanh %130 : vector<16x32xf32>
    %132 = arith.mulf %128, %99 : vector<16x32xf32>
    %133 = arith.mulf %127, %131 : vector<16x32xf32>
    %134 = arith.addf %132, %133 : vector<16x32xf32>
    %135 = math.tanh %134 : vector<16x32xf32>
    %136 = arith.mulf %129, %135 : vector<16x32xf32>
    %137 = vector.extract_strided_slice %136 {offsets = [0, 0], sizes = [8, 32], strides = [1, 1]} : vector<16x32xf32> to vector<8x32xf32>
    %c3_53 = arith.constant 3 : index
    %c0_54 = arith.constant 0 : index
    %c0_55 = arith.constant 0 : index
    %138 = vector.load %arg14[%c3_53, %c0_54, %c0_55] : memref<8x8x32xf32, #tpu.memory_space<vmem>>, vector<1x8x32xf32>
    %139 = vector.shape_cast %138 : vector<1x8x32xf32> to vector<8x32xf32>
    %140 = vector.shape_cast %137 : vector<8x32xf32> to vector<1x8x32xf32>
    tpu.vector_store %arg14[%c3_53, %c0_54, %c0_55], %140 {strides = array<i32>} : memref<8x8x32xf32, #tpu.memory_space<vmem>>, vector<1x8x32xf32>,
    %141 = vector.extract_strided_slice %136 {offsets = [8, 0], sizes = [8, 32], strides = [1, 1]} : vector<16x32xf32> to vector<8x32xf32>
    %c4_56 = arith.constant 4 : index
    %c0_57 = arith.constant 0 : index
    %c0_58 = arith.constant 0 : index
    %142 = vector.load %arg15[%c4_56, %c0_57, %c0_58] : memref<8x8x32xf32, #tpu.memory_space<vmem>>, vector<1x8x32xf32>
    %143 = vector.shape_cast %142 : vector<1x8x32xf32> to vector<8x32xf32>
    %144 = vector.shape_cast %141 : vector<8x32xf32> to vector<1x8x32xf32>
    tpu.vector_store %arg15[%c4_56, %c0_57, %c0_58], %144 {strides = array<i32>} : memref<8x8x32xf32, #tpu.memory_space<vmem>>, vector<1x8x32xf32>,
    %c4_59 = arith.constant 4 : index
    %c0_60 = arith.constant 0 : index
    %c0_61 = arith.constant 0 : index
    %145 = vector.load %arg13[%c4_59, %c0_60, %c0_61] : memref<8x8x256xf32, #tpu.memory_space<vmem>>, vector<1x8x128xf32>
    %146 = vector.shape_cast %145 : vector<1x8x128xf32> to vector<8x128xf32>
    %c3_62 = arith.constant 3 : index
    %c0_63 = arith.constant 0 : index
    %c128_64 = arith.constant 128 : index
    %147 = vector.load %arg13[%c3_62, %c0_63, %c128_64] : memref<8x8x256xf32, #tpu.memory_space<vmem>>, vector<1x8x128xf32>
    %148 = vector.shape_cast %147 : vector<1x8x128xf32> to vector<8x128xf32>
    %149 = arith.truncf %136 : vector<16x32xf32> to vector<16x32xbf16>
    %cst_65 = arith.constant dense<0.000000e+00> : vector<16x256xf32>
    %150 = tpu.matmul %149, %9, %cst_65 {dimension_numbers = #tpu.dot_dimension_numbers<[1], [0], [0], [1], [0, 0, 1, 1], [], []>} : vector<16x32xbf16>, vector<32x256xbf16>, vector<16x256xf32> -> vector<16x256xf32>
    %151 = vector.extract_strided_slice %150 {offsets = [0, 0], sizes = [8, 128], strides = [1, 1]} : vector<16x256xf32> to vector<8x128xf32>
    %152 = arith.addf %146, %151 : vector<8x128xf32>
    %153 = vector.extract_strided_slice %150 {offsets = [8, 128], sizes = [8, 128], strides = [1, 1]} : vector<16x256xf32> to vector<8x128xf32>
    %154 = arith.addf %148, %153 : vector<8x128xf32>
    %155 = tpu.concatenate %152, %154 in 0 : vector<8x128xf32>, vector<8x128xf32> -> vector<16x128xf32>
    %156 = vector.extract_strided_slice %155 {offsets = [0, 0], sizes = [16, 96], strides = [1, 1]} : vector<16x128xf32> to vector<16x96xf32>
    %157 = arith.negf %156 : vector<16x96xf32>
    %158 = math.exp %157 : vector<16x96xf32>
    %cst_66 = arith.constant 1.000000e+00 : f32
    %159 = vector.broadcast %cst_66 : f32 to vector<16x96xf32>
    %160 = arith.addf %159, %158 : vector<16x96xf32>
    %161 = arith.divf %159, %160 : vector<16x96xf32>
    %162 = vector.extract_strided_slice %161 {offsets = [0, 0], sizes = [16, 32], strides = [1, 1]} : vector<16x96xf32> to vector<16x32xf32>
    %163 = vector.extract_strided_slice %161 {offsets = [0, 32], sizes = [16, 32], strides = [1, 1]} : vector<16x96xf32> to vector<16x32xf32>
    %164 = vector.extract_strided_slice %161 {offsets = [0, 64], sizes = [16, 32], strides = [1, 1]} : vector<16x96xf32> to vector<16x32xf32>
    %165 = vector.extract_strided_slice %155 {offsets = [0, 96], sizes = [16, 32], strides = [1, 1]} : vector<16x128xf32> to vector<16x32xf32>
    %166 = math.tanh %165 : vector<16x32xf32>
    %167 = arith.mulf %163, %134 : vector<16x32xf32>
    %168 = arith.mulf %162, %166 : vector<16x32xf32>
    %169 = arith.addf %167, %168 : vector<16x32xf32>
    %170 = math.tanh %169 : vector<16x32xf32>
    %171 = arith.mulf %164, %170 : vector<16x32xf32>
    %172 = vector.extract_strided_slice %171 {offsets = [0, 0], sizes = [8, 32], strides = [1, 1]} : vector<16x32xf32> to vector<8x32xf32>
    %c4_67 = arith.constant 4 : index
    %c0_68 = arith.constant 0 : index
    %c0_69 = arith.constant 0 : index
    %173 = vector.load %arg14[%c4_67, %c0_68, %c0_69] : memref<8x8x32xf32, #tpu.memory_space<vmem>>, vector<1x8x32xf32>
    %174 = vector.shape_cast %173 : vector<1x8x32xf32> to vector<8x32xf32>
    %175 = vector.shape_cast %172 : vector<8x32xf32> to vector<1x8x32xf32>
    tpu.vector_store %arg14[%c4_67, %c0_68, %c0_69], %175 {strides = array<i32>} : memref<8x8x32xf32, #tpu.memory_space<vmem>>, vector<1x8x32xf32>,
    %176 = vector.extract_strided_slice %171 {offsets = [8, 0], sizes = [8, 32], strides = [1, 1]} : vector<16x32xf32> to vector<8x32xf32>
    %c3_70 = arith.constant 3 : index
    %c0_71 = arith.constant 0 : index
    %c0_72 = arith.constant 0 : index
    %177 = vector.load %arg15[%c3_70, %c0_71, %c0_72] : memref<8x8x32xf32, #tpu.memory_space<vmem>>, vector<1x8x32xf32>
    %178 = vector.shape_cast %177 : vector<1x8x32xf32> to vector<8x32xf32>
    %179 = vector.shape_cast %176 : vector<8x32xf32> to vector<1x8x32xf32>
    tpu.vector_store %arg15[%c3_70, %c0_71, %c0_72], %179 {strides = array<i32>} : memref<8x8x32xf32, #tpu.memory_space<vmem>>, vector<1x8x32xf32>,
    %c5_73 = arith.constant 5 : index
    %c0_74 = arith.constant 0 : index
    %c0_75 = arith.constant 0 : index
    %180 = vector.load %arg13[%c5_73, %c0_74, %c0_75] : memref<8x8x256xf32, #tpu.memory_space<vmem>>, vector<1x8x128xf32>
    %181 = vector.shape_cast %180 : vector<1x8x128xf32> to vector<8x128xf32>
    %c2_76 = arith.constant 2 : index
    %c0_77 = arith.constant 0 : index
    %c128_78 = arith.constant 128 : index
    %182 = vector.load %arg13[%c2_76, %c0_77, %c128_78] : memref<8x8x256xf32, #tpu.memory_space<vmem>>, vector<1x8x128xf32>
    %183 = vector.shape_cast %182 : vector<1x8x128xf32> to vector<8x128xf32>
    %184 = arith.truncf %171 : vector<16x32xf32> to vector<16x32xbf16>
    %cst_79 = arith.constant dense<0.000000e+00> : vector<16x256xf32>
    %185 = tpu.matmul %184, %9, %cst_79 {dimension_numbers = #tpu.dot_dimension_numbers<[1], [0], [0], [1], [0, 0, 1, 1], [], []>} : vector<16x32xbf16>, vector<32x256xbf16>, vector<16x256xf32> -> vector<16x256xf32>
    %186 = vector.extract_strided_slice %185 {offsets = [0, 0], sizes = [8, 128], strides = [1, 1]} : vector<16x256xf32> to vector<8x128xf32>
    %187 = arith.addf %181, %186 : vector<8x128xf32>
    %188 = vector.extract_strided_slice %185 {offsets = [8, 128], sizes = [8, 128], strides = [1, 1]} : vector<16x256xf32> to vector<8x128xf32>
    %189 = arith.addf %183, %188 : vector<8x128xf32>
    %190 = tpu.concatenate %187, %189 in 0 : vector<8x128xf32>, vector<8x128xf32> -> vector<16x128xf32>
    %191 = vector.extract_strided_slice %190 {offsets = [0, 0], sizes = [16, 96], strides = [1, 1]} : vector<16x128xf32> to vector<16x96xf32>
    %192 = arith.negf %191 : vector<16x96xf32>
    %193 = math.exp %192 : vector<16x96xf32>
    %cst_80 = arith.constant 1.000000e+00 : f32
    %194 = vector.broadcast %cst_80 : f32 to vector<16x96xf32>
    %195 = arith.addf %194, %193 : vector<16x96xf32>
    %196 = arith.divf %194, %195 : vector<16x96xf32>
    %197 = vector.extract_strided_slice %196 {offsets = [0, 0], sizes = [16, 32], strides = [1, 1]} : vector<16x96xf32> to vector<16x32xf32>
    %198 = vector.extract_strided_slice %196 {offsets = [0, 32], sizes = [16, 32], strides = [1, 1]} : vector<16x96xf32> to vector<16x32xf32>
    %199 = vector.extract_strided_slice %196 {offsets = [0, 64], sizes = [16, 32], strides = [1, 1]} : vector<16x96xf32> to vector<16x32xf32>
    %200 = vector.extract_strided_slice %190 {offsets = [0, 96], sizes = [16, 32], strides = [1, 1]} : vector<16x128xf32> to vector<16x32xf32>
    %201 = math.tanh %200 : vector<16x32xf32>
    %202 = arith.mulf %198, %169 : vector<16x32xf32>
    %203 = arith.mulf %197, %201 : vector<16x32xf32>
    %204 = arith.addf %202, %203 : vector<16x32xf32>
    %205 = math.tanh %204 : vector<16x32xf32>
    %206 = arith.mulf %199, %205 : vector<16x32xf32>
    %207 = vector.extract_strided_slice %206 {offsets = [0, 0], sizes = [8, 32], strides = [1, 1]} : vector<16x32xf32> to vector<8x32xf32>
    %c5_81 = arith.constant 5 : index
    %c0_82 = arith.constant 0 : index
    %c0_83 = arith.constant 0 : index
    %208 = vector.load %arg14[%c5_81, %c0_82, %c0_83] : memref<8x8x32xf32, #tpu.memory_space<vmem>>, vector<1x8x32xf32>
    %209 = vector.shape_cast %208 : vector<1x8x32xf32> to vector<8x32xf32>
    %210 = vector.shape_cast %207 : vector<8x32xf32> to vector<1x8x32xf32>
    tpu.vector_store %arg14[%c5_81, %c0_82, %c0_83], %210 {strides = array<i32>} : memref<8x8x32xf32, #tpu.memory_space<vmem>>, vector<1x8x32xf32>,
    %211 = vector.extract_strided_slice %206 {offsets = [8, 0], sizes = [8, 32], strides = [1, 1]} : vector<16x32xf32> to vector<8x32xf32>
    %c2_84 = arith.constant 2 : index
    %c0_85 = arith.constant 0 : index
    %c0_86 = arith.constant 0 : index
    %212 = vector.load %arg15[%c2_84, %c0_85, %c0_86] : memref<8x8x32xf32, #tpu.memory_space<vmem>>, vector<1x8x32xf32>
    %213 = vector.shape_cast %212 : vector<1x8x32xf32> to vector<8x32xf32>
    %214 = vector.shape_cast %211 : vector<8x32xf32> to vector<1x8x32xf32>
    tpu.vector_store %arg15[%c2_84, %c0_85, %c0_86], %214 {strides = array<i32>} : memref<8x8x32xf32, #tpu.memory_space<vmem>>, vector<1x8x32xf32>,
    %c6_87 = arith.constant 6 : index
    %c0_88 = arith.constant 0 : index
    %c0_89 = arith.constant 0 : index
    %215 = vector.load %arg13[%c6_87, %c0_88, %c0_89] : memref<8x8x256xf32, #tpu.memory_space<vmem>>, vector<1x8x128xf32>
    %216 = vector.shape_cast %215 : vector<1x8x128xf32> to vector<8x128xf32>
    %c1_90 = arith.constant 1 : index
    %c0_91 = arith.constant 0 : index
    %c128_92 = arith.constant 128 : index
    %217 = vector.load %arg13[%c1_90, %c0_91, %c128_92] : memref<8x8x256xf32, #tpu.memory_space<vmem>>, vector<1x8x128xf32>
    %218 = vector.shape_cast %217 : vector<1x8x128xf32> to vector<8x128xf32>
    %219 = arith.truncf %206 : vector<16x32xf32> to vector<16x32xbf16>
    %cst_93 = arith.constant dense<0.000000e+00> : vector<16x256xf32>
    %220 = tpu.matmul %219, %9, %cst_93 {dimension_numbers = #tpu.dot_dimension_numbers<[1], [0], [0], [1], [0, 0, 1, 1], [], []>} : vector<16x32xbf16>, vector<32x256xbf16>, vector<16x256xf32> -> vector<16x256xf32>
    %221 = vector.extract_strided_slice %220 {offsets = [0, 0], sizes = [8, 128], strides = [1, 1]} : vector<16x256xf32> to vector<8x128xf32>
    %222 = arith.addf %216, %221 : vector<8x128xf32>
    %223 = vector.extract_strided_slice %220 {offsets = [8, 128], sizes = [8, 128], strides = [1, 1]} : vector<16x256xf32> to vector<8x128xf32>
    %224 = arith.addf %218, %223 : vector<8x128xf32>
    %225 = tpu.concatenate %222, %224 in 0 : vector<8x128xf32>, vector<8x128xf32> -> vector<16x128xf32>
    %226 = vector.extract_strided_slice %225 {offsets = [0, 0], sizes = [16, 96], strides = [1, 1]} : vector<16x128xf32> to vector<16x96xf32>
    %227 = arith.negf %226 : vector<16x96xf32>
    %228 = math.exp %227 : vector<16x96xf32>
    %cst_94 = arith.constant 1.000000e+00 : f32
    %229 = vector.broadcast %cst_94 : f32 to vector<16x96xf32>
    %230 = arith.addf %229, %228 : vector<16x96xf32>
    %231 = arith.divf %229, %230 : vector<16x96xf32>
    %232 = vector.extract_strided_slice %231 {offsets = [0, 0], sizes = [16, 32], strides = [1, 1]} : vector<16x96xf32> to vector<16x32xf32>
    %233 = vector.extract_strided_slice %231 {offsets = [0, 32], sizes = [16, 32], strides = [1, 1]} : vector<16x96xf32> to vector<16x32xf32>
    %234 = vector.extract_strided_slice %231 {offsets = [0, 64], sizes = [16, 32], strides = [1, 1]} : vector<16x96xf32> to vector<16x32xf32>
    %235 = vector.extract_strided_slice %225 {offsets = [0, 96], sizes = [16, 32], strides = [1, 1]} : vector<16x128xf32> to vector<16x32xf32>
    %236 = math.tanh %235 : vector<16x32xf32>
    %237 = arith.mulf %233, %204 : vector<16x32xf32>
    %238 = arith.mulf %232, %236 : vector<16x32xf32>
    %239 = arith.addf %237, %238 : vector<16x32xf32>
    %240 = math.tanh %239 : vector<16x32xf32>
    %241 = arith.mulf %234, %240 : vector<16x32xf32>
    %242 = vector.extract_strided_slice %241 {offsets = [0, 0], sizes = [8, 32], strides = [1, 1]} : vector<16x32xf32> to vector<8x32xf32>
    %c6_95 = arith.constant 6 : index
    %c0_96 = arith.constant 0 : index
    %c0_97 = arith.constant 0 : index
    %243 = vector.load %arg14[%c6_95, %c0_96, %c0_97] : memref<8x8x32xf32, #tpu.memory_space<vmem>>, vector<1x8x32xf32>
    %244 = vector.shape_cast %243 : vector<1x8x32xf32> to vector<8x32xf32>
    %245 = vector.shape_cast %242 : vector<8x32xf32> to vector<1x8x32xf32>
    tpu.vector_store %arg14[%c6_95, %c0_96, %c0_97], %245 {strides = array<i32>} : memref<8x8x32xf32, #tpu.memory_space<vmem>>, vector<1x8x32xf32>,
    %246 = vector.extract_strided_slice %241 {offsets = [8, 0], sizes = [8, 32], strides = [1, 1]} : vector<16x32xf32> to vector<8x32xf32>
    %c1_98 = arith.constant 1 : index
    %c0_99 = arith.constant 0 : index
    %c0_100 = arith.constant 0 : index
    %247 = vector.load %arg15[%c1_98, %c0_99, %c0_100] : memref<8x8x32xf32, #tpu.memory_space<vmem>>, vector<1x8x32xf32>
    %248 = vector.shape_cast %247 : vector<1x8x32xf32> to vector<8x32xf32>
    %249 = vector.shape_cast %246 : vector<8x32xf32> to vector<1x8x32xf32>
    tpu.vector_store %arg15[%c1_98, %c0_99, %c0_100], %249 {strides = array<i32>} : memref<8x8x32xf32, #tpu.memory_space<vmem>>, vector<1x8x32xf32>,
    %c7_101 = arith.constant 7 : index
    %c0_102 = arith.constant 0 : index
    %c0_103 = arith.constant 0 : index
    %250 = vector.load %arg13[%c7_101, %c0_102, %c0_103] : memref<8x8x256xf32, #tpu.memory_space<vmem>>, vector<1x8x128xf32>
    %251 = vector.shape_cast %250 : vector<1x8x128xf32> to vector<8x128xf32>
    %c0_104 = arith.constant 0 : index
    %c0_105 = arith.constant 0 : index
    %c128_106 = arith.constant 128 : index
    %252 = vector.load %arg13[%c0_104, %c0_105, %c128_106] : memref<8x8x256xf32, #tpu.memory_space<vmem>>, vector<1x8x128xf32>
    %253 = vector.shape_cast %252 : vector<1x8x128xf32> to vector<8x128xf32>
    %254 = arith.truncf %241 : vector<16x32xf32> to vector<16x32xbf16>
    %cst_107 = arith.constant dense<0.000000e+00> : vector<16x256xf32>
    %255 = tpu.matmul %254, %9, %cst_107 {dimension_numbers = #tpu.dot_dimension_numbers<[1], [0], [0], [1], [0, 0, 1, 1], [], []>} : vector<16x32xbf16>, vector<32x256xbf16>, vector<16x256xf32> -> vector<16x256xf32>
    %256 = vector.extract_strided_slice %255 {offsets = [0, 0], sizes = [8, 128], strides = [1, 1]} : vector<16x256xf32> to vector<8x128xf32>
    %257 = arith.addf %251, %256 : vector<8x128xf32>
    %258 = vector.extract_strided_slice %255 {offsets = [8, 128], sizes = [8, 128], strides = [1, 1]} : vector<16x256xf32> to vector<8x128xf32>
    %259 = arith.addf %253, %258 : vector<8x128xf32>
    %260 = tpu.concatenate %257, %259 in 0 : vector<8x128xf32>, vector<8x128xf32> -> vector<16x128xf32>
    %261 = vector.extract_strided_slice %260 {offsets = [0, 0], sizes = [16, 96], strides = [1, 1]} : vector<16x128xf32> to vector<16x96xf32>
    %262 = arith.negf %261 : vector<16x96xf32>
    %263 = math.exp %262 : vector<16x96xf32>
    %cst_108 = arith.constant 1.000000e+00 : f32
    %264 = vector.broadcast %cst_108 : f32 to vector<16x96xf32>
    %265 = arith.addf %264, %263 : vector<16x96xf32>
    %266 = arith.divf %264, %265 : vector<16x96xf32>
    %267 = vector.extract_strided_slice %266 {offsets = [0, 0], sizes = [16, 32], strides = [1, 1]} : vector<16x96xf32> to vector<16x32xf32>
    %268 = vector.extract_strided_slice %266 {offsets = [0, 32], sizes = [16, 32], strides = [1, 1]} : vector<16x96xf32> to vector<16x32xf32>
    %269 = vector.extract_strided_slice %266 {offsets = [0, 64], sizes = [16, 32], strides = [1, 1]} : vector<16x96xf32> to vector<16x32xf32>
    %270 = vector.extract_strided_slice %260 {offsets = [0, 96], sizes = [16, 32], strides = [1, 1]} : vector<16x128xf32> to vector<16x32xf32>
    %271 = math.tanh %270 : vector<16x32xf32>
    %272 = arith.mulf %268, %239 : vector<16x32xf32>
    %273 = arith.mulf %267, %271 : vector<16x32xf32>
    %274 = arith.addf %272, %273 : vector<16x32xf32>
    %275 = math.tanh %274 : vector<16x32xf32>
    %276 = arith.mulf %269, %275 : vector<16x32xf32>
    %277 = vector.extract_strided_slice %276 {offsets = [0, 0], sizes = [8, 32], strides = [1, 1]} : vector<16x32xf32> to vector<8x32xf32>
    %c7_109 = arith.constant 7 : index
    %c0_110 = arith.constant 0 : index
    %c0_111 = arith.constant 0 : index
    %278 = vector.load %arg14[%c7_109, %c0_110, %c0_111] : memref<8x8x32xf32, #tpu.memory_space<vmem>>, vector<1x8x32xf32>
    %279 = vector.shape_cast %278 : vector<1x8x32xf32> to vector<8x32xf32>
    %280 = vector.shape_cast %277 : vector<8x32xf32> to vector<1x8x32xf32>
    tpu.vector_store %arg14[%c7_109, %c0_110, %c0_111], %280 {strides = array<i32>} : memref<8x8x32xf32, #tpu.memory_space<vmem>>, vector<1x8x32xf32>,
    %281 = vector.extract_strided_slice %276 {offsets = [8, 0], sizes = [8, 32], strides = [1, 1]} : vector<16x32xf32> to vector<8x32xf32>
    %c0_112 = arith.constant 0 : index
    %c0_113 = arith.constant 0 : index
    %c0_114 = arith.constant 0 : index
    %282 = vector.load %arg15[%c0_112, %c0_113, %c0_114] : memref<8x8x32xf32, #tpu.memory_space<vmem>>, vector<1x8x32xf32>
    %283 = vector.shape_cast %282 : vector<1x8x32xf32> to vector<8x32xf32>
    %284 = vector.shape_cast %281 : vector<8x32xf32> to vector<1x8x32xf32>
    tpu.vector_store %arg15[%c0_112, %c0_113, %c0_114], %284 {strides = array<i32>} : memref<8x8x32xf32, #tpu.memory_space<vmem>>, vector<1x8x32xf32>,
    %c0_115 = arith.constant 0 : index
    %c0_116 = arith.constant 0 : index
    %c0_117 = arith.constant 0 : index
    %285 = vector.load %arg14[%c0_115, %c0_116, %c0_117] : memref<8x8x32xf32, #tpu.memory_space<vmem>>, vector<8x8x32xf32>
    %c0_118 = arith.constant 0 : index
    %c0_119 = arith.constant 0 : index
    %c0_120 = arith.constant 0 : index
    %286 = vector.load %arg15[%c0_118, %c0_119, %c0_120] : memref<8x8x32xf32, #tpu.memory_space<vmem>>, vector<8x8x32xf32>
    %287 = tpu.concatenate %285, %286 in 2 : vector<8x8x32xf32>, vector<8x8x32xf32> -> vector<8x8x64xf32>
    %288 = vector.shape_cast %287 : vector<8x8x64xf32> to vector<64x64xf32>
    %289 = arith.truncf %288 : vector<64x64xf32> to vector<64x64xbf16>
    %c0_121 = arith.constant 0 : index
    %c0_122 = arith.constant 0 : index
    %290 = vector.load %arg4[%c0_121, %c0_122] : memref<64x256xbf16, #tpu.memory_space<vmem>>, vector<64x256xbf16>
    %cst_123 = arith.constant dense<0.000000e+00> : vector<64x256xf32>
    %291 = tpu.matmul %289, %290, %cst_123 {dimension_numbers = #tpu.dot_dimension_numbers<[1], [0], [0], [1], [0, 0, 1, 1], [], []>} : vector<64x64xbf16>, vector<64x256xbf16>, vector<64x256xf32> -> vector<64x256xf32>
    %c0_124 = arith.constant 0 : index
    %c0_125 = arith.constant 0 : index
    %292 = vector.load %arg6[%c0_124, %c0_125] : memref<1x256xf32, #tpu.memory_space<vmem>>, vector<1x256xf32>
    %293 = vector.broadcast %292 : vector<1x256xf32> to vector<64x256xf32>
    %294 = arith.addf %291, %293 : vector<64x256xf32>
    %295 = vector.shape_cast %294 : vector<64x256xf32> to vector<8x8x256xf32>
    %c0_126 = arith.constant 0 : index
    %c0_127 = arith.constant 0 : index
    %c0_128 = arith.constant 0 : index
    %296 = vector.load %arg13[%c0_126, %c0_127, %c0_128] : memref<8x8x256xf32, #tpu.memory_space<vmem>>, vector<8x8x256xf32>
    tpu.vector_store %arg13[%c0_126, %c0_127, %c0_128], %295 {strides = array<i32>} : memref<8x8x256xf32, #tpu.memory_space<vmem>>, vector<8x8x256xf32>,
    %c0_129 = arith.constant 0 : index
    %c0_130 = arith.constant 0 : index
    %297 = vector.load %arg5[%c0_129, %c0_130] : memref<32x256xbf16, #tpu.memory_space<vmem>>, vector<32x256xbf16>
    %cst_131 = arith.constant 0.000000e+00 : f32
    %298 = vector.broadcast %cst_131 : f32 to vector<16x32xf32>
    %c0_132 = arith.constant 0 : index
    %c0_133 = arith.constant 0 : index
    %c0_134 = arith.constant 0 : index
    %299 = vector.load %arg13[%c0_132, %c0_133, %c0_134] : memref<8x8x256xf32, #tpu.memory_space<vmem>>, vector<1x8x128xf32>
    %300 = vector.shape_cast %299 : vector<1x8x128xf32> to vector<8x128xf32>
    %c7_135 = arith.constant 7 : index
    %c0_136 = arith.constant 0 : index
    %c128_137 = arith.constant 128 : index
    %301 = vector.load %arg13[%c7_135, %c0_136, %c128_137] : memref<8x8x256xf32, #tpu.memory_space<vmem>>, vector<1x8x128xf32>
    %302 = vector.shape_cast %301 : vector<1x8x128xf32> to vector<8x128xf32>
    %303 = tpu.concatenate %300, %302 in 0 : vector<8x128xf32>, vector<8x128xf32> -> vector<16x128xf32>
    %304 = vector.extract_strided_slice %303 {offsets = [0, 0], sizes = [16, 96], strides = [1, 1]} : vector<16x128xf32> to vector<16x96xf32>
    %305 = arith.negf %304 : vector<16x96xf32>
    %306 = math.exp %305 : vector<16x96xf32>
    %cst_138 = arith.constant 1.000000e+00 : f32
    %307 = vector.broadcast %cst_138 : f32 to vector<16x96xf32>
    %308 = arith.addf %307, %306 : vector<16x96xf32>
    %309 = arith.divf %307, %308 : vector<16x96xf32>
    %310 = vector.extract_strided_slice %309 {offsets = [0, 0], sizes = [16, 32], strides = [1, 1]} : vector<16x96xf32> to vector<16x32xf32>
    %311 = vector.extract_strided_slice %309 {offsets = [0, 32], sizes = [16, 32], strides = [1, 1]} : vector<16x96xf32> to vector<16x32xf32>
    %312 = vector.extract_strided_slice %309 {offsets = [0, 64], sizes = [16, 32], strides = [1, 1]} : vector<16x96xf32> to vector<16x32xf32>
    %313 = vector.extract_strided_slice %303 {offsets = [0, 96], sizes = [16, 32], strides = [1, 1]} : vector<16x128xf32> to vector<16x32xf32>
    %314 = math.tanh %313 : vector<16x32xf32>
    %315 = arith.mulf %311, %298 : vector<16x32xf32>
    %316 = arith.mulf %310, %314 : vector<16x32xf32>
    %317 = arith.addf %315, %316 : vector<16x32xf32>
    %318 = math.tanh %317 : vector<16x32xf32>
    %319 = arith.mulf %312, %318 : vector<16x32xf32>
    %320 = vector.extract_strided_slice %319 {offsets = [0, 0], sizes = [8, 32], strides = [1, 1]} : vector<16x32xf32> to vector<8x32xf32>
    %c0_139 = arith.constant 0 : index
    %c0_140 = arith.constant 0 : index
    %c0_141 = arith.constant 0 : index
    %321 = vector.load %arg16[%c0_139, %c0_140, %c0_141] : memref<8x8x32xf32, #tpu.memory_space<vmem>>, vector<1x8x32xf32>
    %322 = vector.shape_cast %321 : vector<1x8x32xf32> to vector<8x32xf32>
    %323 = vector.shape_cast %320 : vector<8x32xf32> to vector<1x8x32xf32>
    tpu.vector_store %arg16[%c0_139, %c0_140, %c0_141], %323 {strides = array<i32>} : memref<8x8x32xf32, #tpu.memory_space<vmem>>, vector<1x8x32xf32>,
    %324 = vector.extract_strided_slice %319 {offsets = [8, 0], sizes = [8, 32], strides = [1, 1]} : vector<16x32xf32> to vector<8x32xf32>
    %c7_142 = arith.constant 7 : index
    %c0_143 = arith.constant 0 : index
    %c0_144 = arith.constant 0 : index
    %325 = vector.load %arg17[%c7_142, %c0_143, %c0_144] : memref<8x8x32xf32, #tpu.memory_space<vmem>>, vector<1x8x32xf32>
    %326 = vector.shape_cast %325 : vector<1x8x32xf32> to vector<8x32xf32>
    %327 = vector.shape_cast %324 : vector<8x32xf32> to vector<1x8x32xf32>
    tpu.vector_store %arg17[%c7_142, %c0_143, %c0_144], %327 {strides = array<i32>} : memref<8x8x32xf32, #tpu.memory_space<vmem>>, vector<1x8x32xf32>,
    %c1_145 = arith.constant 1 : index
    %c0_146 = arith.constant 0 : index
    %c0_147 = arith.constant 0 : index
    %328 = vector.load %arg13[%c1_145, %c0_146, %c0_147] : memref<8x8x256xf32, #tpu.memory_space<vmem>>, vector<1x8x128xf32>
    %329 = vector.shape_cast %328 : vector<1x8x128xf32> to vector<8x128xf32>
    %c6_148 = arith.constant 6 : index
    %c0_149 = arith.constant 0 : index
    %c128_150 = arith.constant 128 : index
    %330 = vector.load %arg13[%c6_148, %c0_149, %c128_150] : memref<8x8x256xf32, #tpu.memory_space<vmem>>, vector<1x8x128xf32>
    %331 = vector.shape_cast %330 : vector<1x8x128xf32> to vector<8x128xf32>
    %332 = arith.truncf %319 : vector<16x32xf32> to vector<16x32xbf16>
    %cst_151 = arith.constant dense<0.000000e+00> : vector<16x256xf32>
    %333 = tpu.matmul %332, %297, %cst_151 {dimension_numbers = #tpu.dot_dimension_numbers<[1], [0], [0], [1], [0, 0, 1, 1], [], []>} : vector<16x32xbf16>, vector<32x256xbf16>, vector<16x256xf32> -> vector<16x256xf32>
    %334 = vector.extract_strided_slice %333 {offsets = [0, 0], sizes = [8, 128], strides = [1, 1]} : vector<16x256xf32> to vector<8x128xf32>
    %335 = arith.addf %329, %334 : vector<8x128xf32>
    %336 = vector.extract_strided_slice %333 {offsets = [8, 128], sizes = [8, 128], strides = [1, 1]} : vector<16x256xf32> to vector<8x128xf32>
    %337 = arith.addf %331, %336 : vector<8x128xf32>
    %338 = tpu.concatenate %335, %337 in 0 : vector<8x128xf32>, vector<8x128xf32> -> vector<16x128xf32>
    %339 = vector.extract_strided_slice %338 {offsets = [0, 0], sizes = [16, 96], strides = [1, 1]} : vector<16x128xf32> to vector<16x96xf32>
    %340 = arith.negf %339 : vector<16x96xf32>
    %341 = math.exp %340 : vector<16x96xf32>
    %cst_152 = arith.constant 1.000000e+00 : f32
    %342 = vector.broadcast %cst_152 : f32 to vector<16x96xf32>
    %343 = arith.addf %342, %341 : vector<16x96xf32>
    %344 = arith.divf %342, %343 : vector<16x96xf32>
    %345 = vector.extract_strided_slice %344 {offsets = [0, 0], sizes = [16, 32], strides = [1, 1]} : vector<16x96xf32> to vector<16x32xf32>
    %346 = vector.extract_strided_slice %344 {offsets = [0, 32], sizes = [16, 32], strides = [1, 1]} : vector<16x96xf32> to vector<16x32xf32>
    %347 = vector.extract_strided_slice %344 {offsets = [0, 64], sizes = [16, 32], strides = [1, 1]} : vector<16x96xf32> to vector<16x32xf32>
    %348 = vector.extract_strided_slice %338 {offsets = [0, 96], sizes = [16, 32], strides = [1, 1]} : vector<16x128xf32> to vector<16x32xf32>
    %349 = math.tanh %348 : vector<16x32xf32>
    %350 = arith.mulf %346, %317 : vector<16x32xf32>
    %351 = arith.mulf %345, %349 : vector<16x32xf32>
    %352 = arith.addf %350, %351 : vector<16x32xf32>
    %353 = math.tanh %352 : vector<16x32xf32>
    %354 = arith.mulf %347, %353 : vector<16x32xf32>
    %355 = vector.extract_strided_slice %354 {offsets = [0, 0], sizes = [8, 32], strides = [1, 1]} : vector<16x32xf32> to vector<8x32xf32>
    %c1_153 = arith.constant 1 : index
    %c0_154 = arith.constant 0 : index
    %c0_155 = arith.constant 0 : index
    %356 = vector.load %arg16[%c1_153, %c0_154, %c0_155] : memref<8x8x32xf32, #tpu.memory_space<vmem>>, vector<1x8x32xf32>
    %357 = vector.shape_cast %356 : vector<1x8x32xf32> to vector<8x32xf32>
    %358 = vector.shape_cast %355 : vector<8x32xf32> to vector<1x8x32xf32>
    tpu.vector_store %arg16[%c1_153, %c0_154, %c0_155], %358 {strides = array<i32>} : memref<8x8x32xf32, #tpu.memory_space<vmem>>, vector<1x8x32xf32>,
    %359 = vector.extract_strided_slice %354 {offsets = [8, 0], sizes = [8, 32], strides = [1, 1]} : vector<16x32xf32> to vector<8x32xf32>
    %c6_156 = arith.constant 6 : index
    %c0_157 = arith.constant 0 : index
    %c0_158 = arith.constant 0 : index
    %360 = vector.load %arg17[%c6_156, %c0_157, %c0_158] : memref<8x8x32xf32, #tpu.memory_space<vmem>>, vector<1x8x32xf32>
    %361 = vector.shape_cast %360 : vector<1x8x32xf32> to vector<8x32xf32>
    %362 = vector.shape_cast %359 : vector<8x32xf32> to vector<1x8x32xf32>
    tpu.vector_store %arg17[%c6_156, %c0_157, %c0_158], %362 {strides = array<i32>} : memref<8x8x32xf32, #tpu.memory_space<vmem>>, vector<1x8x32xf32>,
    %c2_159 = arith.constant 2 : index
    %c0_160 = arith.constant 0 : index
    %c0_161 = arith.constant 0 : index
    %363 = vector.load %arg13[%c2_159, %c0_160, %c0_161] : memref<8x8x256xf32, #tpu.memory_space<vmem>>, vector<1x8x128xf32>
    %364 = vector.shape_cast %363 : vector<1x8x128xf32> to vector<8x128xf32>
    %c5_162 = arith.constant 5 : index
    %c0_163 = arith.constant 0 : index
    %c128_164 = arith.constant 128 : index
    %365 = vector.load %arg13[%c5_162, %c0_163, %c128_164] : memref<8x8x256xf32, #tpu.memory_space<vmem>>, vector<1x8x128xf32>
    %366 = vector.shape_cast %365 : vector<1x8x128xf32> to vector<8x128xf32>
    %367 = arith.truncf %354 : vector<16x32xf32> to vector<16x32xbf16>
    %cst_165 = arith.constant dense<0.000000e+00> : vector<16x256xf32>
    %368 = tpu.matmul %367, %297, %cst_165 {dimension_numbers = #tpu.dot_dimension_numbers<[1], [0], [0], [1], [0, 0, 1, 1], [], []>} : vector<16x32xbf16>, vector<32x256xbf16>, vector<16x256xf32> -> vector<16x256xf32>
    %369 = vector.extract_strided_slice %368 {offsets = [0, 0], sizes = [8, 128], strides = [1, 1]} : vector<16x256xf32> to vector<8x128xf32>
    %370 = arith.addf %364, %369 : vector<8x128xf32>
    %371 = vector.extract_strided_slice %368 {offsets = [8, 128], sizes = [8, 128], strides = [1, 1]} : vector<16x256xf32> to vector<8x128xf32>
    %372 = arith.addf %366, %371 : vector<8x128xf32>
    %373 = tpu.concatenate %370, %372 in 0 : vector<8x128xf32>, vector<8x128xf32> -> vector<16x128xf32>
    %374 = vector.extract_strided_slice %373 {offsets = [0, 0], sizes = [16, 96], strides = [1, 1]} : vector<16x128xf32> to vector<16x96xf32>
    %375 = arith.negf %374 : vector<16x96xf32>
    %376 = math.exp %375 : vector<16x96xf32>
    %cst_166 = arith.constant 1.000000e+00 : f32
    %377 = vector.broadcast %cst_166 : f32 to vector<16x96xf32>
    %378 = arith.addf %377, %376 : vector<16x96xf32>
    %379 = arith.divf %377, %378 : vector<16x96xf32>
    %380 = vector.extract_strided_slice %379 {offsets = [0, 0], sizes = [16, 32], strides = [1, 1]} : vector<16x96xf32> to vector<16x32xf32>
    %381 = vector.extract_strided_slice %379 {offsets = [0, 32], sizes = [16, 32], strides = [1, 1]} : vector<16x96xf32> to vector<16x32xf32>
    %382 = vector.extract_strided_slice %379 {offsets = [0, 64], sizes = [16, 32], strides = [1, 1]} : vector<16x96xf32> to vector<16x32xf32>
    %383 = vector.extract_strided_slice %373 {offsets = [0, 96], sizes = [16, 32], strides = [1, 1]} : vector<16x128xf32> to vector<16x32xf32>
    %384 = math.tanh %383 : vector<16x32xf32>
    %385 = arith.mulf %381, %352 : vector<16x32xf32>
    %386 = arith.mulf %380, %384 : vector<16x32xf32>
    %387 = arith.addf %385, %386 : vector<16x32xf32>
    %388 = math.tanh %387 : vector<16x32xf32>
    %389 = arith.mulf %382, %388 : vector<16x32xf32>
    %390 = vector.extract_strided_slice %389 {offsets = [0, 0], sizes = [8, 32], strides = [1, 1]} : vector<16x32xf32> to vector<8x32xf32>
    %c2_167 = arith.constant 2 : index
    %c0_168 = arith.constant 0 : index
    %c0_169 = arith.constant 0 : index
    %391 = vector.load %arg16[%c2_167, %c0_168, %c0_169] : memref<8x8x32xf32, #tpu.memory_space<vmem>>, vector<1x8x32xf32>
    %392 = vector.shape_cast %391 : vector<1x8x32xf32> to vector<8x32xf32>
    %393 = vector.shape_cast %390 : vector<8x32xf32> to vector<1x8x32xf32>
    tpu.vector_store %arg16[%c2_167, %c0_168, %c0_169], %393 {strides = array<i32>} : memref<8x8x32xf32, #tpu.memory_space<vmem>>, vector<1x8x32xf32>,
    %394 = vector.extract_strided_slice %389 {offsets = [8, 0], sizes = [8, 32], strides = [1, 1]} : vector<16x32xf32> to vector<8x32xf32>
    %c5_170 = arith.constant 5 : index
    %c0_171 = arith.constant 0 : index
    %c0_172 = arith.constant 0 : index
    %395 = vector.load %arg17[%c5_170, %c0_171, %c0_172] : memref<8x8x32xf32, #tpu.memory_space<vmem>>, vector<1x8x32xf32>
    %396 = vector.shape_cast %395 : vector<1x8x32xf32> to vector<8x32xf32>
    %397 = vector.shape_cast %394 : vector<8x32xf32> to vector<1x8x32xf32>
    tpu.vector_store %arg17[%c5_170, %c0_171, %c0_172], %397 {strides = array<i32>} : memref<8x8x32xf32, #tpu.memory_space<vmem>>, vector<1x8x32xf32>,
    %c3_173 = arith.constant 3 : index
    %c0_174 = arith.constant 0 : index
    %c0_175 = arith.constant 0 : index
    %398 = vector.load %arg13[%c3_173, %c0_174, %c0_175] : memref<8x8x256xf32, #tpu.memory_space<vmem>>, vector<1x8x128xf32>
    %399 = vector.shape_cast %398 : vector<1x8x128xf32> to vector<8x128xf32>
    %c4_176 = arith.constant 4 : index
    %c0_177 = arith.constant 0 : index
    %c128_178 = arith.constant 128 : index
    %400 = vector.load %arg13[%c4_176, %c0_177, %c128_178] : memref<8x8x256xf32, #tpu.memory_space<vmem>>, vector<1x8x128xf32>
    %401 = vector.shape_cast %400 : vector<1x8x128xf32> to vector<8x128xf32>
    %402 = arith.truncf %389 : vector<16x32xf32> to vector<16x32xbf16>
    %cst_179 = arith.constant dense<0.000000e+00> : vector<16x256xf32>
    %403 = tpu.matmul %402, %297, %cst_179 {dimension_numbers = #tpu.dot_dimension_numbers<[1], [0], [0], [1], [0, 0, 1, 1], [], []>} : vector<16x32xbf16>, vector<32x256xbf16>, vector<16x256xf32> -> vector<16x256xf32>
    %404 = vector.extract_strided_slice %403 {offsets = [0, 0], sizes = [8, 128], strides = [1, 1]} : vector<16x256xf32> to vector<8x128xf32>
    %405 = arith.addf %399, %404 : vector<8x128xf32>
    %406 = vector.extract_strided_slice %403 {offsets = [8, 128], sizes = [8, 128], strides = [1, 1]} : vector<16x256xf32> to vector<8x128xf32>
    %407 = arith.addf %401, %406 : vector<8x128xf32>
    %408 = tpu.concatenate %405, %407 in 0 : vector<8x128xf32>, vector<8x128xf32> -> vector<16x128xf32>
    %409 = vector.extract_strided_slice %408 {offsets = [0, 0], sizes = [16, 96], strides = [1, 1]} : vector<16x128xf32> to vector<16x96xf32>
    %410 = arith.negf %409 : vector<16x96xf32>
    %411 = math.exp %410 : vector<16x96xf32>
    %cst_180 = arith.constant 1.000000e+00 : f32
    %412 = vector.broadcast %cst_180 : f32 to vector<16x96xf32>
    %413 = arith.addf %412, %411 : vector<16x96xf32>
    %414 = arith.divf %412, %413 : vector<16x96xf32>
    %415 = vector.extract_strided_slice %414 {offsets = [0, 0], sizes = [16, 32], strides = [1, 1]} : vector<16x96xf32> to vector<16x32xf32>
    %416 = vector.extract_strided_slice %414 {offsets = [0, 32], sizes = [16, 32], strides = [1, 1]} : vector<16x96xf32> to vector<16x32xf32>
    %417 = vector.extract_strided_slice %414 {offsets = [0, 64], sizes = [16, 32], strides = [1, 1]} : vector<16x96xf32> to vector<16x32xf32>
    %418 = vector.extract_strided_slice %408 {offsets = [0, 96], sizes = [16, 32], strides = [1, 1]} : vector<16x128xf32> to vector<16x32xf32>
    %419 = math.tanh %418 : vector<16x32xf32>
    %420 = arith.mulf %416, %387 : vector<16x32xf32>
    %421 = arith.mulf %415, %419 : vector<16x32xf32>
    %422 = arith.addf %420, %421 : vector<16x32xf32>
    %423 = math.tanh %422 : vector<16x32xf32>
    %424 = arith.mulf %417, %423 : vector<16x32xf32>
    %425 = vector.extract_strided_slice %424 {offsets = [0, 0], sizes = [8, 32], strides = [1, 1]} : vector<16x32xf32> to vector<8x32xf32>
    %c3_181 = arith.constant 3 : index
    %c0_182 = arith.constant 0 : index
    %c0_183 = arith.constant 0 : index
    %426 = vector.load %arg16[%c3_181, %c0_182, %c0_183] : memref<8x8x32xf32, #tpu.memory_space<vmem>>, vector<1x8x32xf32>
    %427 = vector.shape_cast %426 : vector<1x8x32xf32> to vector<8x32xf32>
    %428 = vector.shape_cast %425 : vector<8x32xf32> to vector<1x8x32xf32>
    tpu.vector_store %arg16[%c3_181, %c0_182, %c0_183], %428 {strides = array<i32>} : memref<8x8x32xf32, #tpu.memory_space<vmem>>, vector<1x8x32xf32>,
    %429 = vector.extract_strided_slice %424 {offsets = [8, 0], sizes = [8, 32], strides = [1, 1]} : vector<16x32xf32> to vector<8x32xf32>
    %c4_184 = arith.constant 4 : index
    %c0_185 = arith.constant 0 : index
    %c0_186 = arith.constant 0 : index
    %430 = vector.load %arg17[%c4_184, %c0_185, %c0_186] : memref<8x8x32xf32, #tpu.memory_space<vmem>>, vector<1x8x32xf32>
    %431 = vector.shape_cast %430 : vector<1x8x32xf32> to vector<8x32xf32>
    %432 = vector.shape_cast %429 : vector<8x32xf32> to vector<1x8x32xf32>
    tpu.vector_store %arg17[%c4_184, %c0_185, %c0_186], %432 {strides = array<i32>} : memref<8x8x32xf32, #tpu.memory_space<vmem>>, vector<1x8x32xf32>,
    %c4_187 = arith.constant 4 : index
    %c0_188 = arith.constant 0 : index
    %c0_189 = arith.constant 0 : index
    %433 = vector.load %arg13[%c4_187, %c0_188, %c0_189] : memref<8x8x256xf32, #tpu.memory_space<vmem>>, vector<1x8x128xf32>
    %434 = vector.shape_cast %433 : vector<1x8x128xf32> to vector<8x128xf32>
    %c3_190 = arith.constant 3 : index
    %c0_191 = arith.constant 0 : index
    %c128_192 = arith.constant 128 : index
    %435 = vector.load %arg13[%c3_190, %c0_191, %c128_192] : memref<8x8x256xf32, #tpu.memory_space<vmem>>, vector<1x8x128xf32>
    %436 = vector.shape_cast %435 : vector<1x8x128xf32> to vector<8x128xf32>
    %437 = arith.truncf %424 : vector<16x32xf32> to vector<16x32xbf16>
    %cst_193 = arith.constant dense<0.000000e+00> : vector<16x256xf32>
    %438 = tpu.matmul %437, %297, %cst_193 {dimension_numbers = #tpu.dot_dimension_numbers<[1], [0], [0], [1], [0, 0, 1, 1], [], []>} : vector<16x32xbf16>, vector<32x256xbf16>, vector<16x256xf32> -> vector<16x256xf32>
    %439 = vector.extract_strided_slice %438 {offsets = [0, 0], sizes = [8, 128], strides = [1, 1]} : vector<16x256xf32> to vector<8x128xf32>
    %440 = arith.addf %434, %439 : vector<8x128xf32>
    %441 = vector.extract_strided_slice %438 {offsets = [8, 128], sizes = [8, 128], strides = [1, 1]} : vector<16x256xf32> to vector<8x128xf32>
    %442 = arith.addf %436, %441 : vector<8x128xf32>
    %443 = tpu.concatenate %440, %442 in 0 : vector<8x128xf32>, vector<8x128xf32> -> vector<16x128xf32>
    %444 = vector.extract_strided_slice %443 {offsets = [0, 0], sizes = [16, 96], strides = [1, 1]} : vector<16x128xf32> to vector<16x96xf32>
    %445 = arith.negf %444 : vector<16x96xf32>
    %446 = math.exp %445 : vector<16x96xf32>
    %cst_194 = arith.constant 1.000000e+00 : f32
    %447 = vector.broadcast %cst_194 : f32 to vector<16x96xf32>
    %448 = arith.addf %447, %446 : vector<16x96xf32>
    %449 = arith.divf %447, %448 : vector<16x96xf32>
    %450 = vector.extract_strided_slice %449 {offsets = [0, 0], sizes = [16, 32], strides = [1, 1]} : vector<16x96xf32> to vector<16x32xf32>
    %451 = vector.extract_strided_slice %449 {offsets = [0, 32], sizes = [16, 32], strides = [1, 1]} : vector<16x96xf32> to vector<16x32xf32>
    %452 = vector.extract_strided_slice %449 {offsets = [0, 64], sizes = [16, 32], strides = [1, 1]} : vector<16x96xf32> to vector<16x32xf32>
    %453 = vector.extract_strided_slice %443 {offsets = [0, 96], sizes = [16, 32], strides = [1, 1]} : vector<16x128xf32> to vector<16x32xf32>
    %454 = math.tanh %453 : vector<16x32xf32>
    %455 = arith.mulf %451, %422 : vector<16x32xf32>
    %456 = arith.mulf %450, %454 : vector<16x32xf32>
    %457 = arith.addf %455, %456 : vector<16x32xf32>
    %458 = math.tanh %457 : vector<16x32xf32>
    %459 = arith.mulf %452, %458 : vector<16x32xf32>
    %460 = vector.extract_strided_slice %459 {offsets = [0, 0], sizes = [8, 32], strides = [1, 1]} : vector<16x32xf32> to vector<8x32xf32>
    %c4_195 = arith.constant 4 : index
    %c0_196 = arith.constant 0 : index
    %c0_197 = arith.constant 0 : index
    %461 = vector.load %arg16[%c4_195, %c0_196, %c0_197] : memref<8x8x32xf32, #tpu.memory_space<vmem>>, vector<1x8x32xf32>
    %462 = vector.shape_cast %461 : vector<1x8x32xf32> to vector<8x32xf32>
    %463 = vector.shape_cast %460 : vector<8x32xf32> to vector<1x8x32xf32>
    tpu.vector_store %arg16[%c4_195, %c0_196, %c0_197], %463 {strides = array<i32>} : memref<8x8x32xf32, #tpu.memory_space<vmem>>, vector<1x8x32xf32>,
    %464 = vector.extract_strided_slice %459 {offsets = [8, 0], sizes = [8, 32], strides = [1, 1]} : vector<16x32xf32> to vector<8x32xf32>
    %c3_198 = arith.constant 3 : index
    %c0_199 = arith.constant 0 : index
    %c0_200 = arith.constant 0 : index
    %465 = vector.load %arg17[%c3_198, %c0_199, %c0_200] : memref<8x8x32xf32, #tpu.memory_space<vmem>>, vector<1x8x32xf32>
    %466 = vector.shape_cast %465 : vector<1x8x32xf32> to vector<8x32xf32>
    %467 = vector.shape_cast %464 : vector<8x32xf32> to vector<1x8x32xf32>
    tpu.vector_store %arg17[%c3_198, %c0_199, %c0_200], %467 {strides = array<i32>} : memref<8x8x32xf32, #tpu.memory_space<vmem>>, vector<1x8x32xf32>,
    %c5_201 = arith.constant 5 : index
    %c0_202 = arith.constant 0 : index
    %c0_203 = arith.constant 0 : index
    %468 = vector.load %arg13[%c5_201, %c0_202, %c0_203] : memref<8x8x256xf32, #tpu.memory_space<vmem>>, vector<1x8x128xf32>
    %469 = vector.shape_cast %468 : vector<1x8x128xf32> to vector<8x128xf32>
    %c2_204 = arith.constant 2 : index
    %c0_205 = arith.constant 0 : index
    %c128_206 = arith.constant 128 : index
    %470 = vector.load %arg13[%c2_204, %c0_205, %c128_206] : memref<8x8x256xf32, #tpu.memory_space<vmem>>, vector<1x8x128xf32>
    %471 = vector.shape_cast %470 : vector<1x8x128xf32> to vector<8x128xf32>
    %472 = arith.truncf %459 : vector<16x32xf32> to vector<16x32xbf16>
    %cst_207 = arith.constant dense<0.000000e+00> : vector<16x256xf32>
    %473 = tpu.matmul %472, %297, %cst_207 {dimension_numbers = #tpu.dot_dimension_numbers<[1], [0], [0], [1], [0, 0, 1, 1], [], []>} : vector<16x32xbf16>, vector<32x256xbf16>, vector<16x256xf32> -> vector<16x256xf32>
    %474 = vector.extract_strided_slice %473 {offsets = [0, 0], sizes = [8, 128], strides = [1, 1]} : vector<16x256xf32> to vector<8x128xf32>
    %475 = arith.addf %469, %474 : vector<8x128xf32>
    %476 = vector.extract_strided_slice %473 {offsets = [8, 128], sizes = [8, 128], strides = [1, 1]} : vector<16x256xf32> to vector<8x128xf32>
    %477 = arith.addf %471, %476 : vector<8x128xf32>
    %478 = tpu.concatenate %475, %477 in 0 : vector<8x128xf32>, vector<8x128xf32> -> vector<16x128xf32>
    %479 = vector.extract_strided_slice %478 {offsets = [0, 0], sizes = [16, 96], strides = [1, 1]} : vector<16x128xf32> to vector<16x96xf32>
    %480 = arith.negf %479 : vector<16x96xf32>
    %481 = math.exp %480 : vector<16x96xf32>
    %cst_208 = arith.constant 1.000000e+00 : f32
    %482 = vector.broadcast %cst_208 : f32 to vector<16x96xf32>
    %483 = arith.addf %482, %481 : vector<16x96xf32>
    %484 = arith.divf %482, %483 : vector<16x96xf32>
    %485 = vector.extract_strided_slice %484 {offsets = [0, 0], sizes = [16, 32], strides = [1, 1]} : vector<16x96xf32> to vector<16x32xf32>
    %486 = vector.extract_strided_slice %484 {offsets = [0, 32], sizes = [16, 32], strides = [1, 1]} : vector<16x96xf32> to vector<16x32xf32>
    %487 = vector.extract_strided_slice %484 {offsets = [0, 64], sizes = [16, 32], strides = [1, 1]} : vector<16x96xf32> to vector<16x32xf32>
    %488 = vector.extract_strided_slice %478 {offsets = [0, 96], sizes = [16, 32], strides = [1, 1]} : vector<16x128xf32> to vector<16x32xf32>
    %489 = math.tanh %488 : vector<16x32xf32>
    %490 = arith.mulf %486, %457 : vector<16x32xf32>
    %491 = arith.mulf %485, %489 : vector<16x32xf32>
    %492 = arith.addf %490, %491 : vector<16x32xf32>
    %493 = math.tanh %492 : vector<16x32xf32>
    %494 = arith.mulf %487, %493 : vector<16x32xf32>
    %495 = vector.extract_strided_slice %494 {offsets = [0, 0], sizes = [8, 32], strides = [1, 1]} : vector<16x32xf32> to vector<8x32xf32>
    %c5_209 = arith.constant 5 : index
    %c0_210 = arith.constant 0 : index
    %c0_211 = arith.constant 0 : index
    %496 = vector.load %arg16[%c5_209, %c0_210, %c0_211] : memref<8x8x32xf32, #tpu.memory_space<vmem>>, vector<1x8x32xf32>
    %497 = vector.shape_cast %496 : vector<1x8x32xf32> to vector<8x32xf32>
    %498 = vector.shape_cast %495 : vector<8x32xf32> to vector<1x8x32xf32>
    tpu.vector_store %arg16[%c5_209, %c0_210, %c0_211], %498 {strides = array<i32>} : memref<8x8x32xf32, #tpu.memory_space<vmem>>, vector<1x8x32xf32>,
    %499 = vector.extract_strided_slice %494 {offsets = [8, 0], sizes = [8, 32], strides = [1, 1]} : vector<16x32xf32> to vector<8x32xf32>
    %c2_212 = arith.constant 2 : index
    %c0_213 = arith.constant 0 : index
    %c0_214 = arith.constant 0 : index
    %500 = vector.load %arg17[%c2_212, %c0_213, %c0_214] : memref<8x8x32xf32, #tpu.memory_space<vmem>>, vector<1x8x32xf32>
    %501 = vector.shape_cast %500 : vector<1x8x32xf32> to vector<8x32xf32>
    %502 = vector.shape_cast %499 : vector<8x32xf32> to vector<1x8x32xf32>
    tpu.vector_store %arg17[%c2_212, %c0_213, %c0_214], %502 {strides = array<i32>} : memref<8x8x32xf32, #tpu.memory_space<vmem>>, vector<1x8x32xf32>,
    %c6_215 = arith.constant 6 : index
    %c0_216 = arith.constant 0 : index
    %c0_217 = arith.constant 0 : index
    %503 = vector.load %arg13[%c6_215, %c0_216, %c0_217] : memref<8x8x256xf32, #tpu.memory_space<vmem>>, vector<1x8x128xf32>
    %504 = vector.shape_cast %503 : vector<1x8x128xf32> to vector<8x128xf32>
    %c1_218 = arith.constant 1 : index
    %c0_219 = arith.constant 0 : index
    %c128_220 = arith.constant 128 : index
    %505 = vector.load %arg13[%c1_218, %c0_219, %c128_220] : memref<8x8x256xf32, #tpu.memory_space<vmem>>, vector<1x8x128xf32>
    %506 = vector.shape_cast %505 : vector<1x8x128xf32> to vector<8x128xf32>
    %507 = arith.truncf %494 : vector<16x32xf32> to vector<16x32xbf16>
    %cst_221 = arith.constant dense<0.000000e+00> : vector<16x256xf32>
    %508 = tpu.matmul %507, %297, %cst_221 {dimension_numbers = #tpu.dot_dimension_numbers<[1], [0], [0], [1], [0, 0, 1, 1], [], []>} : vector<16x32xbf16>, vector<32x256xbf16>, vector<16x256xf32> -> vector<16x256xf32>
    %509 = vector.extract_strided_slice %508 {offsets = [0, 0], sizes = [8, 128], strides = [1, 1]} : vector<16x256xf32> to vector<8x128xf32>
    %510 = arith.addf %504, %509 : vector<8x128xf32>
    %511 = vector.extract_strided_slice %508 {offsets = [8, 128], sizes = [8, 128], strides = [1, 1]} : vector<16x256xf32> to vector<8x128xf32>
    %512 = arith.addf %506, %511 : vector<8x128xf32>
    %513 = tpu.concatenate %510, %512 in 0 : vector<8x128xf32>, vector<8x128xf32> -> vector<16x128xf32>
    %514 = vector.extract_strided_slice %513 {offsets = [0, 0], sizes = [16, 96], strides = [1, 1]} : vector<16x128xf32> to vector<16x96xf32>
    %515 = arith.negf %514 : vector<16x96xf32>
    %516 = math.exp %515 : vector<16x96xf32>
    %cst_222 = arith.constant 1.000000e+00 : f32
    %517 = vector.broadcast %cst_222 : f32 to vector<16x96xf32>
    %518 = arith.addf %517, %516 : vector<16x96xf32>
    %519 = arith.divf %517, %518 : vector<16x96xf32>
    %520 = vector.extract_strided_slice %519 {offsets = [0, 0], sizes = [16, 32], strides = [1, 1]} : vector<16x96xf32> to vector<16x32xf32>
    %521 = vector.extract_strided_slice %519 {offsets = [0, 32], sizes = [16, 32], strides = [1, 1]} : vector<16x96xf32> to vector<16x32xf32>
    %522 = vector.extract_strided_slice %519 {offsets = [0, 64], sizes = [16, 32], strides = [1, 1]} : vector<16x96xf32> to vector<16x32xf32>
    %523 = vector.extract_strided_slice %513 {offsets = [0, 96], sizes = [16, 32], strides = [1, 1]} : vector<16x128xf32> to vector<16x32xf32>
    %524 = math.tanh %523 : vector<16x32xf32>
    %525 = arith.mulf %521, %492 : vector<16x32xf32>
    %526 = arith.mulf %520, %524 : vector<16x32xf32>
    %527 = arith.addf %525, %526 : vector<16x32xf32>
    %528 = math.tanh %527 : vector<16x32xf32>
    %529 = arith.mulf %522, %528 : vector<16x32xf32>
    %530 = vector.extract_strided_slice %529 {offsets = [0, 0], sizes = [8, 32], strides = [1, 1]} : vector<16x32xf32> to vector<8x32xf32>
    %c6_223 = arith.constant 6 : index
    %c0_224 = arith.constant 0 : index
    %c0_225 = arith.constant 0 : index
    %531 = vector.load %arg16[%c6_223, %c0_224, %c0_225] : memref<8x8x32xf32, #tpu.memory_space<vmem>>, vector<1x8x32xf32>
    %532 = vector.shape_cast %531 : vector<1x8x32xf32> to vector<8x32xf32>
    %533 = vector.shape_cast %530 : vector<8x32xf32> to vector<1x8x32xf32>
    tpu.vector_store %arg16[%c6_223, %c0_224, %c0_225], %533 {strides = array<i32>} : memref<8x8x32xf32, #tpu.memory_space<vmem>>, vector<1x8x32xf32>,
    %534 = vector.extract_strided_slice %529 {offsets = [8, 0], sizes = [8, 32], strides = [1, 1]} : vector<16x32xf32> to vector<8x32xf32>
    %c1_226 = arith.constant 1 : index
    %c0_227 = arith.constant 0 : index
    %c0_228 = arith.constant 0 : index
    %535 = vector.load %arg17[%c1_226, %c0_227, %c0_228] : memref<8x8x32xf32, #tpu.memory_space<vmem>>, vector<1x8x32xf32>
    %536 = vector.shape_cast %535 : vector<1x8x32xf32> to vector<8x32xf32>
    %537 = vector.shape_cast %534 : vector<8x32xf32> to vector<1x8x32xf32>
    tpu.vector_store %arg17[%c1_226, %c0_227, %c0_228], %537 {strides = array<i32>} : memref<8x8x32xf32, #tpu.memory_space<vmem>>, vector<1x8x32xf32>,
    %c7_229 = arith.constant 7 : index
    %c0_230 = arith.constant 0 : index
    %c0_231 = arith.constant 0 : index
    %538 = vector.load %arg13[%c7_229, %c0_230, %c0_231] : memref<8x8x256xf32, #tpu.memory_space<vmem>>, vector<1x8x128xf32>
    %539 = vector.shape_cast %538 : vector<1x8x128xf32> to vector<8x128xf32>
    %c0_232 = arith.constant 0 : index
    %c0_233 = arith.constant 0 : index
    %c128_234 = arith.constant 128 : index
    %540 = vector.load %arg13[%c0_232, %c0_233, %c128_234] : memref<8x8x256xf32, #tpu.memory_space<vmem>>, vector<1x8x128xf32>
    %541 = vector.shape_cast %540 : vector<1x8x128xf32> to vector<8x128xf32>
    %542 = arith.truncf %529 : vector<16x32xf32> to vector<16x32xbf16>
    %cst_235 = arith.constant dense<0.000000e+00> : vector<16x256xf32>
    %543 = tpu.matmul %542, %297, %cst_235 {dimension_numbers = #tpu.dot_dimension_numbers<[1], [0], [0], [1], [0, 0, 1, 1], [], []>} : vector<16x32xbf16>, vector<32x256xbf16>, vector<16x256xf32> -> vector<16x256xf32>
    %544 = vector.extract_strided_slice %543 {offsets = [0, 0], sizes = [8, 128], strides = [1, 1]} : vector<16x256xf32> to vector<8x128xf32>
    %545 = arith.addf %539, %544 : vector<8x128xf32>
    %546 = vector.extract_strided_slice %543 {offsets = [8, 128], sizes = [8, 128], strides = [1, 1]} : vector<16x256xf32> to vector<8x128xf32>
    %547 = arith.addf %541, %546 : vector<8x128xf32>
    %548 = tpu.concatenate %545, %547 in 0 : vector<8x128xf32>, vector<8x128xf32> -> vector<16x128xf32>
    %549 = vector.extract_strided_slice %548 {offsets = [0, 0], sizes = [16, 96], strides = [1, 1]} : vector<16x128xf32> to vector<16x96xf32>
    %550 = arith.negf %549 : vector<16x96xf32>
    %551 = math.exp %550 : vector<16x96xf32>
    %cst_236 = arith.constant 1.000000e+00 : f32
    %552 = vector.broadcast %cst_236 : f32 to vector<16x96xf32>
    %553 = arith.addf %552, %551 : vector<16x96xf32>
    %554 = arith.divf %552, %553 : vector<16x96xf32>
    %555 = vector.extract_strided_slice %554 {offsets = [0, 0], sizes = [16, 32], strides = [1, 1]} : vector<16x96xf32> to vector<16x32xf32>
    %556 = vector.extract_strided_slice %554 {offsets = [0, 32], sizes = [16, 32], strides = [1, 1]} : vector<16x96xf32> to vector<16x32xf32>
    %557 = vector.extract_strided_slice %554 {offsets = [0, 64], sizes = [16, 32], strides = [1, 1]} : vector<16x96xf32> to vector<16x32xf32>
    %558 = vector.extract_strided_slice %548 {offsets = [0, 96], sizes = [16, 32], strides = [1, 1]} : vector<16x128xf32> to vector<16x32xf32>
    %559 = math.tanh %558 : vector<16x32xf32>
    %560 = arith.mulf %556, %527 : vector<16x32xf32>
    %561 = arith.mulf %555, %559 : vector<16x32xf32>
    %562 = arith.addf %560, %561 : vector<16x32xf32>
    %563 = math.tanh %562 : vector<16x32xf32>
    %564 = arith.mulf %557, %563 : vector<16x32xf32>
    %565 = vector.extract_strided_slice %564 {offsets = [0, 0], sizes = [8, 32], strides = [1, 1]} : vector<16x32xf32> to vector<8x32xf32>
    %c7_237 = arith.constant 7 : index
    %c0_238 = arith.constant 0 : index
    %c0_239 = arith.constant 0 : index
    %566 = vector.load %arg16[%c7_237, %c0_238, %c0_239] : memref<8x8x32xf32, #tpu.memory_space<vmem>>, vector<1x8x32xf32>
    %567 = vector.shape_cast %566 : vector<1x8x32xf32> to vector<8x32xf32>
    %568 = vector.shape_cast %565 : vector<8x32xf32> to vector<1x8x32xf32>
    tpu.vector_store %arg16[%c7_237, %c0_238, %c0_239], %568 {strides = array<i32>} : memref<8x8x32xf32, #tpu.memory_space<vmem>>, vector<1x8x32xf32>,
    %569 = vector.extract_strided_slice %564 {offsets = [8, 0], sizes = [8, 32], strides = [1, 1]} : vector<16x32xf32> to vector<8x32xf32>
    %c0_240 = arith.constant 0 : index
    %c0_241 = arith.constant 0 : index
    %c0_242 = arith.constant 0 : index
    %570 = vector.load %arg17[%c0_240, %c0_241, %c0_242] : memref<8x8x32xf32, #tpu.memory_space<vmem>>, vector<1x8x32xf32>
    %571 = vector.shape_cast %570 : vector<1x8x32xf32> to vector<8x32xf32>
    %572 = vector.shape_cast %569 : vector<8x32xf32> to vector<1x8x32xf32>
    tpu.vector_store %arg17[%c0_240, %c0_241, %c0_242], %572 {strides = array<i32>} : memref<8x8x32xf32, #tpu.memory_space<vmem>>, vector<1x8x32xf32>,
    %c0_243 = arith.constant 0 : index
    %c0_244 = arith.constant 0 : index
    %c0_245 = arith.constant 0 : index
    %573 = vector.load %arg16[%c0_243, %c0_244, %c0_245] : memref<8x8x32xf32, #tpu.memory_space<vmem>>, vector<8x8x32xf32>
    %c0_246 = arith.constant 0 : index
    %c0_247 = arith.constant 0 : index
    %c0_248 = arith.constant 0 : index
    %574 = vector.load %arg17[%c0_246, %c0_247, %c0_248] : memref<8x8x32xf32, #tpu.memory_space<vmem>>, vector<8x8x32xf32>
    %575 = tpu.concatenate %573, %574 in 2 : vector<8x8x32xf32>, vector<8x8x32xf32> -> vector<8x8x64xf32>
    %576 = vector.extract_strided_slice %575 {offsets = [0, 0, 0], sizes = [8, 4, 64], strides = [1, 1, 1]} : vector<8x8x64xf32> to vector<8x4x64xf32>
    %577 = vector.extract_strided_slice %575 {offsets = [0, 4, 0], sizes = [8, 4, 64], strides = [1, 1, 1]} : vector<8x8x64xf32> to vector<8x4x64xf32>
    %c0_249 = arith.constant 0 : index
    %c0_250 = arith.constant 0 : index
    %578 = vector.load %arg7[%c0_249, %c0_250] : memref<4x4xi32, #tpu.memory_space<vmem>>, vector<4x4xi32>
    %579 = tpu.iota {dimensions = array<i32: 0>} : vector<8x4xi32>
    %580 = vector.extract_strided_slice %578 {offsets = [0, 0], sizes = [1, 4], strides = [1, 1]} : vector<4x4xi32> to vector<1x4xi32>
    %581 = vector.broadcast %580 : vector<1x4xi32> to vector<8x4xi32>
    %582 = arith.cmpi eq, %579, %581 : vector<8x4xi32>
    %583 = arith.extui %582 : vector<8x4xi1> to vector<8x4xi32>
    %584 = arith.sitofp %583 : vector<8x4xi32> to vector<8x4xf32>
    %585 = vector.shape_cast %584 : vector<8x4xf32> to vector<8x4x1xf32>
    %586 = vector.broadcast %585 : vector<8x4x1xf32> to vector<8x4x64xf32>
    %587 = arith.mulf %576, %586 : vector<8x4x64xf32>
    %cst_251 = arith.constant dense<0.000000e+00> : vector<4x64xf32>
    %588 = vector.multi_reduction <add>, %587, %cst_251 [0] : vector<8x4x64xf32> to vector<4x64xf32>
    %589 = vector.extract_strided_slice %578 {offsets = [1, 0], sizes = [1, 4], strides = [1, 1]} : vector<4x4xi32> to vector<1x4xi32>
    %590 = vector.broadcast %589 : vector<1x4xi32> to vector<8x4xi32>
    %591 = arith.cmpi eq, %579, %590 : vector<8x4xi32>
    %592 = arith.extui %591 : vector<8x4xi1> to vector<8x4xi32>
    %593 = arith.sitofp %592 : vector<8x4xi32> to vector<8x4xf32>
    %594 = vector.shape_cast %593 : vector<8x4xf32> to vector<8x4x1xf32>
    %595 = vector.broadcast %594 : vector<8x4x1xf32> to vector<8x4x64xf32>
    %596 = arith.mulf %577, %595 : vector<8x4x64xf32>
    %cst_252 = arith.constant dense<0.000000e+00> : vector<4x64xf32>
    %597 = vector.multi_reduction <add>, %596, %cst_252 [0] : vector<8x4x64xf32> to vector<4x64xf32>
    %598 = vector.extract_strided_slice %576 {offsets = [0, 0, 0], sizes = [8, 4, 32], strides = [1, 1, 1]} : vector<8x4x64xf32> to vector<8x4x32xf32>
    %599 = vector.extract_strided_slice %578 {offsets = [2, 0], sizes = [1, 4], strides = [1, 1]} : vector<4x4xi32> to vector<1x4xi32>
    %600 = vector.broadcast %599 : vector<1x4xi32> to vector<8x4xi32>
    %601 = arith.cmpi eq, %579, %600 : vector<8x4xi32>
    %602 = arith.extui %601 : vector<8x4xi1> to vector<8x4xi32>
    %603 = arith.sitofp %602 : vector<8x4xi32> to vector<8x4xf32>
    %604 = vector.shape_cast %603 : vector<8x4xf32> to vector<8x4x1xf32>
    %605 = vector.broadcast %604 : vector<8x4x1xf32> to vector<8x4x32xf32>
    %606 = arith.mulf %598, %605 : vector<8x4x32xf32>
    %cst_253 = arith.constant dense<0.000000e+00> : vector<4x32xf32>
    %607 = vector.multi_reduction <add>, %606, %cst_253 [0] : vector<8x4x32xf32> to vector<4x32xf32>
    %608 = vector.extract_strided_slice %577 {offsets = [0, 0, 0], sizes = [8, 4, 32], strides = [1, 1, 1]} : vector<8x4x64xf32> to vector<8x4x32xf32>
    %609 = vector.extract_strided_slice %578 {offsets = [3, 0], sizes = [1, 4], strides = [1, 1]} : vector<4x4xi32> to vector<1x4xi32>
    %610 = vector.broadcast %609 : vector<1x4xi32> to vector<8x4xi32>
    %611 = arith.cmpi eq, %579, %610 : vector<8x4xi32>
    %612 = arith.extui %611 : vector<8x4xi1> to vector<8x4xi32>
    %613 = arith.sitofp %612 : vector<8x4xi32> to vector<8x4xf32>
    %614 = vector.shape_cast %613 : vector<8x4xf32> to vector<8x4x1xf32>
    %615 = vector.broadcast %614 : vector<8x4x1xf32> to vector<8x4x32xf32>
    %616 = arith.mulf %608, %615 : vector<8x4x32xf32>
    %cst_254 = arith.constant dense<0.000000e+00> : vector<4x32xf32>
    %617 = vector.multi_reduction <add>, %616, %cst_254 [0] : vector<8x4x32xf32> to vector<4x32xf32>
    %618 = vector.extract_strided_slice %576 {offsets = [0, 0, 32], sizes = [1, 4, 32], strides = [1, 1, 1]} : vector<8x4x64xf32> to vector<1x4x32xf32>
    %619 = vector.shape_cast %618 : vector<1x4x32xf32> to vector<4x32xf32>
    %620 = vector.extract_strided_slice %577 {offsets = [0, 0, 32], sizes = [1, 4, 32], strides = [1, 1, 1]} : vector<8x4x64xf32> to vector<1x4x32xf32>
    %621 = vector.shape_cast %620 : vector<1x4x32xf32> to vector<4x32xf32>
    %622 = arith.subf %588, %597 : vector<4x64xf32>
    %623 = math.absf %622 : vector<4x64xf32>
    %624 = arith.subf %619, %621 : vector<4x32xf32>
    %625 = math.absf %624 : vector<4x32xf32>
    %626 = arith.subf %607, %617 : vector<4x32xf32>
    %627 = math.absf %626 : vector<4x32xf32>
    %628 = arith.mulf %588, %597 : vector<4x64xf32>
    %cst_255 = arith.constant dense<0.000000e+00> : vector<4xf32>
    %629 = vector.multi_reduction <add>, %628, %cst_255 [1] : vector<4x64xf32> to vector<4xf32>
    %630 = vector.shape_cast %629 : vector<4xf32> to vector<4x1xf32>
    %631 = arith.mulf %588, %588 : vector<4x64xf32>
    %cst_256 = arith.constant dense<0.000000e+00> : vector<4xf32>
    %632 = vector.multi_reduction <add>, %631, %cst_256 [1] : vector<4x64xf32> to vector<4xf32>
    %633 = vector.shape_cast %632 : vector<4xf32> to vector<4x1xf32>
    %634 = arith.mulf %597, %597 : vector<4x64xf32>
    %cst_257 = arith.constant dense<0.000000e+00> : vector<4xf32>
    %635 = vector.multi_reduction <add>, %634, %cst_257 [1] : vector<4x64xf32> to vector<4xf32>
    %636 = vector.shape_cast %635 : vector<4xf32> to vector<4x1xf32>
    %637 = arith.mulf %633, %636 : vector<4x1xf32>
    %cst_258 = arith.constant 9.99999996E-13 : f32
    %638 = vector.broadcast %cst_258 : f32 to vector<4x1xf32>
    %639 = arith.maximumf %637, %638 : vector<4x1xf32>
    %640 = math.sqrt %639 : vector<4x1xf32>
    %641 = arith.divf %630, %640 : vector<4x1xf32>
    %642 = arith.mulf %619, %621 : vector<4x32xf32>
    %cst_259 = arith.constant dense<0.000000e+00> : vector<4xf32>
    %643 = vector.multi_reduction <add>, %642, %cst_259 [1] : vector<4x32xf32> to vector<4xf32>
    %644 = vector.shape_cast %643 : vector<4xf32> to vector<4x1xf32>
    %645 = arith.mulf %619, %619 : vector<4x32xf32>
    %cst_260 = arith.constant dense<0.000000e+00> : vector<4xf32>
    %646 = vector.multi_reduction <add>, %645, %cst_260 [1] : vector<4x32xf32> to vector<4xf32>
    %647 = vector.shape_cast %646 : vector<4xf32> to vector<4x1xf32>
    %648 = arith.mulf %621, %621 : vector<4x32xf32>
    %cst_261 = arith.constant dense<0.000000e+00> : vector<4xf32>
    %649 = vector.multi_reduction <add>, %648, %cst_261 [1] : vector<4x32xf32> to vector<4xf32>
    %650 = vector.shape_cast %649 : vector<4xf32> to vector<4x1xf32>
    %651 = arith.mulf %647, %650 : vector<4x1xf32>
    %cst_262 = arith.constant 9.99999996E-13 : f32
    %652 = vector.broadcast %cst_262 : f32 to vector<4x1xf32>
    %653 = arith.maximumf %651, %652 : vector<4x1xf32>
    %654 = math.sqrt %653 : vector<4x1xf32>
    %655 = arith.divf %644, %654 : vector<4x1xf32>
    %656 = arith.mulf %607, %617 : vector<4x32xf32>
    %cst_263 = arith.constant dense<0.000000e+00> : vector<4xf32>
    %657 = vector.multi_reduction <add>, %656, %cst_263 [1] : vector<4x32xf32> to vector<4xf32>
    %658 = vector.shape_cast %657 : vector<4xf32> to vector<4x1xf32>
    %659 = arith.mulf %607, %607 : vector<4x32xf32>
    %cst_264 = arith.constant dense<0.000000e+00> : vector<4xf32>
    %660 = vector.multi_reduction <add>, %659, %cst_264 [1] : vector<4x32xf32> to vector<4xf32>
    %661 = vector.shape_cast %660 : vector<4xf32> to vector<4x1xf32>
    %662 = arith.mulf %617, %617 : vector<4x32xf32>
    %cst_265 = arith.constant dense<0.000000e+00> : vector<4xf32>
    %663 = vector.multi_reduction <add>, %662, %cst_265 [1] : vector<4x32xf32> to vector<4xf32>
    %664 = vector.shape_cast %663 : vector<4xf32> to vector<4x1xf32>
    %665 = arith.mulf %661, %664 : vector<4x1xf32>
    %cst_266 = arith.constant 9.99999996E-13 : f32
    %666 = vector.broadcast %cst_266 : f32 to vector<4x1xf32>
    %667 = arith.maximumf %665, %666 : vector<4x1xf32>
    %668 = math.sqrt %667 : vector<4x1xf32>
    %669 = arith.divf %658, %668 : vector<4x1xf32>
    %cst_267 = arith.constant 0.000000e+00 : f32
    %670 = vector.broadcast %cst_267 : f32 to vector<4x125xf32>
    %671 = tpu.concatenate %623, %625, %627, %641, %655, %669, %670 in 1 : vector<4x64xf32>, vector<4x32xf32>, vector<4x32xf32>, vector<4x1xf32>, vector<4x1xf32>, vector<4x1xf32>, vector<4x125xf32> -> vector<4x256xf32>
    %672 = arith.truncf %671 : vector<4x256xf32> to vector<4x256xbf16>
    %c0_268 = arith.constant 0 : index
    %c0_269 = arith.constant 0 : index
    %673 = vector.load %arg8[%c0_268, %c0_269] : memref<256x32xbf16, #tpu.memory_space<vmem>>, vector<256x32xbf16>
    %cst_270 = arith.constant dense<0.000000e+00> : vector<4x32xf32>
    %674 = tpu.matmul %672, %673, %cst_270 {dimension_numbers = #tpu.dot_dimension_numbers<[1], [0], [0], [1], [0, 0, 1, 1], [], []>} : vector<4x256xbf16>, vector<256x32xbf16>, vector<4x32xf32> -> vector<4x32xf32>
    %c0_271 = arith.constant 0 : index
    %c0_272 = arith.constant 0 : index
    %675 = vector.load %arg9[%c0_271, %c0_272] : memref<1x32xf32, #tpu.memory_space<vmem>>, vector<1x32xf32>
    %676 = vector.broadcast %675 : vector<1x32xf32> to vector<4x32xf32>
    %677 = arith.addf %674, %676 : vector<4x32xf32>
    %cst_273 = arith.constant 0.000000e+00 : f32
    %678 = vector.broadcast %cst_273 : f32 to vector<4x32xf32>
    %679 = arith.maximumf %677, %678 : vector<4x32xf32>
    %c0_274 = arith.constant 0 : index
    %c0_275 = arith.constant 0 : index
    %680 = vector.load %arg10[%c0_274, %c0_275] : memref<1x32xf32, #tpu.memory_space<vmem>>, vector<1x32xf32>
    %681 = vector.broadcast %680 : vector<1x32xf32> to vector<4x32xf32>
    %682 = arith.mulf %679, %681 : vector<4x32xf32>
    %cst_276 = arith.constant dense<0.000000e+00> : vector<4xf32>
    %683 = vector.multi_reduction <add>, %682, %cst_276 [1] : vector<4x32xf32> to vector<4xf32>
    %684 = vector.shape_cast %683 : vector<4xf32> to vector<4x1xf32>
    %c0_277 = arith.constant 0 : index
    %c0_278 = arith.constant 0 : index
    %685 = vector.load %arg11[%c0_277, %c0_278] : memref<1x1xf32, #tpu.memory_space<vmem>>, vector<1x1xf32>
    %686 = vector.broadcast %685 : vector<1x1xf32> to vector<4x1xf32>
    %687 = arith.addf %684, %686 : vector<4x1xf32>
    %688 = arith.negf %687 : vector<4x1xf32>
    %689 = math.exp %688 : vector<4x1xf32>
    %cst_279 = arith.constant 1.000000e+00 : f32
    %690 = vector.broadcast %cst_279 : f32 to vector<4x1xf32>
    %691 = arith.addf %690, %689 : vector<4x1xf32>
    %692 = arith.divf %690, %691 : vector<4x1xf32>
    %693 = tpu.concatenate %687, %692 in 1 : vector<4x1xf32>, vector<4x1xf32> -> vector<4x2xf32>
    %c0_280 = arith.constant 0 : index
    %c0_281 = arith.constant 0 : index
    %694 = vector.load %arg12[%c0_280, %c0_281] : memref<4x2xf32, #tpu.memory_space<vmem>>, vector<4x2xf32>
    tpu.vector_store %arg12[%c0_280, %c0_281], %693 {strides = array<i32>} : memref<4x2xf32, #tpu.memory_space<vmem>>, vector<4x2xf32>,
    return
  }
}

</mosaic_0001>

<llo_original>
// kernel: classifier_forward.1
$region0: #{classifier_forward.1}
  #allocation0 [shape = 'u32[]', space=smem, size = 0x4, offset = 0x4, fixed_abs, tag = 'smem constant byte address 0x4 - core index']
  #allocation1 [shape = 'u32[72,128]{1,0:T(1,128)}', space=vmem, size = 0x9000, scoped, tag = 'internal scratch']
  #allocation2 [shape = 'f32[8,8,256]{2,1,0:T(8,128)}', space=vmem, size = 0x10000, scoped, tag = 'scratch operand']
  #allocation3 [shape = 'f32[8,8,32]{2,1,0:T(8,128)}', space=vmem, size = 0x8000, scoped, tag = 'scratch operand']
  #allocation4 [shape = 'f32[8,8,32]{2,1,0:T(8,128)}', space=vmem, size = 0x8000, scoped, tag = 'scratch operand']
  #allocation5 [shape = 'f32[8,8,32]{2,1,0:T(8,128)}', space=vmem, size = 0x8000, scoped, tag = 'scratch operand']
  #allocation6 [shape = 'f32[8,8,32]{2,1,0:T(8,128)}', space=vmem, size = 0x8000, scoped, tag = 'scratch operand']
  #allocation7 [shape = 'f32[1,1]{1,0:T(1,128)S(1)}', space=vmem, size = 0x200, scoped, tag = 'scoped memory for classifier_forward.1']
  %s0 = inlined_call_operand.vmem [shape: bf16[8,8,384], index: 0, kind: input, shape index: {}]
  %s1 = inlined_call_operand.vmem [shape: bf16[384,256], index: 1, kind: input, shape index: {}]
  %s2 = inlined_call_operand.vmem [shape: bf16[32,256], index: 2, kind: input, shape index: {}]
  %s3 = inlined_call_operand.vmem [shape: f32[1,256], index: 3, kind: input, shape index: {}]
  %s4 = inlined_call_operand.vmem [shape: bf16[64,256], index: 4, kind: input, shape index: {}]
  %s5 = inlined_call_operand.vmem [shape: bf16[32,256], index: 5, kind: input, shape index: {}]
  %s6 = inlined_call_operand.vmem [shape: f32[1,256], index: 6, kind: input, shape index: {}]
  %s7 = inlined_call_operand.vmem [shape: s32[4,4], index: 7, kind: input, shape index: {}]
  %s8 = inlined_call_operand.vmem [shape: bf16[256,32], index: 8, kind: input, shape index: {}]
  %s9 = inlined_call_operand.vmem [shape: f32[1,32], index: 9, kind: input, shape index: {}]
  %s10 = inlined_call_operand.vmem [shape: f32[1,32], index: 10, kind: input, shape index: {}]
  %s11 = inlined_call_operand.<no memory space> [shape: f32[1,1], index: 11, kind: input, shape index: {}]
  %s12 = inlined_call_operand.vmem [shape: f32[4,2], index: 12, kind: output, shape index: {}]
  %s13 = sld [smem:[#allocation0]]
  $region58: #{classifier_forward.1} parent=0
    _
  %s15 = ssub.s32 1, %s13
  %s16 = scalar_select 0, %s15, %s13
  %v17 = vstv %s11
  %18 = vst [vmem:[#allocation7] sm:$0x1] %v17
  // Predicated region
  $region2: #{classifier_forward.1} parent=0 // pred_check
    _
  $region3: #{classifier_forward.1} parent=0 // pred_check_branch
    %20 = sbr.rel (0) target = $region5
  $region4: #{classifier_forward.1} parent=0 // pred_region
    _
  $region5: #{classifier_forward.1} parent=0 // pred_fallthru
    _
  // Predicated region
  $region6: #{classifier_forward.1} parent=0 // pred_check
    _
  $region7: #{classifier_forward.1} parent=0 // pred_check_branch
    %22 = sbr.rel (0) target = $region9
  $region8: #{classifier_forward.1} parent=0 // pred_region
    _
  $region9: #{classifier_forward.1} parent=0 // pred_fallthru
    _
  // Predicated region
  $region10: #{classifier_forward.1} parent=0 // pred_check
    _
  $region11: #{classifier_forward.1} parent=0 // pred_check_branch
    %24 = sbr.rel (0) target = $region13
  $region12: #{classifier_forward.1} parent=0 // pred_region
    _
  $region13: #{classifier_forward.1} parent=0 // pred_fallthru
    _
  // Predicated region
  $region14: #{classifier_forward.1} parent=0 // pred_check
    _
  $region15: #{classifier_forward.1} parent=0 // pred_check_branch
    %26 = sbr.rel (0) target = $region17
  $region16: #{classifier_forward.1} parent=0 // pred_region
    _
  $region17: #{classifier_forward.1} parent=0 // pred_fallthru
    _
  // Predicated region
  $region18: #{classifier_forward.1} parent=0 // pred_check
    _
  $region19: #{classifier_forward.1} parent=0 // pred_check_branch
    %28 = sbr.rel (0) target = $region21
  $region20: #{classifier_forward.1} parent=0 // pred_region
    _
  $region21: #{classifier_forward.1} parent=0 // pred_fallthru
    _
  // Predicated region
  $region22: #{classifier_forward.1} parent=0 // pred_check
    _
  $region23: #{classifier_forward.1} parent=0 // pred_check_branch
    %30 = sbr.rel (0) target = $region25
  $region24: #{classifier_forward.1} parent=0 // pred_region
    _
  $region25: #{classifier_forward.1} parent=0 // pred_fallthru
    _
  // Predicated region
  $region26: #{classifier_forward.1} parent=0 // pred_check
    _
  $region27: #{classifier_forward.1} parent=0 // pred_check_branch
    %32 = sbr.rel (0) target = $region29
  $region28: #{classifier_forward.1} parent=0 // pred_region
    _
  $region29: #{classifier_forward.1} parent=0 // pred_fallthru
    _
  // Predicated region
  $region30: #{classifier_forward.1} parent=0 // pred_check
    _
  $region31: #{classifier_forward.1} parent=0 // pred_check_branch
    %34 = sbr.rel (0) target = $region33
  $region32: #{classifier_forward.1} parent=0 // pred_region
    _
  $region33: #{classifier_forward.1} parent=0 // pred_fallthru
    _
  // Predicated region
  $region34: #{classifier_forward.1} parent=0 // pred_check
    _
  $region35: #{classifier_forward.1} parent=0 // pred_check_branch
    %36 = sbr.rel (0) target = $region37
  $region36: #{classifier_forward.1} parent=0 // pred_region
    _
  $region37: #{classifier_forward.1} parent=0 // pred_fallthru
    _
  // Predicated region
  $region38: #{classifier_forward.1} parent=0 // pred_check
    _
  $region39: #{classifier_forward.1} parent=0 // pred_check_branch
    %38 = sbr.rel (0) target = $region41
  $region40: #{classifier_forward.1} parent=0 // pred_region
    _
  $region41: #{classifier_forward.1} parent=0 // pred_fallthru
    _
  // Predicated region
  $region42: #{classifier_forward.1} parent=0 // pred_check
    _
  $region43: #{classifier_forward.1} parent=0 // pred_check_branch
    %40 = sbr.rel (0) target = $region45
  $region44: #{classifier_forward.1} parent=0 // pred_region
    _
  $region45: #{classifier_forward.1} parent=0 // pred_fallthru
    _
  // Predicated region
  $region46: #{classifier_forward.1} parent=0 // pred_check
    _
  $region47: #{classifier_forward.1} parent=0 // pred_check_branch
    %42 = sbr.rel (0) target = $region49
  $region48: #{classifier_forward.1} parent=0 // pred_region
    _
  $region49: #{classifier_forward.1} parent=0 // pred_fallthru
    _
  %v44 = vld [vmem:[%s0] sm:$0xff]
  %v45 = vld [vmem:[%s0 + $0x8] sm:$0xf]
  %v46 = vld [vmem:[%s0 + $0xc] sm:$0xff]
  %v47 = vld [vmem:[%s0 + $0x14] sm:$0xf]
  %v48 = vld [vmem:[%s0 + $0x18] sm:$0xff]
  %v49 = vld [vmem:[%s0 + $0x20] sm:$0xf]
  %v50 = vld [vmem:[%s0 + $0x24] sm:$0xff]
  %v51 = vld [vmem:[%s0 + $0x2c] sm:$0xf]
  %v52 = vld [vmem:[%s0 + $0x30] sm:$0xff]
  %v53 = vld [vmem:[%s0 + $0x38] sm:$0xf]
  %v54 = vld [vmem:[%s0 + $0x3c] sm:$0xff]
  %v55 = vld [vmem:[%s0 + $0x44] sm:$0xf]
  %v56 = vld [vmem:[%s0 + $0x48] sm:$0xff]
  %v57 = vld [vmem:[%s0 + $0x50] sm:$0xf]
  %v58 = vld [vmem:[%s0 + $0x54] sm:$0xff]
  %v59 = vld [vmem:[%s0 + $0x5c] sm:$0xf]
  %v60 = vld [vmem:[%s1] sm:$0xff]
  %v61 = vld [vmem:[%s1 + $0x8] sm:$0xff]
  %v62 = vld [vmem:[%s1 + $0x10] sm:$0xff]
  %v63 = vld [vmem:[%s1 + $0x18] sm:$0xff]
  %v64 = vld [vmem:[%s1 + $0x20] sm:$0xff]
  %v65 = vld [vmem:[%s1 + $0x28] sm:$0xff]
  %v66 = vld [vmem:[%s1 + $0x30] sm:$0xff]
  %v67 = vld [vmem:[%s1 + $0x38] sm:$0xff]
  %v68 = vld [vmem:[%s1 + $0x40] sm:$0xff]
  %v69 = vld [vmem:[%s1 + $0x48] sm:$0xff]
  %v70 = vld [vmem:[%s1 + $0x50] sm:$0xff]
  %v71 = vld [vmem:[%s1 + $0x58] sm:$0xff]
  %v72 = vld [vmem:[%s1 + $0x60] sm:$0xff]
  %v73 = vld [vmem:[%s1 + $0x68] sm:$0xff]
  %v74 = vld [vmem:[%s1 + $0x70] sm:$0xff]
  %v75 = vld [vmem:[%s1 + $0x78] sm:$0xff]
  %v76 = vld [vmem:[%s1 + $0x80] sm:$0xff]
  %v77 = vld [vmem:[%s1 + $0x88] sm:$0xff]
  %v78 = vld [vmem:[%s1 + $0x90] sm:$0xff]
  %v79 = vld [vmem:[%s1 + $0x98] sm:$0xff]
  %v80 = vld [vmem:[%s1 + $0xa0] sm:$0xff]
  %v81 = vld [vmem:[%s1 + $0xa8] sm:$0xff]
  %v82 = vld [vmem:[%s1 + $0xb0] sm:$0xff]
  %v83 = vld [vmem:[%s1 + $0xb8] sm:$0xff]
  %v84 = vld [vmem:[%s1 + $0xc0] sm:$0xff]
  %v85 = vld [vmem:[%s1 + $0xc8] sm:$0xff]
  %v86 = vld [vmem:[%s1 + $0xd0] sm:$0xff]
  %v87 = vld [vmem:[%s1 + $0xd8] sm:$0xff]
  %v88 = vld [vmem:[%s1 + $0xe0] sm:$0xff]
  %v89 = vld [vmem:[%s1 + $0xe8] sm:$0xff]
  %v90 = vld [vmem:[%s1 + $0xf0] sm:$0xff]
  %v91 = vld [vmem:[%s1 + $0xf8] sm:$0xff]
  %v92 = vld [vmem:[%s1 + $0x100] sm:$0xff]
  %v93 = vld [vmem:[%s1 + $0x108] sm:$0xff]
  %v94 = vld [vmem:[%s1 + $0x110] sm:$0xff]
  %v95 = vld [vmem:[%s1 + $0x118] sm:$0xff]
  %v96 = vld [vmem:[%s1 + $0x120] sm:$0xff]
  %v97 = vld [vmem:[%s1 + $0x128] sm:$0xff]
  %v98 = vld [vmem:[%s1 + $0x130] sm:$0xff]
  %v99 = vld [vmem:[%s1 + $0x138] sm:$0xff]
  %v100 = vld [vmem:[%s1 + $0x140] sm:$0xff]
  %v101 = vld [vmem:[%s1 + $0x148] sm:$0xff]
  %v102 = vld [vmem:[%s1 + $0x150] sm:$0xff]
  %v103 = vld [vmem:[%s1 + $0x158] sm:$0xff]
  %v104 = vld [vmem:[%s1 + $0x160] sm:$0xff]
  %v105 = vld [vmem:[%s1 + $0x168] sm:$0xff]
  %v106 = vld [vmem:[%s1 + $0x170] sm:$0xff]
  %v107 = vld [vmem:[%s1 + $0x178] sm:$0xff]
  %v108 = vld [vmem:[%s3] sm:$0x3]
  %v110 = vperm.slane %v108, 0
  %v111 = vperm.slane %v108, 1
  %v130 = vunpack.c.l.b16 %v44
  %v131 = vunpack.c.h.b16 %v44
  %v132 = vunpack.c.l.b16 %v45
  %v133 = vunpack.c.l.b16 %v46
  %v134 = vunpack.c.h.b16 %v46
  %v135 = vunpack.c.l.b16 %v47
  %v136 = vunpack.c.l.b16 %v48
  %v137 = vunpack.c.h.b16 %v48
  %v138 = vunpack.c.l.b16 %v49
  %v139 = vunpack.c.l.b16 %v50
  %v140 = vunpack.c.h.b16 %v50
  %v141 = vunpack.c.l.b16 %v51
  %v142 = vunpack.c.l.b16 %v52
  %v143 = vunpack.c.h.b16 %v52
  %v144 = vunpack.c.l.b16 %v53
  %v145 = vunpack.c.l.b16 %v54
  %v146 = vunpack.c.h.b16 %v54
  %v147 = vunpack.c.l.b16 %v55
  %v148 = vunpack.c.l.b16 %v56
  %v149 = vunpack.c.h.b16 %v56
  %v150 = vunpack.c.l.b16 %v57
  %v151 = vunpack.c.l.b16 %v58
  %v152 = vunpack.c.h.b16 %v58
  %v153 = vunpack.c.l.b16 %v59
  %v154 = vpack.c.b16 %v133, %v130
  %v155 = vpack.c.b16 %v134, %v131
  %v156 = vpack.c.b16 %v135, %v132
  %v157 = vpack.c.b16 %v139, %v136
  %v158 = vpack.c.b16 %v140, %v137
  %v159 = vpack.c.b16 %v141, %v138
  %v160 = vpack.c.b16 %v145, %v142
  %v161 = vpack.c.b16 %v146, %v143
  %v162 = vpack.c.b16 %v147, %v144
  %v163 = vpack.c.b16 %v151, %v148
  %v164 = vpack.c.b16 %v152, %v149
  %v165 = vpack.c.b16 %v153, %v150
  %v226 = vunpack.c.l.b16 %v60
  %v227 = vunpack.c.h.b16 %v60
  %v228 = vunpack.c.l.b16 %v61
  %v229 = vunpack.c.h.b16 %v61
  %v230 = vunpack.c.l.b16 %v62
  %v231 = vunpack.c.h.b16 %v62
  %v232 = vunpack.c.l.b16 %v63
  %v233 = vunpack.c.h.b16 %v63
  %v234 = vunpack.c.l.b16 %v64
  %v235 = vunpack.c.h.b16 %v64
  %v236 = vunpack.c.l.b16 %v65
  %v237 = vunpack.c.h.b16 %v65
  %v238 = vunpack.c.l.b16 %v66
  %v239 = vunpack.c.h.b16 %v66
  %v240 = vunpack.c.l.b16 %v67
  %v241 = vunpack.c.h.b16 %v67
  %v242 = vunpack.c.l.b16 %v68
  %v243 = vunpack.c.h.b16 %v68
  %v244 = vunpack.c.l.b16 %v69
  %v245 = vunpack.c.h.b16 %v69
  %v246 = vunpack.c.l.b16 %v70
  %v247 = vunpack.c.h.b16 %v70
  %v248 = vunpack.c.l.b16 %v71
  %v249 = vunpack.c.h.b16 %v71
  %v250 = vunpack.c.l.b16 %v72
  %v251 = vunpack.c.h.b16 %v72
  %v252 = vunpack.c.l.b16 %v73
  %v253 = vunpack.c.h.b16 %v73
  %v254 = vunpack.c.l.b16 %v74
  %v255 = vunpack.c.h.b16 %v74
  %v256 = vunpack.c.l.b16 %v75
  %v257 = vunpack.c.h.b16 %v75
  %v258 = vunpack.c.l.b16 %v76
  %v259 = vunpack.c.h.b16 %v76
  %v260 = vunpack.c.l.b16 %v77
  %v261 = vunpack.c.h.b16 %v77
  %v262 = vunpack.c.l.b16 %v78
  %v263 = vunpack.c.h.b16 %v78
  %v264 = vunpack.c.l.b16 %v79
  %v265 = vunpack.c.h.b16 %v79
  %v266 = vunpack.c.l.b16 %v80
  %v267 = vunpack.c.h.b16 %v80
  %v268 = vunpack.c.l.b16 %v81
  %v269 = vunpack.c.h.b16 %v81
  %v270 = vunpack.c.l.b16 %v82
  %v271 = vunpack.c.h.b16 %v82
  %v272 = vunpack.c.l.b16 %v83
  %v273 = vunpack.c.h.b16 %v83
  %v274 = vunpack.c.l.b16 %v84
  %v275 = vunpack.c.h.b16 %v84
  %v276 = vunpack.c.l.b16 %v85
  %v277 = vunpack.c.h.b16 %v85
  %v278 = vunpack.c.l.b16 %v86
  %v279 = vunpack.c.h.b16 %v86
  %v280 = vunpack.c.l.b16 %v87
  %v281 = vunpack.c.h.b16 %v87
  %v282 = vunpack.c.l.b16 %v88
  %v283 = vunpack.c.h.b16 %v88
  %v284 = vunpack.c.l.b16 %v89
  %v285 = vunpack.c.h.b16 %v89
  %v286 = vunpack.c.l.b16 %v90
  %v287 = vunpack.c.h.b16 %v90
  %v288 = vunpack.c.l.b16 %v91
  %v289 = vunpack.c.h.b16 %v91
  %v290 = vunpack.c.l.b16 %v92
  %v291 = vunpack.c.h.b16 %v92
  %v292 = vunpack.c.l.b16 %v93
  %v293 = vunpack.c.h.b16 %v93
  %v294 = vunpack.c.l.b16 %v94
  %v295 = vunpack.c.h.b16 %v94
  %v296 = vunpack.c.l.b16 %v95
  %v297 = vunpack.c.h.b16 %v95
  %v298 = vunpack.c.l.b16 %v96
  %v299 = vunpack.c.h.b16 %v96
  %v300 = vunpack.c.l.b16 %v97
  %v301 = vunpack.c.h.b16 %v97
  %v302 = vunpack.c.l.b16 %v98
  %v303 = vunpack.c.h.b16 %v98
  %v304 = vunpack.c.l.b16 %v99
  %v305 = vunpack.c.h.b16 %v99
  %v306 = vunpack.c.l.b16 %v100
  %v307 = vunpack.c.h.b16 %v100
  %v308 = vunpack.c.l.b16 %v101
  %v309 = vunpack.c.h.b16 %v101
  %v310 = vunpack.c.l.b16 %v102
  %v311 = vunpack.c.h.b16 %v102
  %v312 = vunpack.c.l.b16 %v103
  %v313 = vunpack.c.h.b16 %v103
  %v314 = vunpack.c.l.b16 %v104
  %v315 = vunpack.c.h.b16 %v104
  %v316 = vunpack.c.l.b16 %v105
  %v317 = vunpack.c.h.b16 %v105
  %v318 = vunpack.c.l.b16 %v106
  %v319 = vunpack.c.h.b16 %v106
  %v320 = vunpack.c.l.b16 %v107
  %v321 = vunpack.c.h.b16 %v107
  %v322 = vpack.c.b16 %v228, %v226
  %v323 = vpack.c.b16 %v229, %v227
  %v324 = vpack.c.b16 %v232, %v230
  %v325 = vpack.c.b16 %v233, %v231
  %v326 = vpack.c.b16 %v236, %v234
  %v327 = vpack.c.b16 %v237, %v235
  %v328 = vpack.c.b16 %v240, %v238
  %v329 = vpack.c.b16 %v241, %v239
  %v330 = vpack.c.b16 %v244, %v242
  %v331 = vpack.c.b16 %v245, %v243
  %v332 = vpack.c.b16 %v248, %v246
  %v333 = vpack.c.b16 %v249, %v247
  %v334 = vpack.c.b16 %v252, %v250
  %v335 = vpack.c.b16 %v253, %v251
  %v336 = vpack.c.b16 %v256, %v254
  %v337 = vpack.c.b16 %v257, %v255
  %v338 = vpack.c.b16 %v260, %v258
  %v339 = vpack.c.b16 %v261, %v259
  %v340 = vpack.c.b16 %v264, %v262
  %v341 = vpack.c.b16 %v265, %v263
  %v342 = vpack.c.b16 %v268, %v266
  %v343 = vpack.c.b16 %v269, %v267
  %v344 = vpack.c.b16 %v272, %v270
  %v345 = vpack.c.b16 %v273, %v271
  %v346 = vpack.c.b16 %v276, %v274
  %v347 = vpack.c.b16 %v277, %v275
  %v348 = vpack.c.b16 %v280, %v278
  %v349 = vpack.c.b16 %v281, %v279
  %v350 = vpack.c.b16 %v284, %v282
  %v351 = vpack.c.b16 %v285, %v283
  %v352 = vpack.c.b16 %v288, %v286
  %v353 = vpack.c.b16 %v289, %v287
  %v354 = vpack.c.b16 %v292, %v290
  %v355 = vpack.c.b16 %v293, %v291
  %v356 = vpack.c.b16 %v296, %v294
  %v357 = vpack.c.b16 %v297, %v295
  %v358 = vpack.c.b16 %v300, %v298
  %v359 = vpack.c.b16 %v301, %v299
  %v360 = vpack.c.b16 %v304, %v302
  %v361 = vpack.c.b16 %v305, %v303
  %v362 = vpack.c.b16 %v308, %v306
  %v363 = vpack.c.b16 %v309, %v307
  %v364 = vpack.c.b16 %v312, %v310
  %v365 = vpack.c.b16 %v313, %v311
  %v366 = vpack.c.b16 %v316, %v314
  %v367 = vpack.c.b16 %v317, %v315
  %v368 = vpack.c.b16 %v320, %v318
  %v369 = vpack.c.b16 %v321, %v319
  %418 = vmatpush.bf16.msra.mxu0 %v336
  %419 = vmatpush.bf16.msra.mxu0 %v334
  %420 = vmatpush.bf16.msra.mxu0 %v332
  %421 = vmatpush.bf16.msra.mxu0 %v330
  %422 = vmatpush.bf16.msra.mxu0 %v328
  %423 = vmatpush.bf16.msra.mxu0 %v326
  %424 = vmatpush.bf16.msra.mxu0 %v324
  %425 = vmatpush.bf16.msra.mxu0 %v322
  %426 = vmatmul.bf16.gmra.mxu0 %v154
  %v427 = vpop.f32.mrf.mxu0
  %v428 = vadd.f32 %v110, %v427
  %v429 = vpop.f32.mrf.mxu0
  %v430 = vadd.f32 %v110, %v429
  %431 = vmatmul.bf16.gmra.mxu0 %v157
  %v432 = vpop.f32.mrf.mxu0
  %v433 = vadd.f32 %v110, %v432
  %v434 = vpop.f32.mrf.mxu0
  %v435 = vadd.f32 %v110, %v434
  %436 = vmatmul.bf16.gmra.mxu0 %v160
  %v437 = vpop.f32.mrf.mxu0
  %v438 = vadd.f32 %v110, %v437
  %v439 = vpop.f32.mrf.mxu0
  %v440 = vadd.f32 %v110, %v439
  %441 = vmatmul.bf16.gmra.mxu0 %v163
  %v442 = vpop.f32.mrf.mxu0
  %v443 = vadd.f32 %v110, %v442
  %v444 = vpop.f32.mrf.mxu0
  %v445 = vadd.f32 %v110, %v444
  %446 = vdwg.mxu0
  %447 = vmatpush.bf16.msra.mxu0 %v352
  %448 = vmatpush.bf16.msra.mxu0 %v350
  %449 = vmatpush.bf16.msra.mxu0 %v348
  %450 = vmatpush.bf16.msra.mxu0 %v346
  %451 = vmatpush.bf16.msra.mxu0 %v344
  %452 = vmatpush.bf16.msra.mxu0 %v342
  %453 = vmatpush.bf16.msra.mxu0 %v340
  %454 = vmatpush.bf16.msra.mxu0 %v338
  %455 = vmatmul.bf16.gmra.mxu0 %v155
  %v456 = vpop.f32.mrf.mxu0
  %v457 = vadd.f32 %v428, %v456
  %v458 = vpop.f32.mrf.mxu0
  %v459 = vadd.f32 %v430, %v458
  %460 = vmatmul.bf16.gmra.mxu0 %v158
  %v461 = vpop.f32.mrf.mxu0
  %v462 = vadd.f32 %v433, %v461
  %v463 = vpop.f32.mrf.mxu0
  %v464 = vadd.f32 %v435, %v463
  %465 = vmatmul.bf16.gmra.mxu0 %v161
  %v466 = vpop.f32.mrf.mxu0
  %v467 = vadd.f32 %v438, %v466
  %v468 = vpop.f32.mrf.mxu0
  %v469 = vadd.f32 %v440, %v468
  %470 = vmatmul.bf16.gmra.mxu0 %v164
  %v471 = vpop.f32.mrf.mxu0
  %v472 = vadd.f32 %v443, %v471
  %v473 = vpop.f32.mrf.mxu0
  %v474 = vadd.f32 %v445, %v473
  %475 = vdwg.mxu0
  %476 = vmatpush.bf16.msra.mxu0 %v368
  %477 = vmatpush.bf16.msra.mxu0 %v366
  %478 = vmatpush.bf16.msra.mxu0 %v364
  %479 = vmatpush.bf16.msra.mxu0 %v362
  %480 = vmatpush.bf16.msra.mxu0 %v360
  %481 = vmatpush.bf16.msra.mxu0 %v358
  %482 = vmatpush.bf16.msra.mxu0 %v356
  %483 = vmatpush.bf16.msra.mxu0 %v354
  %484 = vmatmul.bf16.gmra.mxu0 %v156
  %v485 = vpop.f32.mrf.mxu0
  %v486 = vadd.f32 %v457, %v485
  %v487 = vpop.f32.mrf.mxu0
  %v488 = vadd.f32 %v459, %v487
  %489 = vmatmul.bf16.gmra.mxu0 %v159
  %v490 = vpop.f32.mrf.mxu0
  %v491 = vadd.f32 %v462, %v490
  %v492 = vpop.f32.mrf.mxu0
  %v493 = vadd.f32 %v464, %v492
  %494 = vmatmul.bf16.gmra.mxu0 %v162
  %v495 = vpop.f32.mrf.mxu0
  %v496 = vadd.f32 %v467, %v495
  %v497 = vpop.f32.mrf.mxu0
  %v498 = vadd.f32 %v469, %v497
  %499 = vmatmul.bf16.gmra.mxu0 %v165
  %v500 = vpop.f32.mrf.mxu0
  %v501 = vadd.f32 %v472, %v500
  %v502 = vpop.f32.mrf.mxu0
  %v503 = vadd.f32 %v474, %v502
  %504 = vdwg.mxu0
  %505 = vmatpush.bf16.msra.mxu0 %v337
  %506 = vmatpush.bf16.msra.mxu0 %v335
  %507 = vmatpush.bf16.msra.mxu0 %v333
  %508 = vmatpush.bf16.msra.mxu0 %v331
  %509 = vmatpush.bf16.msra.mxu0 %v329
  %510 = vmatpush.bf16.msra.mxu0 %v327
  %511 = vmatpush.bf16.msra.mxu0 %v325
  %512 = vmatpush.bf16.msra.mxu0 %v323
  %513 = vmatmul.bf16.gmra.mxu0 %v154
  %v514 = vpop.f32.mrf.mxu0
  %v515 = vadd.f32 %v111, %v514
  %v516 = vpop.f32.mrf.mxu0
  %v517 = vadd.f32 %v111, %v516
  %518 = vmatmul.bf16.gmra.mxu0 %v157
  %v519 = vpop.f32.mrf.mxu0
  %v520 = vadd.f32 %v111, %v519
  %v521 = vpop.f32.mrf.mxu0
  %v522 = vadd.f32 %v111, %v521
  %523 = vmatmul.bf16.gmra.mxu0 %v160
  %v524 = vpop.f32.mrf.mxu0
  %v525 = vadd.f32 %v111, %v524
  %v526 = vpop.f32.mrf.mxu0
  %v527 = vadd.f32 %v111, %v526
  %528 = vmatmul.bf16.gmra.mxu0 %v163
  %v529 = vpop.f32.mrf.mxu0
  %v530 = vadd.f32 %v111, %v529
  %v531 = vpop.f32.mrf.mxu0
  %v532 = vadd.f32 %v111, %v531
  %533 = vdwg.mxu0
  %534 = vmatpush.bf16.msra.mxu0 %v353
  %535 = vmatpush.bf16.msra.mxu0 %v351
  %536 = vmatpush.bf16.msra.mxu0 %v349
  %537 = vmatpush.bf16.msra.mxu0 %v347
  %538 = vmatpush.bf16.msra.mxu0 %v345
  %539 = vmatpush.bf16.msra.mxu0 %v343
  %540 = vmatpush.bf16.msra.mxu0 %v341
  %541 = vmatpush.bf16.msra.mxu0 %v339
  %542 = vmatmul.bf16.gmra.mxu0 %v155
  %v543 = vpop.f32.mrf.mxu0
  %v544 = vadd.f32 %v515, %v543
  %v545 = vpop.f32.mrf.mxu0
  %v546 = vadd.f32 %v517, %v545
  %547 = vmatmul.bf16.gmra.mxu0 %v158
  %v548 = vpop.f32.mrf.mxu0
  %v549 = vadd.f32 %v520, %v548
  %v550 = vpop.f32.mrf.mxu0
  %v551 = vadd.f32 %v522, %v550
  %552 = vmatmul.bf16.gmra.mxu0 %v161
  %v553 = vpop.f32.mrf.mxu0
  %v554 = vadd.f32 %v525, %v553
  %v555 = vpop.f32.mrf.mxu0
  %v556 = vadd.f32 %v527, %v555
  %557 = vmatmul.bf16.gmra.mxu0 %v164
  %v558 = vpop.f32.mrf.mxu0
  %v559 = vadd.f32 %v530, %v558
  %v560 = vpop.f32.mrf.mxu0
  %v561 = vadd.f32 %v532, %v560
  %562 = vdwg.mxu0
  %563 = vmatpush.bf16.msra.mxu0 %v369
  %564 = vmatpush.bf16.msra.mxu0 %v367
  %565 = vmatpush.bf16.msra.mxu0 %v365
  %566 = vmatpush.bf16.msra.mxu0 %v363
  %567 = vmatpush.bf16.msra.mxu0 %v361
  %568 = vmatpush.bf16.msra.mxu0 %v359
  %569 = vmatpush.bf16.msra.mxu0 %v357
  %570 = vmatpush.bf16.msra.mxu0 %v355
  %571 = vmatmul.bf16.gmra.mxu0 %v156
  %v572 = vpop.f32.mrf.mxu0
  %v573 = vadd.f32 %v544, %v572
  %v574 = vpop.f32.mrf.mxu0
  %v575 = vadd.f32 %v546, %v574
  %576 = vmatmul.bf16.gmra.mxu0 %v159
  %v577 = vpop.f32.mrf.mxu0
  %v578 = vadd.f32 %v549, %v577
  %v579 = vpop.f32.mrf.mxu0
  %v580 = vadd.f32 %v551, %v579
  %581 = vmatmul.bf16.gmra.mxu0 %v162
  %v582 = vpop.f32.mrf.mxu0
  %v583 = vadd.f32 %v554, %v582
  %v584 = vpop.f32.mrf.mxu0
  %v585 = vadd.f32 %v556, %v584
  %586 = vmatmul.bf16.gmra.mxu0 %v165
  %v587 = vpop.f32.mrf.mxu0
  %v588 = vadd.f32 %v559, %v587
  %v589 = vpop.f32.mrf.mxu0
  %v590 = vadd.f32 %v561, %v589
  %591 = vdwg.mxu0
  %592 = vst [vmem:[#allocation2] sm:$0xff] %v486
  %593 = vst [vmem:[#allocation2 + $0x8] sm:$0xff] %v573
  %594 = vst [vmem:[#allocation2 + $0x10] sm:$0xff] %v488
  %595 = vst [vmem:[#allocation2 + $0x18] sm:$0xff] %v575
  %596 = vst [vmem:[#allocation2 + $0x20] sm:$0xff] %v491
  %597 = vst [vmem:[#allocation2 + $0x28] sm:$0xff] %v578
  %598 = vst [vmem:[#allocation2 + $0x30] sm:$0xff] %v493
  %599 = vst [vmem:[#allocation2 + $0x38] sm:$0xff] %v580
  %600 = vst [vmem:[#allocation2 + $0x40] sm:$0xff] %v496
  %601 = vst [vmem:[#allocation2 + $0x48] sm:$0xff] %v583
  %602 = vst [vmem:[#allocation2 + $0x50] sm:$0xff] %v498
  %603 = vst [vmem:[#allocation2 + $0x58] sm:$0xff] %v585
  %604 = vst [vmem:[#allocation2 + $0x60] sm:$0xff] %v501
  %605 = vst [vmem:[#allocation2 + $0x68] sm:$0xff] %v588
  %606 = vst [vmem:[#allocation2 + $0x70] sm:$0xff] %v503
  %607 = vst [vmem:[#allocation2 + $0x78] sm:$0xff] %v590
  %v608 = vld [vmem:[%s2] sm:$0xff]
  %v609 = vld [vmem:[%s2 + $0x8] sm:$0xff]
  %v610 = vld [vmem:[%s2 + $0x10] sm:$0xff]
  %v611 = vld [vmem:[%s2 + $0x18] sm:$0xff]
  %v612 = vld [vmem:[#allocation2] sm:$0xff]
  %s613 = scalar_lea.vmem [#allocation2], 112
  %v614 = vld [vmem:[%s613 + $0x8] sm:$0xff]
  %v615 = vxor.u32 %v612, 2147483648
  %v616 = vxor.u32 %v614, 2147483648
  %v617 = vmul.f32 %v615, 1.442695
  %v618 = vpow.pop %v617
  %v619 = vmul.f32 %v616, 1.442695
  %v620 = vpow.pop %v619
  %v621 = vadd.f32 %v618, 1.0
  %v622 = vadd.f32 %v620, 1.0
  %v623 = vrcp.pop %v621
  %v624 = vmul.f32 %v621, %v623
  %v625 = vsub.f32 1.0, %v624
  %v626 = vmul.f32 %v623, %v625
  %v627 = vadd.f32 %v623, %v626
  %vm628 = vweird.f32 %v621
  %vm629 = vweird.f32 %v623
  %vm630 = vmor %vm628, %vm629
  %v631 = vsel %vm630, %v623, %v627
  %v632 = vand.u32 2147483647, %v621
  %vm633 = vcmp.eq.f32.partialorder %v632, 8.507059e+37
  %v634 = vand.u32 %v621, 2147483648
  %v635 = vor.u32 1.1754944e-38, %v634
  %v636 = vsel %vm633, %v635, %v631
  %v637 = vmul.f32 1.0, %v636
  %v638 = vrcp.pop %v622
  %v639 = vmul.f32 %v622, %v638
  %v640 = vsub.f32 1.0, %v639
  %v641 = vmul.f32 %v638, %v640
  %v642 = vadd.f32 %v638, %v641
  %vm643 = vweird.f32 %v622
  %vm644 = vweird.f32 %v638
  %vm645 = vmor %vm643, %vm644
  %v646 = vsel %vm645, %v638, %v642
  %v647 = vand.u32 2147483647, %v622
  %vm648 = vcmp.eq.f32.partialorder %v647, 8.507059e+37
  %v649 = vand.u32 %v622, 2147483648
  %v650 = vor.u32 1.1754944e-38, %v649
  %v651 = vsel %vm648, %v650, %v646
  %v652 = vmul.f32 1.0, %v651
  %v653 = vtanh.pop %v612
  %v654 = vtanh.pop %v614
  %v655 = vmul.f32 %v637, 0.0
  %v656 = vmul.f32 %v652, 0.0
  %659 = vrot.lane.b32.xlu0 %v653, 32
  %v660 = vpop.permute.xlu0 %659
  %661 = vrot.lane.b32.xlu0 %v654, 32
  %v662 = vpop.permute.xlu0 %661
  %v665 = vmul.f32 %v637, %v660
  %v666 = vmul.f32 %v652, %v662
  %669 = vrot.lane.b32.xlu0 %v665, 32
  %v670 = vpop.permute.xlu0 %669
  %671 = vrot.lane.b32.xlu0 %v666, 32
  %v672 = vpop.permute.xlu0 %671
  %v675 = vadd.f32 %v655, %v670
  %v676 = vadd.f32 %v656, %v672
  %v677 = vtanh.pop %v675
  %v678 = vtanh.pop %v676
  %681 = vrot.lane.b32.xlu0 %v677, 32
  %v682 = vpop.permute.xlu0 %681
  %683 = vrot.lane.b32.xlu0 %v678, 32
  %v684 = vpop.permute.xlu0 %683
  %v687 = vmul.f32 %v637, %v682
  %v688 = vmul.f32 %v652, %v684
  %690 = vrot.lane.b32.xlu0 %v687, 64
  %v691 = vpop.permute.xlu0 %690
  %vm693 = vcmask 261120
  %694 = vst.msk [vmem:[#allocation3] sm:$0xff] %vm693, %v691
  %696 = vrot.lane.b32.xlu0 %v688, 64
  %v697 = vpop.permute.xlu0 %696
  %s699 = scalar_lea.vmem [#allocation4], 56
  %700 = vst.msk [vmem:[%s699] sm:$0xff] %vm693, %v697
  %s701 = scalar_lea.vmem [#allocation2], 16
  %v702 = vld [vmem:[%s701] sm:$0xff]
  %s703 = scalar_lea.vmem [#allocation2], 96
  %v704 = vld [vmem:[%s703 + $0x8] sm:$0xff]
  %v705 = vpack.c.bf16 %v688, %v687
  %707 = vrot.lane.b32.xlu0 %v705, 64
  %v708 = vpop.permute.xlu0 %707
  %v713 = vunpack.c.l.b16 %v608
  %v714 = vunpack.c.h.b16 %v608
  %v715 = vunpack.c.l.b16 %v609
  %v716 = vunpack.c.h.b16 %v609
  %v717 = vunpack.c.l.b16 %v610
  %v718 = vunpack.c.h.b16 %v610
  %v719 = vunpack.c.l.b16 %v611
  %v720 = vunpack.c.h.b16 %v611
  %v721 = vpack.c.b16 %v715, %v713
  %v722 = vpack.c.b16 %v716, %v714
  %v723 = vpack.c.b16 %v719, %v717
  %v724 = vpack.c.b16 %v720, %v718
  %v730 = vsel %vm693, %v708, 0
  %732 = vmatpush.bf16.msra.mxu0 0
  %733 = vmatpush.bf16.msra.mxu0 0
  %734 = vmatpush.bf16.msra.mxu0 0
  %735 = vmatpush.bf16.msra.mxu0 0
  %736 = vmatpush.bf16.msra.mxu0 0
  %737 = vmatpush.bf16.msra.mxu0 0
  %738 = vmatpush.bf16.msra.mxu0 %v723
  %739 = vmatpush.bf16.msra.mxu0 %v721
  %740 = vmatmul.bf16.gmra.mxu0 %v730
  %v741 = vpop.f32.mrf.mxu0
  %v742 = vadd.f32 0.0, %v741
  %v743 = vpop.f32.mrf.mxu0
  %744 = vdwg.mxu0
  %745 = vmatpush.bf16.msra.mxu0 0
  %746 = vmatpush.bf16.msra.mxu0 0
  %747 = vmatpush.bf16.msra.mxu0 0
  %748 = vmatpush.bf16.msra.mxu0 0
  %749 = vmatpush.bf16.msra.mxu0 0
  %750 = vmatpush.bf16.msra.mxu0 0
  %751 = vmatpush.bf16.msra.mxu0 %v724
  %752 = vmatpush.bf16.msra.mxu0 %v722
  %753 = vmatmul.bf16.gmra.mxu0 %v730
  %v754 = vpop.f32.mrf.mxu0
  %v755 = vpop.f32.mrf.mxu0
  %v756 = vadd.f32 0.0, %v755
  %757 = vdwg.mxu0
  %v758 = vadd.f32 %v702, %v742
  %v759 = vadd.f32 %v704, %v756
  %v760 = vxor.u32 %v758, 2147483648
  %v761 = vxor.u32 %v759, 2147483648
  %v762 = vmul.f32 %v760, 1.442695
  %v763 = vpow.pop %v762
  %v764 = vmul.f32 %v761, 1.442695
  %v765 = vpow.pop %v764
  %v766 = vadd.f32 %v763, 1.0
  %v767 = vadd.f32 %v765, 1.0
  %v768 = vrcp.pop %v766
  %v769 = vmul.f32 %v766, %v768
  %v770 = vsub.f32 1.0, %v769
  %v771 = vmul.f32 %v768, %v770
  %v772 = vadd.f32 %v768, %v771
  %vm773 = vweird.f32 %v766
  %vm774 = vweird.f32 %v768
  %vm775 = vmor %vm773, %vm774
  %v776 = vsel %vm775, %v768, %v772
  %v777 = vand.u32 2147483647, %v766
  %vm778 = vcmp.eq.f32.partialorder %v777, 8.507059e+37
  %v779 = vand.u32 %v766, 2147483648
  %v780 = vor.u32 1.1754944e-38, %v779
  %v781 = vsel %vm778, %v780, %v776
  %v782 = vmul.f32 1.0, %v781
  %v783 = vrcp.pop %v767
  %v784 = vmul.f32 %v767, %v783
  %v785 = vsub.f32 1.0, %v784
  %v786 = vmul.f32 %v783, %v785
  %v787 = vadd.f32 %v783, %v786
  %vm788 = vweird.f32 %v767
  %vm789 = vweird.f32 %v783
  %vm790 = vmor %vm788, %vm789
  %v791 = vsel %vm790, %v783, %v787
  %v792 = vand.u32 2147483647, %v767
  %vm793 = vcmp.eq.f32.partialorder %v792, 8.507059e+37
  %v794 = vand.u32 %v767, 2147483648
  %v795 = vor.u32 1.1754944e-38, %v794
  %v796 = vsel %vm793, %v795, %v791
  %v797 = vmul.f32 1.0, %v796
  %v798 = vtanh.pop %v758
  %v799 = vtanh.pop %v759
  %v800 = vmul.f32 %v782, %v675
  %v801 = vmul.f32 %v797, %v676
  %804 = vrot.lane.b32.xlu0 %v798, 32
  %v805 = vpop.permute.xlu0 %804
  %806 = vrot.lane.b32.xlu0 %v799, 32
  %v807 = vpop.permute.xlu0 %806
  %v810 = vmul.f32 %v782, %v805
  %v811 = vmul.f32 %v797, %v807
  %814 = vrot.lane.b32.xlu0 %v810, 32
  %v815 = vpop.permute.xlu0 %814
  %816 = vrot.lane.b32.xlu0 %v811, 32
  %v817 = vpop.permute.xlu0 %816
  %v820 = vadd.f32 %v800, %v815
  %v821 = vadd.f32 %v801, %v817
  %v822 = vtanh.pop %v820
  %v823 = vtanh.pop %v821
  %826 = vrot.lane.b32.xlu0 %v822, 32
  %v827 = vpop.permute.xlu0 %826
  %828 = vrot.lane.b32.xlu0 %v823, 32
  %v829 = vpop.permute.xlu0 %828
  %v832 = vmul.f32 %v782, %v827
  %v833 = vmul.f32 %v797, %v829
  %835 = vrot.lane.b32.xlu0 %v832, 64
  %v836 = vpop.permute.xlu0 %835
  %s838 = scalar_lea.vmem [#allocation3], 8
  %839 = vst.msk [vmem:[%s838] sm:$0xff] %vm693, %v836
  %841 = vrot.lane.b32.xlu0 %v833, 64
  %v842 = vpop.permute.xlu0 %841
  %s844 = scalar_lea.vmem [#allocation4], 48
  %845 = vst.msk [vmem:[%s844] sm:$0xff] %vm693, %v842
  %s846 = scalar_lea.vmem [#allocation2], 32
  %v847 = vld [vmem:[%s846] sm:$0xff]
  %s848 = scalar_lea.vmem [#allocation2], 80
  %v849 = vld [vmem:[%s848 + $0x8] sm:$0xff]
  %v850 = vpack.c.bf16 %v833, %v832
  %852 = vrot.lane.b32.xlu0 %v850, 64
  %v853 = vpop.permute.xlu0 %852
  %v855 = vsel %vm693, %v853, 0
  %857 = vmatpush.bf16.msra.mxu0 0
  %858 = vmatpush.bf16.msra.mxu0 0
  %859 = vmatpush.bf16.msra.mxu0 0
  %860 = vmatpush.bf16.msra.mxu0 0
  %861 = vmatpush.bf16.msra.mxu0 0
  %862 = vmatpush.bf16.msra.mxu0 0
  %863 = vmatpush.bf16.msra.mxu0 %v723
  %864 = vmatpush.bf16.msra.mxu0 %v721
  %865 = vmatmul.bf16.gmra.mxu0 %v855
  %v866 = vpop.f32.mrf.mxu0
  %v867 = vadd.f32 0.0, %v866
  %v868 = vpop.f32.mrf.mxu0
  %869 = vdwg.mxu0
  %870 = vmatpush.bf16.msra.mxu0 0
  %871 = vmatpush.bf16.msra.mxu0 0
  %872 = vmatpush.bf16.msra.mxu0 0
  %873 = vmatpush.bf16.msra.mxu0 0
  %874 = vmatpush.bf16.msra.mxu0 0
  %875 = vmatpush.bf16.msra.mxu0 0
  %876 = vmatpush.bf16.msra.mxu0 %v724
  %877 = vmatpush.bf16.msra.mxu0 %v722
  %878 = vmatmul.bf16.gmra.mxu0 %v855
  %v879 = vpop.f32.mrf.mxu0
  %v880 = vpop.f32.mrf.mxu0
  %v881 = vadd.f32 0.0, %v880
  %882 = vdwg.mxu0
  %v883 = vadd.f32 %v847, %v867
  %v884 = vadd.f32 %v849, %v881
  %v885 = vxor.u32 %v883, 2147483648
  %v886 = vxor.u32 %v884, 2147483648
  %v887 = vmul.f32 %v885, 1.442695
  %v888 = vpow.pop %v887
  %v889 = vmul.f32 %v886, 1.442695
  %v890 = vpow.pop %v889
  %v891 = vadd.f32 %v888, 1.0
  %v892 = vadd.f32 %v890, 1.0
  %v893 = vrcp.pop %v891
  %v894 = vmul.f32 %v891, %v893
  %v895 = vsub.f32 1.0, %v894
  %v896 = vmul.f32 %v893, %v895
  %v897 = vadd.f32 %v893, %v896
  %vm898 = vweird.f32 %v891
  %vm899 = vweird.f32 %v893
  %vm900 = vmor %vm898, %vm899
  %v901 = vsel %vm900, %v893, %v897
  %v902 = vand.u32 2147483647, %v891
  %vm903 = vcmp.eq.f32.partialorder %v902, 8.507059e+37
  %v904 = vand.u32 %v891, 2147483648
  %v905 = vor.u32 1.1754944e-38, %v904
  %v906 = vsel %vm903, %v905, %v901
  %v907 = vmul.f32 1.0, %v906
  %v908 = vrcp.pop %v892
  %v909 = vmul.f32 %v892, %v908
  %v910 = vsub.f32 1.0, %v909
  %v911 = vmul.f32 %v908, %v910
  %v912 = vadd.f32 %v908, %v911
  %vm913 = vweird.f32 %v892
  %vm914 = vweird.f32 %v908
  %vm915 = vmor %vm913, %vm914
  %v916 = vsel %vm915, %v908, %v912
  %v917 = vand.u32 2147483647, %v892
  %vm918 = vcmp.eq.f32.partialorder %v917, 8.507059e+37
  %v919 = vand.u32 %v892, 2147483648
  %v920 = vor.u32 1.1754944e-38, %v919
  %v921 = vsel %vm918, %v920, %v916
  %v922 = vmul.f32 1.0, %v921
  %v923 = vtanh.pop %v883
  %v924 = vtanh.pop %v884
  %v925 = vmul.f32 %v907, %v820
  %v926 = vmul.f32 %v922, %v821
  %929 = vrot.lane.b32.xlu0 %v923, 32
  %v930 = vpop.permute.xlu0 %929
  %931 = vrot.lane.b32.xlu0 %v924, 32
  %v932 = vpop.permute.xlu0 %931
  %v935 = vmul.f32 %v907, %v930
  %v936 = vmul.f32 %v922, %v932
  %939 = vrot.lane.b32.xlu0 %v935, 32
  %v940 = vpop.permute.xlu0 %939
  %941 = vrot.lane.b32.xlu0 %v936, 32
  %v942 = vpop.permute.xlu0 %941
  %v945 = vadd.f32 %v925, %v940
  %v946 = vadd.f32 %v926, %v942
  %v947 = vtanh.pop %v945
  %v948 = vtanh.pop %v946
  %951 = vrot.lane.b32.xlu0 %v947, 32
  %v952 = vpop.permute.xlu0 %951
  %953 = vrot.lane.b32.xlu0 %v948, 32
  %v954 = vpop.permute.xlu0 %953
  %v957 = vmul.f32 %v907, %v952
  %v958 = vmul.f32 %v922, %v954
  %960 = vrot.lane.b32.xlu0 %v957, 64
  %v961 = vpop.permute.xlu0 %960
  %s963 = scalar_lea.vmem [#allocation3], 16
  %964 = vst.msk [vmem:[%s963] sm:$0xff] %vm693, %v961
  %966 = vrot.lane.b32.xlu0 %v958, 64
  %v967 = vpop.permute.xlu0 %966
  %s969 = scalar_lea.vmem [#allocation4], 40
  %970 = vst.msk [vmem:[%s969] sm:$0xff] %vm693, %v967
  %s971 = scalar_lea.vmem [#allocation2], 48
  %v972 = vld [vmem:[%s971] sm:$0xff]
  %s973 = scalar_lea.vmem [#allocation2], 64
  %v974 = vld [vmem:[%s973 + $0x8] sm:$0xff]
  %v975 = vpack.c.bf16 %v958, %v957
  %977 = vrot.lane.b32.xlu0 %v975, 64
  %v978 = vpop.permute.xlu0 %977
  %v980 = vsel %vm693, %v978, 0
  %982 = vmatpush.bf16.msra.mxu0 0
  %983 = vmatpush.bf16.msra.mxu0 0
  %984 = vmatpush.bf16.msra.mxu0 0
  %985 = vmatpush.bf16.msra.mxu0 0
  %986 = vmatpush.bf16.msra.mxu0 0
  %987 = vmatpush.bf16.msra.mxu0 0
  %988 = vmatpush.bf16.msra.mxu0 %v723
  %989 = vmatpush.bf16.msra.mxu0 %v721
  %990 = vmatmul.bf16.gmra.mxu0 %v980
  %v991 = vpop.f32.mrf.mxu0
  %v992 = vadd.f32 0.0, %v991
  %v993 = vpop.f32.mrf.mxu0
  %994 = vdwg.mxu0
  %995 = vmatpush.bf16.msra.mxu0 0
  %996 = vmatpush.bf16.msra.mxu0 0
  %997 = vmatpush.bf16.msra.mxu0 0
  %998 = vmatpush.bf16.msra.mxu0 0
  %999 = vmatpush.bf16.msra.mxu0 0
  %1000 = vmatpush.bf16.msra.mxu0 0
  %1001 = vmatpush.bf16.msra.mxu0 %v724
  %1002 = vmatpush.bf16.msra.mxu0 %v722
  %1003 = vmatmul.bf16.gmra.mxu0 %v980
  %v1004 = vpop.f32.mrf.mxu0
  %v1005 = vpop.f32.mrf.mxu0
  %v1006 = vadd.f32 0.0, %v1005
  %1007 = vdwg.mxu0
  %v1008 = vadd.f32 %v972, %v992
  %v1009 = vadd.f32 %v974, %v1006
  %v1010 = vxor.u32 %v1008, 2147483648
  %v1011 = vxor.u32 %v1009, 2147483648
  %v1012 = vmul.f32 %v1010, 1.442695
  %v1013 = vpow.pop %v1012
  %v1014 = vmul.f32 %v1011, 1.442695
  %v1015 = vpow.pop %v1014
  %v1016 = vadd.f32 %v1013, 1.0
  %v1017 = vadd.f32 %v1015, 1.0
  %v1018 = vrcp.pop %v1016
  %v1019 = vmul.f32 %v1016, %v1018
  %v1020 = vsub.f32 1.0, %v1019
  %v1021 = vmul.f32 %v1018, %v1020
  %v1022 = vadd.f32 %v1018, %v1021
  %vm1023 = vweird.f32 %v1016
  %vm1024 = vweird.f32 %v1018
  %vm1025 = vmor %vm1023, %vm1024
  %v1026 = vsel %vm1025, %v1018, %v1022
  %v1027 = vand.u32 2147483647, %v1016
  %vm1028 = vcmp.eq.f32.partialorder %v1027, 8.507059e+37
  %v1029 = vand.u32 %v1016, 2147483648
  %v1030 = vor.u32 1.1754944e-38, %v1029
  %v1031 = vsel %vm1028, %v1030, %v1026
  %v1032 = vmul.f32 1.0, %v1031
  %v1033 = vrcp.pop %v1017
  %v1034 = vmul.f32 %v1017, %v1033
  %v1035 = vsub.f32 1.0, %v1034
  %v1036 = vmul.f32 %v1033, %v1035
  %v1037 = vadd.f32 %v1033, %v1036
  %vm1038 = vweird.f32 %v1017
  %vm1039 = vweird.f32 %v1033
  %vm1040 = vmor %vm1038, %vm1039
  %v1041 = vsel %vm1040, %v1033, %v1037
  %v1042 = vand.u32 2147483647, %v1017
  %vm1043 = vcmp.eq.f32.partialorder %v1042, 8.507059e+37
  %v1044 = vand.u32 %v1017, 2147483648
  %v1045 = vor.u32 1.1754944e-38, %v1044
  %v1046 = vsel %vm1043, %v1045, %v1041
  %v1047 = vmul.f32 1.0, %v1046
  %v1048 = vtanh.pop %v1008
  %v1049 = vtanh.pop %v1009
  %v1050 = vmul.f32 %v1032, %v945
  %v1051 = vmul.f32 %v1047, %v946
  %1054 = vrot.lane.b32.xlu0 %v1048, 32
  %v1055 = vpop.permute.xlu0 %1054
  %1056 = vrot.lane.b32.xlu0 %v1049, 32
  %v1057 = vpop.permute.xlu0 %1056
  %v1060 = vmul.f32 %v1032, %v1055
  %v1061 = vmul.f32 %v1047, %v1057
  %1064 = vrot.lane.b32.xlu0 %v1060, 32
  %v1065 = vpop.permute.xlu0 %1064
  %1066 = vrot.lane.b32.xlu0 %v1061, 32
  %v1067 = vpop.permute.xlu0 %1066
  %v1070 = vadd.f32 %v1050, %v1065
  %v1071 = vadd.f32 %v1051, %v1067
  %v1072 = vtanh.pop %v1070
  %v1073 = vtanh.pop %v1071
  %1076 = vrot.lane.b32.xlu0 %v1072, 32
  %v1077 = vpop.permute.xlu0 %1076
  %1078 = vrot.lane.b32.xlu0 %v1073, 32
  %v1079 = vpop.permute.xlu0 %1078
  %v1082 = vmul.f32 %v1032, %v1077
  %v1083 = vmul.f32 %v1047, %v1079
  %1085 = vrot.lane.b32.xlu0 %v1082, 64
  %v1086 = vpop.permute.xlu0 %1085
  %s1088 = scalar_lea.vmem [#allocation3], 24
  %1089 = vst.msk [vmem:[%s1088] sm:$0xff] %vm693, %v1086
  %1091 = vrot.lane.b32.xlu0 %v1083, 64
  %v1092 = vpop.permute.xlu0 %1091
  %s1094 = scalar_lea.vmem [#allocation4], 32
  %1095 = vst.msk [vmem:[%s1094] sm:$0xff] %vm693, %v1092
  %v1096 = vld [vmem:[%s973] sm:$0xff]
  %v1097 = vld [vmem:[%s971 + $0x8] sm:$0xff]
  %v1098 = vpack.c.bf16 %v1083, %v1082
  %1100 = vrot.lane.b32.xlu0 %v1098, 64
  %v1101 = vpop.permute.xlu0 %1100
  %v1103 = vsel %vm693, %v1101, 0
  %1105 = vmatpush.bf16.msra.mxu0 0
  %1106 = vmatpush.bf16.msra.mxu0 0
  %1107 = vmatpush.bf16.msra.mxu0 0
  %1108 = vmatpush.bf16.msra.mxu0 0
  %1109 = vmatpush.bf16.msra.mxu0 0
  %1110 = vmatpush.bf16.msra.mxu0 0
  %1111 = vmatpush.bf16.msra.mxu0 %v723
  %1112 = vmatpush.bf16.msra.mxu0 %v721
  %1113 = vmatmul.bf16.gmra.mxu0 %v1103
  %v1114 = vpop.f32.mrf.mxu0
  %v1115 = vadd.f32 0.0, %v1114
  %v1116 = vpop.f32.mrf.mxu0
  %1117 = vdwg.mxu0
  %1118 = vmatpush.bf16.msra.mxu0 0
  %1119 = vmatpush.bf16.msra.mxu0 0
  %1120 = vmatpush.bf16.msra.mxu0 0
  %1121 = vmatpush.bf16.msra.mxu0 0
  %1122 = vmatpush.bf16.msra.mxu0 0
  %1123 = vmatpush.bf16.msra.mxu0 0
  %1124 = vmatpush.bf16.msra.mxu0 %v724
  %1125 = vmatpush.bf16.msra.mxu0 %v722
  %1126 = vmatmul.bf16.gmra.mxu0 %v1103
  %v1127 = vpop.f32.mrf.mxu0
  %v1128 = vpop.f32.mrf.mxu0
  %v1129 = vadd.f32 0.0, %v1128
  %1130 = vdwg.mxu0
  %v1131 = vadd.f32 %v1096, %v1115
  %v1132 = vadd.f32 %v1097, %v1129
  %v1133 = vxor.u32 %v1131, 2147483648
  %v1134 = vxor.u32 %v1132, 2147483648
  %v1135 = vmul.f32 %v1133, 1.442695
  %v1136 = vpow.pop %v1135
  %v1137 = vmul.f32 %v1134, 1.442695
  %v1138 = vpow.pop %v1137
  %v1139 = vadd.f32 %v1136, 1.0
  %v1140 = vadd.f32 %v1138, 1.0
  %v1141 = vrcp.pop %v1139
  %v1142 = vmul.f32 %v1139, %v1141
  %v1143 = vsub.f32 1.0, %v1142
  %v1144 = vmul.f32 %v1141, %v1143
  %v1145 = vadd.f32 %v1141, %v1144
  %vm1146 = vweird.f32 %v1139
  %vm1147 = vweird.f32 %v1141
  %vm1148 = vmor %vm1146, %vm1147
  %v1149 = vsel %vm1148, %v1141, %v1145
  %v1150 = vand.u32 2147483647, %v1139
  %vm1151 = vcmp.eq.f32.partialorder %v1150, 8.507059e+37
  %v1152 = vand.u32 %v1139, 2147483648
  %v1153 = vor.u32 1.1754944e-38, %v1152
  %v1154 = vsel %vm1151, %v1153, %v1149
  %v1155 = vmul.f32 1.0, %v1154
  %v1156 = vrcp.pop %v1140
  %v1157 = vmul.f32 %v1140, %v1156
  %v1158 = vsub.f32 1.0, %v1157
  %v1159 = vmul.f32 %v1156, %v1158
  %v1160 = vadd.f32 %v1156, %v1159
  %vm1161 = vweird.f32 %v1140
  %vm1162 = vweird.f32 %v1156
  %vm1163 = vmor %vm1161, %vm1162
  %v1164 = vsel %vm1163, %v1156, %v1160
  %v1165 = vand.u32 2147483647, %v1140
  %vm1166 = vcmp.eq.f32.partialorder %v1165, 8.507059e+37
  %v1167 = vand.u32 %v1140, 2147483648
  %v1168 = vor.u32 1.1754944e-38, %v1167
  %v1169 = vsel %vm1166, %v1168, %v1164
  %v1170 = vmul.f32 1.0, %v1169
  %v1171 = vtanh.pop %v1131
  %v1172 = vtanh.pop %v1132
  %v1173 = vmul.f32 %v1155, %v1070
  %v1174 = vmul.f32 %v1170, %v1071
  %1177 = vrot.lane.b32.xlu0 %v1171, 32
  %v1178 = vpop.permute.xlu0 %1177
  %1179 = vrot.lane.b32.xlu0 %v1172, 32
  %v1180 = vpop.permute.xlu0 %1179
  %v1183 = vmul.f32 %v1155, %v1178
  %v1184 = vmul.f32 %v1170, %v1180
  %1187 = vrot.lane.b32.xlu0 %v1183, 32
  %v1188 = vpop.permute.xlu0 %1187
  %1189 = vrot.lane.b32.xlu0 %v1184, 32
  %v1190 = vpop.permute.xlu0 %1189
  %v1193 = vadd.f32 %v1173, %v1188
  %v1194 = vadd.f32 %v1174, %v1190
  %v1195 = vtanh.pop %v1193
  %v1196 = vtanh.pop %v1194
  %1199 = vrot.lane.b32.xlu0 %v1195, 32
  %v1200 = vpop.permute.xlu0 %1199
  %1201 = vrot.lane.b32.xlu0 %v1196, 32
  %v1202 = vpop.permute.xlu0 %1201
  %v1205 = vmul.f32 %v1155, %v1200
  %v1206 = vmul.f32 %v1170, %v1202
  %1208 = vrot.lane.b32.xlu0 %v1205, 64
  %v1209 = vpop.permute.xlu0 %1208
  %s1211 = scalar_lea.vmem [#allocation3], 32
  %1212 = vst.msk [vmem:[%s1211] sm:$0xff] %vm693, %v1209
  %1214 = vrot.lane.b32.xlu0 %v1206, 64
  %v1215 = vpop.permute.xlu0 %1214
  %s1217 = scalar_lea.vmem [#allocation4], 24
  %1218 = vst.msk [vmem:[%s1217] sm:$0xff] %vm693, %v1215
  %v1219 = vld [vmem:[%s848] sm:$0xff]
  %v1220 = vld [vmem:[%s846 + $0x8] sm:$0xff]
  %v1221 = vpack.c.bf16 %v1206, %v1205
  %1223 = vrot.lane.b32.xlu0 %v1221, 64
  %v1224 = vpop.permute.xlu0 %1223
  %v1226 = vsel %vm693, %v1224, 0
  %1228 = vmatpush.bf16.msra.mxu0 0
  %1229 = vmatpush.bf16.msra.mxu0 0
  %1230 = vmatpush.bf16.msra.mxu0 0
  %1231 = vmatpush.bf16.msra.mxu0 0
  %1232 = vmatpush.bf16.msra.mxu0 0
  %1233 = vmatpush.bf16.msra.mxu0 0
  %1234 = vmatpush.bf16.msra.mxu0 %v723
  %1235 = vmatpush.bf16.msra.mxu0 %v721
  %1236 = vmatmul.bf16.gmra.mxu0 %v1226
  %v1237 = vpop.f32.mrf.mxu0
  %v1238 = vadd.f32 0.0, %v1237
  %v1239 = vpop.f32.mrf.mxu0
  %1240 = vdwg.mxu0
  %1241 = vmatpush.bf16.msra.mxu0 0
  %1242 = vmatpush.bf16.msra.mxu0 0
  %1243 = vmatpush.bf16.msra.mxu0 0
  %1244 = vmatpush.bf16.msra.mxu0 0
  %1245 = vmatpush.bf16.msra.mxu0 0
  %1246 = vmatpush.bf16.msra.mxu0 0
  %1247 = vmatpush.bf16.msra.mxu0 %v724
  %1248 = vmatpush.bf16.msra.mxu0 %v722
  %1249 = vmatmul.bf16.gmra.mxu0 %v1226
  %v1250 = vpop.f32.mrf.mxu0
  %v1251 = vpop.f32.mrf.mxu0
  %v1252 = vadd.f32 0.0, %v1251
  %1253 = vdwg.mxu0
  %v1254 = vadd.f32 %v1219, %v1238
  %v1255 = vadd.f32 %v1220, %v1252
  %v1256 = vxor.u32 %v1254, 2147483648
  %v1257 = vxor.u32 %v1255, 2147483648
  %v1258 = vmul.f32 %v1256, 1.442695
  %v1259 = vpow.pop %v1258
  %v1260 = vmul.f32 %v1257, 1.442695
  %v1261 = vpow.pop %v1260
  %v1262 = vadd.f32 %v1259, 1.0
  %v1263 = vadd.f32 %v1261, 1.0
  %v1264 = vrcp.pop %v1262
  %v1265 = vmul.f32 %v1262, %v1264
  %v1266 = vsub.f32 1.0, %v1265
  %v1267 = vmul.f32 %v1264, %v1266
  %v1268 = vadd.f32 %v1264, %v1267
  %vm1269 = vweird.f32 %v1262
  %vm1270 = vweird.f32 %v1264
  %vm1271 = vmor %vm1269, %vm1270
  %v1272 = vsel %vm1271, %v1264, %v1268
  %v1273 = vand.u32 2147483647, %v1262
  %vm1274 = vcmp.eq.f32.partialorder %v1273, 8.507059e+37
  %v1275 = vand.u32 %v1262, 2147483648
  %v1276 = vor.u32 1.1754944e-38, %v1275
  %v1277 = vsel %vm1274, %v1276, %v1272
  %v1278 = vmul.f32 1.0, %v1277
  %v1279 = vrcp.pop %v1263
  %v1280 = vmul.f32 %v1263, %v1279
  %v1281 = vsub.f32 1.0, %v1280
  %v1282 = vmul.f32 %v1279, %v1281
  %v1283 = vadd.f32 %v1279, %v1282
  %vm1284 = vweird.f32 %v1263
  %vm1285 = vweird.f32 %v1279
  %vm1286 = vmor %vm1284, %vm1285
  %v1287 = vsel %vm1286, %v1279, %v1283
  %v1288 = vand.u32 2147483647, %v1263
  %vm1289 = vcmp.eq.f32.partialorder %v1288, 8.507059e+37
  %v1290 = vand.u32 %v1263, 2147483648
  %v1291 = vor.u32 1.1754944e-38, %v1290
  %v1292 = vsel %vm1289, %v1291, %v1287
  %v1293 = vmul.f32 1.0, %v1292
  %v1294 = vtanh.pop %v1254
  %v1295 = vtanh.pop %v1255
  %v1296 = vmul.f32 %v1278, %v1193
  %v1297 = vmul.f32 %v1293, %v1194
  %1300 = vrot.lane.b32.xlu0 %v1294, 32
  %v1301 = vpop.permute.xlu0 %1300
  %1302 = vrot.lane.b32.xlu0 %v1295, 32
  %v1303 = vpop.permute.xlu0 %1302
  %v1306 = vmul.f32 %v1278, %v1301
  %v1307 = vmul.f32 %v1293, %v1303
  %1310 = vrot.lane.b32.xlu0 %v1306, 32
  %v1311 = vpop.permute.xlu0 %1310
  %1312 = vrot.lane.b32.xlu0 %v1307, 32
  %v1313 = vpop.permute.xlu0 %1312
  %v1316 = vadd.f32 %v1296, %v1311
  %v1317 = vadd.f32 %v1297, %v1313
  %v1318 = vtanh.pop %v1316
  %v1319 = vtanh.pop %v1317
  %1322 = vrot.lane.b32.xlu0 %v1318, 32
  %v1323 = vpop.permute.xlu0 %1322
  %1324 = vrot.lane.b32.xlu0 %v1319, 32
  %v1325 = vpop.permute.xlu0 %1324
  %v1328 = vmul.f32 %v1278, %v1323
  %v1329 = vmul.f32 %v1293, %v1325
  %1331 = vrot.lane.b32.xlu0 %v1328, 64
  %v1332 = vpop.permute.xlu0 %1331
  %s1334 = scalar_lea.vmem [#allocation3], 40
  %1335 = vst.msk [vmem:[%s1334] sm:$0xff] %vm693, %v1332
  %1337 = vrot.lane.b32.xlu0 %v1329, 64
  %v1338 = vpop.permute.xlu0 %1337
  %s1340 = scalar_lea.vmem [#allocation4], 16
  %1341 = vst.msk [vmem:[%s1340] sm:$0xff] %vm693, %v1338
  %v1342 = vld [vmem:[%s703] sm:$0xff]
  %v1343 = vld [vmem:[%s701 + $0x8] sm:$0xff]
  %v1344 = vpack.c.bf16 %v1329, %v1328
  %1346 = vrot.lane.b32.xlu0 %v1344, 64
  %v1347 = vpop.permute.xlu0 %1346
  %v1349 = vsel %vm693, %v1347, 0
  %1351 = vmatpush.bf16.msra.mxu0 0
  %1352 = vmatpush.bf16.msra.mxu0 0
  %1353 = vmatpush.bf16.msra.mxu0 0
  %1354 = vmatpush.bf16.msra.mxu0 0
  %1355 = vmatpush.bf16.msra.mxu0 0
  %1356 = vmatpush.bf16.msra.mxu0 0
  %1357 = vmatpush.bf16.msra.mxu0 %v723
  %1358 = vmatpush.bf16.msra.mxu0 %v721
  %1359 = vmatmul.bf16.gmra.mxu0 %v1349
  %v1360 = vpop.f32.mrf.mxu0
  %v1361 = vadd.f32 0.0, %v1360
  %v1362 = vpop.f32.mrf.mxu0
  %1363 = vdwg.mxu0
  %1364 = vmatpush.bf16.msra.mxu0 0
  %1365 = vmatpush.bf16.msra.mxu0 0
  %1366 = vmatpush.bf16.msra.mxu0 0
  %1367 = vmatpush.bf16.msra.mxu0 0
  %1368 = vmatpush.bf16.msra.mxu0 0
  %1369 = vmatpush.bf16.msra.mxu0 0
  %1370 = vmatpush.bf16.msra.mxu0 %v724
  %1371 = vmatpush.bf16.msra.mxu0 %v722
  %1372 = vmatmul.bf16.gmra.mxu0 %v1349
  %v1373 = vpop.f32.mrf.mxu0
  %v1374 = vpop.f32.mrf.mxu0
  %v1375 = vadd.f32 0.0, %v1374
  %1376 = vdwg.mxu0
  %v1377 = vadd.f32 %v1342, %v1361
  %v1378 = vadd.f32 %v1343, %v1375
  %v1379 = vxor.u32 %v1377, 2147483648
  %v1380 = vxor.u32 %v1378, 2147483648
  %v1381 = vmul.f32 %v1379, 1.442695
  %v1382 = vpow.pop %v1381
  %v1383 = vmul.f32 %v1380, 1.442695
  %v1384 = vpow.pop %v1383
  %v1385 = vadd.f32 %v1382, 1.0
  %v1386 = vadd.f32 %v1384, 1.0
  %v1387 = vrcp.pop %v1385
  %v1388 = vmul.f32 %v1385, %v1387
  %v1389 = vsub.f32 1.0, %v1388
  %v1390 = vmul.f32 %v1387, %v1389
  %v1391 = vadd.f32 %v1387, %v1390
  %vm1392 = vweird.f32 %v1385
  %vm1393 = vweird.f32 %v1387
  %vm1394 = vmor %vm1392, %vm1393
  %v1395 = vsel %vm1394, %v1387, %v1391
  %v1396 = vand.u32 2147483647, %v1385
  %vm1397 = vcmp.eq.f32.partialorder %v1396, 8.507059e+37
  %v1398 = vand.u32 %v1385, 2147483648
  %v1399 = vor.u32 1.1754944e-38, %v1398
  %v1400 = vsel %vm1397, %v1399, %v1395
  %v1401 = vmul.f32 1.0, %v1400
  %v1402 = vrcp.pop %v1386
  %v1403 = vmul.f32 %v1386, %v1402
  %v1404 = vsub.f32 1.0, %v1403
  %v1405 = vmul.f32 %v1402, %v1404
  %v1406 = vadd.f32 %v1402, %v1405
  %vm1407 = vweird.f32 %v1386
  %vm1408 = vweird.f32 %v1402
  %vm1409 = vmor %vm1407, %vm1408
  %v1410 = vsel %vm1409, %v1402, %v1406
  %v1411 = vand.u32 2147483647, %v1386
  %vm1412 = vcmp.eq.f32.partialorder %v1411, 8.507059e+37
  %v1413 = vand.u32 %v1386, 2147483648
  %v1414 = vor.u32 1.1754944e-38, %v1413
  %v1415 = vsel %vm1412, %v1414, %v1410
  %v1416 = vmul.f32 1.0, %v1415
  %v1417 = vtanh.pop %v1377
  %v1418 = vtanh.pop %v1378
  %v1419 = vmul.f32 %v1401, %v1316
  %v1420 = vmul.f32 %v1416, %v1317
  %1423 = vrot.lane.b32.xlu0 %v1417, 32
  %v1424 = vpop.permute.xlu0 %1423
  %1425 = vrot.lane.b32.xlu0 %v1418, 32
  %v1426 = vpop.permute.xlu0 %1425
  %v1429 = vmul.f32 %v1401, %v1424
  %v1430 = vmul.f32 %v1416, %v1426
  %1433 = vrot.lane.b32.xlu0 %v1429, 32
  %v1434 = vpop.permute.xlu0 %1433
  %1435 = vrot.lane.b32.xlu0 %v1430, 32
  %v1436 = vpop.permute.xlu0 %1435
  %v1439 = vadd.f32 %v1419, %v1434
  %v1440 = vadd.f32 %v1420, %v1436
  %v1441 = vtanh.pop %v1439
  %v1442 = vtanh.pop %v1440
  %1445 = vrot.lane.b32.xlu0 %v1441, 32
  %v1446 = vpop.permute.xlu0 %1445
  %1447 = vrot.lane.b32.xlu0 %v1442, 32
  %v1448 = vpop.permute.xlu0 %1447
  %v1451 = vmul.f32 %v1401, %v1446
  %v1452 = vmul.f32 %v1416, %v1448
  %1454 = vrot.lane.b32.xlu0 %v1451, 64
  %v1455 = vpop.permute.xlu0 %1454
  %s1457 = scalar_lea.vmem [#allocation3], 48
  %1458 = vst.msk [vmem:[%s1457] sm:$0xff] %vm693, %v1455
  %1460 = vrot.lane.b32.xlu0 %v1452, 64
  %v1461 = vpop.permute.xlu0 %1460
  %s1463 = scalar_lea.vmem [#allocation4], 8
  %1464 = vst.msk [vmem:[%s1463] sm:$0xff] %vm693, %v1461
  %v1465 = vld [vmem:[%s613] sm:$0xff]
  %v1466 = vld [vmem:[#allocation2 + $0x8] sm:$0xff]
  %v1467 = vpack.c.bf16 %v1452, %v1451
  %1469 = vrot.lane.b32.xlu0 %v1467, 64
  %v1470 = vpop.permute.xlu0 %1469
  %v1472 = vsel %vm693, %v1470, 0
  %1474 = vmatpush.bf16.msra.mxu0 0
  %1475 = vmatpush.bf16.msra.mxu0 0
  %1476 = vmatpush.bf16.msra.mxu0 0
  %1477 = vmatpush.bf16.msra.mxu0 0
  %1478 = vmatpush.bf16.msra.mxu0 0
  %1479 = vmatpush.bf16.msra.mxu0 0
  %1480 = vmatpush.bf16.msra.mxu0 %v723
  %1481 = vmatpush.bf16.msra.mxu0 %v721
  %1482 = vmatmul.bf16.gmra.mxu0 %v1472
  %v1483 = vpop.f32.mrf.mxu0
  %v1484 = vadd.f32 0.0, %v1483
  %v1485 = vpop.f32.mrf.mxu0
  %1486 = vdwg.mxu0
  %1487 = vmatpush.bf16.msra.mxu0 0
  %1488 = vmatpush.bf16.msra.mxu0 0
  %1489 = vmatpush.bf16.msra.mxu0 0
  %1490 = vmatpush.bf16.msra.mxu0 0
  %1491 = vmatpush.bf16.msra.mxu0 0
  %1492 = vmatpush.bf16.msra.mxu0 0
  %1493 = vmatpush.bf16.msra.mxu0 %v724
  %1494 = vmatpush.bf16.msra.mxu0 %v722
  %1495 = vmatmul.bf16.gmra.mxu0 %v1472
  %v1496 = vpop.f32.mrf.mxu0
  %v1497 = vpop.f32.mrf.mxu0
  %v1498 = vadd.f32 0.0, %v1497
  %1499 = vdwg.mxu0
  %v1500 = vadd.f32 %v1465, %v1484
  %v1501 = vadd.f32 %v1466, %v1498
  %v1502 = vxor.u32 %v1500, 2147483648
  %v1503 = vxor.u32 %v1501, 2147483648
  %v1504 = vmul.f32 %v1502, 1.442695
  %v1505 = vpow.pop %v1504
  %v1506 = vmul.f32 %v1503, 1.442695
  %v1507 = vpow.pop %v1506
  %v1508 = vadd.f32 %v1505, 1.0
  %v1509 = vadd.f32 %v1507, 1.0
  %v1510 = vrcp.pop %v1508
  %v1511 = vmul.f32 %v1508, %v1510
  %v1512 = vsub.f32 1.0, %v1511
  %v1513 = vmul.f32 %v1510, %v1512
  %v1514 = vadd.f32 %v1510, %v1513
  %vm1515 = vweird.f32 %v1508
  %vm1516 = vweird.f32 %v1510
  %vm1517 = vmor %vm1515, %vm1516
  %v1518 = vsel %vm1517, %v1510, %v1514
  %v1519 = vand.u32 2147483647, %v1508
  %vm1520 = vcmp.eq.f32.partialorder %v1519, 8.507059e+37
  %v1521 = vand.u32 %v1508, 2147483648
  %v1522 = vor.u32 1.1754944e-38, %v1521
  %v1523 = vsel %vm1520, %v1522, %v1518
  %v1524 = vmul.f32 1.0, %v1523
  %v1525 = vrcp.pop %v1509
  %v1526 = vmul.f32 %v1509, %v1525
  %v1527 = vsub.f32 1.0, %v1526
  %v1528 = vmul.f32 %v1525, %v1527
  %v1529 = vadd.f32 %v1525, %v1528
  %vm1530 = vweird.f32 %v1509
  %vm1531 = vweird.f32 %v1525
  %vm1532 = vmor %vm1530, %vm1531
  %v1533 = vsel %vm1532, %v1525, %v1529
  %v1534 = vand.u32 2147483647, %v1509
  %vm1535 = vcmp.eq.f32.partialorder %v1534, 8.507059e+37
  %v1536 = vand.u32 %v1509, 2147483648
  %v1537 = vor.u32 1.1754944e-38, %v1536
  %v1538 = vsel %vm1535, %v1537, %v1533
  %v1539 = vmul.f32 1.0, %v1538
  %v1540 = vtanh.pop %v1500
  %v1541 = vtanh.pop %v1501
  %v1542 = vmul.f32 %v1524, %v1439
  %v1543 = vmul.f32 %v1539, %v1440
  %1546 = vrot.lane.b32.xlu0 %v1540, 32
  %v1547 = vpop.permute.xlu0 %1546
  %1548 = vrot.lane.b32.xlu0 %v1541, 32
  %v1549 = vpop.permute.xlu0 %1548
  %v1552 = vmul.f32 %v1524, %v1547
  %v1553 = vmul.f32 %v1539, %v1549
  %1556 = vrot.lane.b32.xlu0 %v1552, 32
  %v1557 = vpop.permute.xlu0 %1556
  %1558 = vrot.lane.b32.xlu0 %v1553, 32
  %v1559 = vpop.permute.xlu0 %1558
  %v1562 = vadd.f32 %v1542, %v1557
  %v1563 = vadd.f32 %v1543, %v1559
  %v1564 = vtanh.pop %v1562
  %v1565 = vtanh.pop %v1563
  %1568 = vrot.lane.b32.xlu0 %v1564, 32
  %v1569 = vpop.permute.xlu0 %1568
  %1570 = vrot.lane.b32.xlu0 %v1565, 32
  %v1571 = vpop.permute.xlu0 %1570
  %v1574 = vmul.f32 %v1524, %v1569
  %v1575 = vmul.f32 %v1539, %v1571
  %1577 = vrot.lane.b32.xlu0 %v1574, 64
  %v1578 = vpop.permute.xlu0 %1577
  %s1580 = scalar_lea.vmem [#allocation3], 56
  %1581 = vst.msk [vmem:[%s1580] sm:$0xff] %vm693, %v1578
  %1583 = vrot.lane.b32.xlu0 %v1575, 64
  %v1584 = vpop.permute.xlu0 %1583
  %1586 = vst.msk [vmem:[#allocation4] sm:$0xff] %vm693, %v1584
  %v1587 = vld [vmem:[#allocation3] sm:$0xff]
  %v1588 = vld [vmem:[#allocation3 + $0x8] sm:$0xff]
  %v1589 = vld [vmem:[#allocation3 + $0x10] sm:$0xff]
  %v1590 = vld [vmem:[#allocation3 + $0x18] sm:$0xff]
  %v1591 = vld [vmem:[#allocation3 + $0x20] sm:$0xff]
  %v1592 = vld [vmem:[#allocation3 + $0x28] sm:$0xff]
  %v1593 = vld [vmem:[#allocation3 + $0x30] sm:$0xff]
  %v1594 = vld [vmem:[#allocation3 + $0x38] sm:$0xff]
  %v1595 = vld [vmem:[#allocation4] sm:$0xff]
  %v1596 = vld [vmem:[#allocation4 + $0x8] sm:$0xff]
  %v1597 = vld [vmem:[#allocation4 + $0x10] sm:$0xff]
  %v1598 = vld [vmem:[#allocation4 + $0x18] sm:$0xff]
  %v1599 = vld [vmem:[#allocation4 + $0x20] sm:$0xff]
  %v1600 = vld [vmem:[#allocation4 + $0x28] sm:$0xff]
  %v1601 = vld [vmem:[#allocation4 + $0x30] sm:$0xff]
  %v1602 = vld [vmem:[#allocation4 + $0x38] sm:$0xff]
  %1611 = vrot.lane.b32.xlu0 %v1595, 32
  %v1612 = vpop.permute.xlu0 %1611
  %1613 = vrot.lane.b32.xlu0 %v1596, 32
  %v1614 = vpop.permute.xlu0 %1613
  %1615 = vrot.lane.b32.xlu0 %v1597, 32
  %v1616 = vpop.permute.xlu0 %1615
  %1617 = vrot.lane.b32.xlu0 %v1598, 32
  %v1618 = vpop.permute.xlu0 %1617
  %1619 = vrot.lane.b32.xlu0 %v1599, 32
  %v1620 = vpop.permute.xlu0 %1619
  %1621 = vrot.lane.b32.xlu0 %v1600, 32
  %v1622 = vpop.permute.xlu0 %1621
  %1623 = vrot.lane.b32.xlu0 %v1601, 32
  %v1624 = vpop.permute.xlu0 %1623
  %1625 = vrot.lane.b32.xlu0 %v1602, 32
  %v1626 = vpop.permute.xlu0 %1625
  %v1635 = vsel %vm693, %v1587, %v1612
  %v1636 = vsel %vm693, %v1588, %v1614
  %v1637 = vsel %vm693, %v1589, %v1616
  %v1638 = vsel %vm693, %v1590, %v1618
  %v1639 = vsel %vm693, %v1591, %v1620
  %v1640 = vsel %vm693, %v1592, %v1622
  %v1641 = vsel %vm693, %v1593, %v1624
  %v1642 = vsel %vm693, %v1594, %v1626
  %v1643 = vpack.c.bf16 %v1636, %v1635
  %v1644 = vpack.c.bf16 %v1638, %v1637
  %v1645 = vpack.c.bf16 %v1640, %v1639
  %v1646 = vpack.c.bf16 %v1642, %v1641
  %v1647 = vld [vmem:[%s4] sm:$0xff]
  %v1648 = vld [vmem:[%s4 + $0x8] sm:$0xff]
  %v1649 = vld [vmem:[%s4 + $0x10] sm:$0xff]
  %v1650 = vld [vmem:[%s4 + $0x18] sm:$0xff]
  %v1651 = vld [vmem:[%s4 + $0x20] sm:$0xff]
  %v1652 = vld [vmem:[%s4 + $0x28] sm:$0xff]
  %v1653 = vld [vmem:[%s4 + $0x30] sm:$0xff]
  %v1654 = vld [vmem:[%s4 + $0x38] sm:$0xff]
  %v1655 = vld [vmem:[%s6] sm:$0x3]
  %v1657 = vperm.slane %v1655, 0
  %v1658 = vperm.slane %v1655, 1
  %v1669 = vunpack.c.l.b16 %v1647
  %v1670 = vunpack.c.h.b16 %v1647
  %v1671 = vunpack.c.l.b16 %v1648
  %v1672 = vunpack.c.h.b16 %v1648
  %v1673 = vunpack.c.l.b16 %v1649
  %v1674 = vunpack.c.h.b16 %v1649
  %v1675 = vunpack.c.l.b16 %v1650
  %v1676 = vunpack.c.h.b16 %v1650
  %v1677 = vunpack.c.l.b16 %v1651
  %v1678 = vunpack.c.h.b16 %v1651
  %v1679 = vunpack.c.l.b16 %v1652
  %v1680 = vunpack.c.h.b16 %v1652
  %v1681 = vunpack.c.l.b16 %v1653
  %v1682 = vunpack.c.h.b16 %v1653
  %v1683 = vunpack.c.l.b16 %v1654
  %v1684 = vunpack.c.h.b16 %v1654
  %v1685 = vpack.c.b16 %v1671, %v1669
  %v1686 = vpack.c.b16 %v1672, %v1670
  %v1687 = vpack.c.b16 %v1675, %v1673
  %v1688 = vpack.c.b16 %v1676, %v1674
  %v1689 = vpack.c.b16 %v1679, %v1677
  %v1690 = vpack.c.b16 %v1680, %v1678
  %v1691 = vpack.c.b16 %v1683, %v1681
  %v1692 = vpack.c.b16 %v1684, %v1682
  %vm1701 = vcmask 523264
  %v1703 = vsel %vm1701, %v1643, 0
  %v1706 = vsel %vm1701, %v1644, 0
  %v1709 = vsel %vm1701, %v1645, 0
  %v1712 = vsel %vm1701, %v1646, 0
  %1714 = vmatpush.bf16.msra.mxu0 0
  %1715 = vmatpush.bf16.msra.mxu0 0
  %1716 = vmatpush.bf16.msra.mxu0 0
  %1717 = vmatpush.bf16.msra.mxu0 0
  %1718 = vmatpush.bf16.msra.mxu0 %v1691
  %1719 = vmatpush.bf16.msra.mxu0 %v1689
  %1720 = vmatpush.bf16.msra.mxu0 %v1687
  %1721 = vmatpush.bf16.msra.mxu0 %v1685
  %1722 = vmatmul.bf16.gmra.mxu0 %v1703
  %v1723 = vpop.f32.mrf.mxu0
  %v1724 = vadd.f32 %v1657, %v1723
  %v1725 = vpop.f32.mrf.mxu0
  %v1726 = vadd.f32 %v1657, %v1725
  %1727 = vmatmul.bf16.gmra.mxu0 %v1706
  %v1728 = vpop.f32.mrf.mxu0
  %v1729 = vadd.f32 %v1657, %v1728
  %v1730 = vpop.f32.mrf.mxu0
  %v1731 = vadd.f32 %v1657, %v1730
  %1732 = vmatmul.bf16.gmra.mxu0 %v1709
  %v1733 = vpop.f32.mrf.mxu0
  %v1734 = vadd.f32 %v1657, %v1733
  %v1735 = vpop.f32.mrf.mxu0
  %v1736 = vadd.f32 %v1657, %v1735
  %1737 = vmatmul.bf16.gmra.mxu0 %v1712
  %v1738 = vpop.f32.mrf.mxu0
  %v1739 = vadd.f32 %v1657, %v1738
  %v1740 = vpop.f32.mrf.mxu0
  %v1741 = vadd.f32 %v1657, %v1740
  %1742 = vdwg.mxu0
  %1743 = vmatpush.bf16.msra.mxu0 0
  %1744 = vmatpush.bf16.msra.mxu0 0
  %1745 = vmatpush.bf16.msra.mxu0 0
  %1746 = vmatpush.bf16.msra.mxu0 0
  %1747 = vmatpush.bf16.msra.mxu0 %v1692
  %1748 = vmatpush.bf16.msra.mxu0 %v1690
  %1749 = vmatpush.bf16.msra.mxu0 %v1688
  %1750 = vmatpush.bf16.msra.mxu0 %v1686
  %1751 = vmatmul.bf16.gmra.mxu0 %v1703
  %v1752 = vpop.f32.mrf.mxu0
  %v1753 = vadd.f32 %v1658, %v1752
  %v1754 = vpop.f32.mrf.mxu0
  %v1755 = vadd.f32 %v1658, %v1754
  %1756 = vmatmul.bf16.gmra.mxu0 %v1706
  %v1757 = vpop.f32.mrf.mxu0
  %v1758 = vadd.f32 %v1658, %v1757
  %v1759 = vpop.f32.mrf.mxu0
  %v1760 = vadd.f32 %v1658, %v1759
  %1761 = vmatmul.bf16.gmra.mxu0 %v1709
  %v1762 = vpop.f32.mrf.mxu0
  %v1763 = vadd.f32 %v1658, %v1762
  %v1764 = vpop.f32.mrf.mxu0
  %v1765 = vadd.f32 %v1658, %v1764
  %1766 = vmatmul.bf16.gmra.mxu0 %v1712
  %v1767 = vpop.f32.mrf.mxu0
  %v1768 = vadd.f32 %v1658, %v1767
  %v1769 = vpop.f32.mrf.mxu0
  %v1770 = vadd.f32 %v1658, %v1769
  %1771 = vdwg.mxu0
  %1772 = vst [vmem:[#allocation2] sm:$0xff] %v1724
  %1773 = vst [vmem:[#allocation2 + $0x8] sm:$0xff] %v1753
  %1774 = vst [vmem:[#allocation2 + $0x10] sm:$0xff] %v1726
  %1775 = vst [vmem:[#allocation2 + $0x18] sm:$0xff] %v1755
  %1776 = vst [vmem:[#allocation2 + $0x20] sm:$0xff] %v1729
  %1777 = vst [vmem:[#allocation2 + $0x28] sm:$0xff] %v1758
  %1778 = vst [vmem:[#allocation2 + $0x30] sm:$0xff] %v1731
  %1779 = vst [vmem:[#allocation2 + $0x38] sm:$0xff] %v1760
  %1780 = vst [vmem:[#allocation2 + $0x40] sm:$0xff] %v1734
  %1781 = vst [vmem:[#allocation2 + $0x48] sm:$0xff] %v1763
  %1782 = vst [vmem:[#allocation2 + $0x50] sm:$0xff] %v1736
  %1783 = vst [vmem:[#allocation2 + $0x58] sm:$0xff] %v1765
  %1784 = vst [vmem:[#allocation2 + $0x60] sm:$0xff] %v1739
  %1785 = vst [vmem:[#allocation2 + $0x68] sm:$0xff] %v1768
  %1786 = vst [vmem:[#allocation2 + $0x70] sm:$0xff] %v1741
  %1787 = vst [vmem:[#allocation2 + $0x78] sm:$0xff] %v1770
  %v1788 = vld [vmem:[%s5] sm:$0xff]
  %v1789 = vld [vmem:[%s5 + $0x8] sm:$0xff]
  %v1790 = vld [vmem:[%s5 + $0x10] sm:$0xff]
  %v1791 = vld [vmem:[%s5 + $0x18] sm:$0xff]
  %v1792 = vld [vmem:[#allocation2] sm:$0xff]
  %v1793 = vld [vmem:[%s613 + $0x8] sm:$0xff]
  %v1794 = vxor.u32 %v1792, 2147483648
  %v1795 = vxor.u32 %v1793, 2147483648
  %v1796 = vmul.f32 %v1794, 1.442695
  %v1797 = vpow.pop %v1796
  %v1798 = vmul.f32 %v1795, 1.442695
  %v1799 = vpow.pop %v1798
  %v1800 = vadd.f32 %v1797, 1.0
  %v1801 = vadd.f32 %v1799, 1.0
  %v1802 = vrcp.pop %v1800
  %v1803 = vmul.f32 %v1800, %v1802
  %v1804 = vsub.f32 1.0, %v1803
  %v1805 = vmul.f32 %v1802, %v1804
  %v1806 = vadd.f32 %v1802, %v1805
  %vm1807 = vweird.f32 %v1800
  %vm1808 = vweird.f32 %v1802
  %vm1809 = vmor %vm1807, %vm1808
  %v1810 = vsel %vm1809, %v1802, %v1806
  %v1811 = vand.u32 2147483647, %v1800
  %vm1812 = vcmp.eq.f32.partialorder %v1811, 8.507059e+37
  %v1813 = vand.u32 %v1800, 2147483648
  %v1814 = vor.u32 1.1754944e-38, %v1813
  %v1815 = vsel %vm1812, %v1814, %v1810
  %v1816 = vmul.f32 1.0, %v1815
  %v1817 = vrcp.pop %v1801
  %v1818 = vmul.f32 %v1801, %v1817
  %v1819 = vsub.f32 1.0, %v1818
  %v1820 = vmul.f32 %v1817, %v1819
  %v1821 = vadd.f32 %v1817, %v1820
  %vm1822 = vweird.f32 %v1801
  %vm1823 = vweird.f32 %v1817
  %vm1824 = vmor %vm1822, %vm1823
  %v1825 = vsel %vm1824, %v1817, %v1821
  %v1826 = vand.u32 2147483647, %v1801
  %vm1827 = vcmp.eq.f32.partialorder %v1826, 8.507059e+37
  %v1828 = vand.u32 %v1801, 2147483648
  %v1829 = vor.u32 1.1754944e-38, %v1828
  %v1830 = vsel %vm1827, %v1829, %v1825
  %v1831 = vmul.f32 1.0, %v1830
  %v1832 = vtanh.pop %v1792
  %v1833 = vtanh.pop %v1793
  %v1834 = vmul.f32 %v1816, 0.0
  %v1835 = vmul.f32 %v1831, 0.0
  %1838 = vrot.lane.b32.xlu0 %v1832, 32
  %v1839 = vpop.permute.xlu0 %1838
  %1840 = vrot.lane.b32.xlu0 %v1833, 32
  %v1841 = vpop.permute.xlu0 %1840
  %v1844 = vmul.f32 %v1816, %v1839
  %v1845 = vmul.f32 %v1831, %v1841
  %1848 = vrot.lane.b32.xlu0 %v1844, 32
  %v1849 = vpop.permute.xlu0 %1848
  %1850 = vrot.lane.b32.xlu0 %v1845, 32
  %v1851 = vpop.permute.xlu0 %1850
  %v1854 = vadd.f32 %v1834, %v1849
  %v1855 = vadd.f32 %v1835, %v1851
  %v1856 = vtanh.pop %v1854
  %v1857 = vtanh.pop %v1855
  %1860 = vrot.lane.b32.xlu0 %v1856, 32
  %v1861 = vpop.permute.xlu0 %1860
  %1862 = vrot.lane.b32.xlu0 %v1857, 32
  %v1863 = vpop.permute.xlu0 %1862
  %v1866 = vmul.f32 %v1816, %v1861
  %v1867 = vmul.f32 %v1831, %v1863
  %1869 = vrot.lane.b32.xlu0 %v1866, 64
  %v1870 = vpop.permute.xlu0 %1869
  %1872 = vst.msk [vmem:[#allocation5] sm:$0xff] %vm693, %v1870
  %1874 = vrot.lane.b32.xlu0 %v1867, 64
  %v1875 = vpop.permute.xlu0 %1874
  %s1877 = scalar_lea.vmem [#allocation6], 56
  %1878 = vst.msk [vmem:[%s1877] sm:$0xff] %vm693, %v1875
  %v1879 = vld [vmem:[%s701] sm:$0xff]
  %v1880 = vld [vmem:[%s703 + $0x8] sm:$0xff]
  %v1881 = vpack.c.bf16 %v1867, %v1866
  %1883 = vrot.lane.b32.xlu0 %v1881, 64
  %v1884 = vpop.permute.xlu0 %1883
  %v1889 = vunpack.c.l.b16 %v1788
  %v1890 = vunpack.c.h.b16 %v1788
  %v1891 = vunpack.c.l.b16 %v1789
  %v1892 = vunpack.c.h.b16 %v1789
  %v1893 = vunpack.c.l.b16 %v1790
  %v1894 = vunpack.c.h.b16 %v1790
  %v1895 = vunpack.c.l.b16 %v1791
  %v1896 = vunpack.c.h.b16 %v1791
  %v1897 = vpack.c.b16 %v1891, %v1889
  %v1898 = vpack.c.b16 %v1892, %v1890
  %v1899 = vpack.c.b16 %v1895, %v1893
  %v1900 = vpack.c.b16 %v1896, %v1894
  %v1906 = vsel %vm693, %v1884, 0
  %1908 = vmatpush.bf16.msra.mxu0 0
  %1909 = vmatpush.bf16.msra.mxu0 0
  %1910 = vmatpush.bf16.msra.mxu0 0
  %1911 = vmatpush.bf16.msra.mxu0 0
  %1912 = vmatpush.bf16.msra.mxu0 0
  %1913 = vmatpush.bf16.msra.mxu0 0
  %1914 = vmatpush.bf16.msra.mxu0 %v1899
  %1915 = vmatpush.bf16.msra.mxu0 %v1897
  %1916 = vmatmul.bf16.gmra.mxu0 %v1906
  %v1917 = vpop.f32.mrf.mxu0
  %v1918 = vadd.f32 0.0, %v1917
  %v1919 = vpop.f32.mrf.mxu0
  %1920 = vdwg.mxu0
  %1921 = vmatpush.bf16.msra.mxu0 0
  %1922 = vmatpush.bf16.msra.mxu0 0
  %1923 = vmatpush.bf16.msra.mxu0 0
  %1924 = vmatpush.bf16.msra.mxu0 0
  %1925 = vmatpush.bf16.msra.mxu0 0
  %1926 = vmatpush.bf16.msra.mxu0 0
  %1927 = vmatpush.bf16.msra.mxu0 %v1900
  %1928 = vmatpush.bf16.msra.mxu0 %v1898
  %1929 = vmatmul.bf16.gmra.mxu0 %v1906
  %v1930 = vpop.f32.mrf.mxu0
  %v1931 = vpop.f32.mrf.mxu0
  %v1932 = vadd.f32 0.0, %v1931
  %1933 = vdwg.mxu0
  %v1934 = vadd.f32 %v1879, %v1918
  %v1935 = vadd.f32 %v1880, %v1932
  %v1936 = vxor.u32 %v1934, 2147483648
  %v1937 = vxor.u32 %v1935, 2147483648
  %v1938 = vmul.f32 %v1936, 1.442695
  %v1939 = vpow.pop %v1938
  %v1940 = vmul.f32 %v1937, 1.442695
  %v1941 = vpow.pop %v1940
  %v1942 = vadd.f32 %v1939, 1.0
  %v1943 = vadd.f32 %v1941, 1.0
  %v1944 = vrcp.pop %v1942
  %v1945 = vmul.f32 %v1942, %v1944
  %v1946 = vsub.f32 1.0, %v1945
  %v1947 = vmul.f32 %v1944, %v1946
  %v1948 = vadd.f32 %v1944, %v1947
  %vm1949 = vweird.f32 %v1942
  %vm1950 = vweird.f32 %v1944
  %vm1951 = vmor %vm1949, %vm1950
  %v1952 = vsel %vm1951, %v1944, %v1948
  %v1953 = vand.u32 2147483647, %v1942
  %vm1954 = vcmp.eq.f32.partialorder %v1953, 8.507059e+37
  %v1955 = vand.u32 %v1942, 2147483648
  %v1956 = vor.u32 1.1754944e-38, %v1955
  %v1957 = vsel %vm1954, %v1956, %v1952
  %v1958 = vmul.f32 1.0, %v1957
  %v1959 = vrcp.pop %v1943
  %v1960 = vmul.f32 %v1943, %v1959
  %v1961 = vsub.f32 1.0, %v1960
  %v1962 = vmul.f32 %v1959, %v1961
  %v1963 = vadd.f32 %v1959, %v1962
  %vm1964 = vweird.f32 %v1943
  %vm1965 = vweird.f32 %v1959
  %vm1966 = vmor %vm1964, %vm1965
  %v1967 = vsel %vm1966, %v1959, %v1963
  %v1968 = vand.u32 2147483647, %v1943
  %vm1969 = vcmp.eq.f32.partialorder %v1968, 8.507059e+37
  %v1970 = vand.u32 %v1943, 2147483648
  %v1971 = vor.u32 1.1754944e-38, %v1970
  %v1972 = vsel %vm1969, %v1971, %v1967
  %v1973 = vmul.f32 1.0, %v1972
  %v1974 = vtanh.pop %v1934
  %v1975 = vtanh.pop %v1935
  %v1976 = vmul.f32 %v1958, %v1854
  %v1977 = vmul.f32 %v1973, %v1855
  %1980 = vrot.lane.b32.xlu0 %v1974, 32
  %v1981 = vpop.permute.xlu0 %1980
  %1982 = vrot.lane.b32.xlu0 %v1975, 32
  %v1983 = vpop.permute.xlu0 %1982
  %v1986 = vmul.f32 %v1958, %v1981
  %v1987 = vmul.f32 %v1973, %v1983
  %1990 = vrot.lane.b32.xlu0 %v1986, 32
  %v1991 = vpop.permute.xlu0 %1990
  %1992 = vrot.lane.b32.xlu0 %v1987, 32
  %v1993 = vpop.permute.xlu0 %1992
  %v1996 = vadd.f32 %v1976, %v1991
  %v1997 = vadd.f32 %v1977, %v1993
  %v1998 = vtanh.pop %v1996
  %v1999 = vtanh.pop %v1997
  %2002 = vrot.lane.b32.xlu0 %v1998, 32
  %v2003 = vpop.permute.xlu0 %2002
  %2004 = vrot.lane.b32.xlu0 %v1999, 32
  %v2005 = vpop.permute.xlu0 %2004
  %v2008 = vmul.f32 %v1958, %v2003
  %v2009 = vmul.f32 %v1973, %v2005
  %2011 = vrot.lane.b32.xlu0 %v2008, 64
  %v2012 = vpop.permute.xlu0 %2011
  %s2014 = scalar_lea.vmem [#allocation5], 8
  %2015 = vst.msk [vmem:[%s2014] sm:$0xff] %vm693, %v2012
  %2017 = vrot.lane.b32.xlu0 %v2009, 64
  %v2018 = vpop.permute.xlu0 %2017
  %s2020 = scalar_lea.vmem [#allocation6], 48
  %2021 = vst.msk [vmem:[%s2020] sm:$0xff] %vm693, %v2018
  %v2022 = vld [vmem:[%s846] sm:$0xff]
  %v2023 = vld [vmem:[%s848 + $0x8] sm:$0xff]
  %v2024 = vpack.c.bf16 %v2009, %v2008
  %2026 = vrot.lane.b32.xlu0 %v2024, 64
  %v2027 = vpop.permute.xlu0 %2026
  %v2029 = vsel %vm693, %v2027, 0
  %2031 = vmatpush.bf16.msra.mxu0 0
  %2032 = vmatpush.bf16.msra.mxu0 0
  %2033 = vmatpush.bf16.msra.mxu0 0
  %2034 = vmatpush.bf16.msra.mxu0 0
  %2035 = vmatpush.bf16.msra.mxu0 0
  %2036 = vmatpush.bf16.msra.mxu0 0
  %2037 = vmatpush.bf16.msra.mxu0 %v1899
  %2038 = vmatpush.bf16.msra.mxu0 %v1897
  %2039 = vmatmul.bf16.gmra.mxu0 %v2029
  %v2040 = vpop.f32.mrf.mxu0
  %v2041 = vadd.f32 0.0, %v2040
  %v2042 = vpop.f32.mrf.mxu0
  %2043 = vdwg.mxu0
  %2044 = vmatpush.bf16.msra.mxu0 0
  %2045 = vmatpush.bf16.msra.mxu0 0
  %2046 = vmatpush.bf16.msra.mxu0 0
  %2047 = vmatpush.bf16.msra.mxu0 0
  %2048 = vmatpush.bf16.msra.mxu0 0
  %2049 = vmatpush.bf16.msra.mxu0 0
  %2050 = vmatpush.bf16.msra.mxu0 %v1900
  %2051 = vmatpush.bf16.msra.mxu0 %v1898
  %2052 = vmatmul.bf16.gmra.mxu0 %v2029
  %v2053 = vpop.f32.mrf.mxu0
  %v2054 = vpop.f32.mrf.mxu0
  %v2055 = vadd.f32 0.0, %v2054
  %2056 = vdwg.mxu0
  %v2057 = vadd.f32 %v2022, %v2041
  %v2058 = vadd.f32 %v2023, %v2055
  %v2059 = vxor.u32 %v2057, 2147483648
  %v2060 = vxor.u32 %v2058, 2147483648
  %v2061 = vmul.f32 %v2059, 1.442695
  %v2062 = vpow.pop %v2061
  %v2063 = vmul.f32 %v2060, 1.442695
  %v2064 = vpow.pop %v2063
  %v2065 = vadd.f32 %v2062, 1.0
  %v2066 = vadd.f32 %v2064, 1.0
  %v2067 = vrcp.pop %v2065
  %v2068 = vmul.f32 %v2065, %v2067
  %v2069 = vsub.f32 1.0, %v2068
  %v2070 = vmul.f32 %v2067, %v2069
  %v2071 = vadd.f32 %v2067, %v2070
  %vm2072 = vweird.f32 %v2065
  %vm2073 = vweird.f32 %v2067
  %vm2074 = vmor %vm2072, %vm2073
  %v2075 = vsel %vm2074, %v2067, %v2071
  %v2076 = vand.u32 2147483647, %v2065
  %vm2077 = vcmp.eq.f32.partialorder %v2076, 8.507059e+37
  %v2078 = vand.u32 %v2065, 2147483648
  %v2079 = vor.u32 1.1754944e-38, %v2078
  %v2080 = vsel %vm2077, %v2079, %v2075
  %v2081 = vmul.f32 1.0, %v2080
  %v2082 = vrcp.pop %v2066
  %v2083 = vmul.f32 %v2066, %v2082
  %v2084 = vsub.f32 1.0, %v2083
  %v2085 = vmul.f32 %v2082, %v2084
  %v2086 = vadd.f32 %v2082, %v2085
  %vm2087 = vweird.f32 %v2066
  %vm2088 = vweird.f32 %v2082
  %vm2089 = vmor %vm2087, %vm2088
  %v2090 = vsel %vm2089, %v2082, %v2086
  %v2091 = vand.u32 2147483647, %v2066
  %vm2092 = vcmp.eq.f32.partialorder %v2091, 8.507059e+37
  %v2093 = vand.u32 %v2066, 2147483648
  %v2094 = vor.u32 1.1754944e-38, %v2093
  %v2095 = vsel %vm2092, %v2094, %v2090
  %v2096 = vmul.f32 1.0, %v2095
  %v2097 = vtanh.pop %v2057
  %v2098 = vtanh.pop %v2058
  %v2099 = vmul.f32 %v2081, %v1996
  %v2100 = vmul.f32 %v2096, %v1997
  %2103 = vrot.lane.b32.xlu0 %v2097, 32
  %v2104 = vpop.permute.xlu0 %2103
  %2105 = vrot.lane.b32.xlu0 %v2098, 32
  %v2106 = vpop.permute.xlu0 %2105
  %v2109 = vmul.f32 %v2081, %v2104
  %v2110 = vmul.f32 %v2096, %v2106
  %2113 = vrot.lane.b32.xlu0 %v2109, 32
  %v2114 = vpop.permute.xlu0 %2113
  %2115 = vrot.lane.b32.xlu0 %v2110, 32
  %v2116 = vpop.permute.xlu0 %2115
  %v2119 = vadd.f32 %v2099, %v2114
  %v2120 = vadd.f32 %v2100, %v2116
  %v2121 = vtanh.pop %v2119
  %v2122 = vtanh.pop %v2120
  %2125 = vrot.lane.b32.xlu0 %v2121, 32
  %v2126 = vpop.permute.xlu0 %2125
  %2127 = vrot.lane.b32.xlu0 %v2122, 32
  %v2128 = vpop.permute.xlu0 %2127
  %v2131 = vmul.f32 %v2081, %v2126
  %v2132 = vmul.f32 %v2096, %v2128
  %2134 = vrot.lane.b32.xlu0 %v2131, 64
  %v2135 = vpop.permute.xlu0 %2134
  %s2137 = scalar_lea.vmem [#allocation5], 16
  %2138 = vst.msk [vmem:[%s2137] sm:$0xff] %vm693, %v2135
  %2140 = vrot.lane.b32.xlu0 %v2132, 64
  %v2141 = vpop.permute.xlu0 %2140
  %s2143 = scalar_lea.vmem [#allocation6], 40
  %2144 = vst.msk [vmem:[%s2143] sm:$0xff] %vm693, %v2141
  %v2145 = vld [vmem:[%s971] sm:$0xff]
  %v2146 = vld [vmem:[%s973 + $0x8] sm:$0xff]
  %v2147 = vpack.c.bf16 %v2132, %v2131
  %2149 = vrot.lane.b32.xlu0 %v2147, 64
  %v2150 = vpop.permute.xlu0 %2149
  %v2152 = vsel %vm693, %v2150, 0
  %2154 = vmatpush.bf16.msra.mxu0 0
  %2155 = vmatpush.bf16.msra.mxu0 0
  %2156 = vmatpush.bf16.msra.mxu0 0
  %2157 = vmatpush.bf16.msra.mxu0 0
  %2158 = vmatpush.bf16.msra.mxu0 0
  %2159 = vmatpush.bf16.msra.mxu0 0
  %2160 = vmatpush.bf16.msra.mxu0 %v1899
  %2161 = vmatpush.bf16.msra.mxu0 %v1897
  %2162 = vmatmul.bf16.gmra.mxu0 %v2152
  %v2163 = vpop.f32.mrf.mxu0
  %v2164 = vadd.f32 0.0, %v2163
  %v2165 = vpop.f32.mrf.mxu0
  %2166 = vdwg.mxu0
  %2167 = vmatpush.bf16.msra.mxu0 0
  %2168 = vmatpush.bf16.msra.mxu0 0
  %2169 = vmatpush.bf16.msra.mxu0 0
  %2170 = vmatpush.bf16.msra.mxu0 0
  %2171 = vmatpush.bf16.msra.mxu0 0
  %2172 = vmatpush.bf16.msra.mxu0 0
  %2173 = vmatpush.bf16.msra.mxu0 %v1900
  %2174 = vmatpush.bf16.msra.mxu0 %v1898
  %2175 = vmatmul.bf16.gmra.mxu0 %v2152
  %v2176 = vpop.f32.mrf.mxu0
  %v2177 = vpop.f32.mrf.mxu0
  %v2178 = vadd.f32 0.0, %v2177
  %2179 = vdwg.mxu0
  %v2180 = vadd.f32 %v2145, %v2164
  %v2181 = vadd.f32 %v2146, %v2178
  %v2182 = vxor.u32 %v2180, 2147483648
  %v2183 = vxor.u32 %v2181, 2147483648
  %v2184 = vmul.f32 %v2182, 1.442695
  %v2185 = vpow.pop %v2184
  %v2186 = vmul.f32 %v2183, 1.442695
  %v2187 = vpow.pop %v2186
  %v2188 = vadd.f32 %v2185, 1.0
  %v2189 = vadd.f32 %v2187, 1.0
  %v2190 = vrcp.pop %v2188
  %v2191 = vmul.f32 %v2188, %v2190
  %v2192 = vsub.f32 1.0, %v2191
  %v2193 = vmul.f32 %v2190, %v2192
  %v2194 = vadd.f32 %v2190, %v2193
  %vm2195 = vweird.f32 %v2188
  %vm2196 = vweird.f32 %v2190
  %vm2197 = vmor %vm2195, %vm2196
  %v2198 = vsel %vm2197, %v2190, %v2194
  %v2199 = vand.u32 2147483647, %v2188
  %vm2200 = vcmp.eq.f32.partialorder %v2199, 8.507059e+37
  %v2201 = vand.u32 %v2188, 2147483648
  %v2202 = vor.u32 1.1754944e-38, %v2201
  %v2203 = vsel %vm2200, %v2202, %v2198
  %v2204 = vmul.f32 1.0, %v2203
  %v2205 = vrcp.pop %v2189
  %v2206 = vmul.f32 %v2189, %v2205
  %v2207 = vsub.f32 1.0, %v2206
  %v2208 = vmul.f32 %v2205, %v2207
  %v2209 = vadd.f32 %v2205, %v2208
  %vm2210 = vweird.f32 %v2189
  %vm2211 = vweird.f32 %v2205
  %vm2212 = vmor %vm2210, %vm2211
  %v2213 = vsel %vm2212, %v2205, %v2209
  %v2214 = vand.u32 2147483647, %v2189
  %vm2215 = vcmp.eq.f32.partialorder %v2214, 8.507059e+37
  %v2216 = vand.u32 %v2189, 2147483648
  %v2217 = vor.u32 1.1754944e-38, %v2216
  %v2218 = vsel %vm2215, %v2217, %v2213
  %v2219 = vmul.f32 1.0, %v2218
  %v2220 = vtanh.pop %v2180
  %v2221 = vtanh.pop %v2181
  %v2222 = vmul.f32 %v2204, %v2119
  %v2223 = vmul.f32 %v2219, %v2120
  %2226 = vrot.lane.b32.xlu0 %v2220, 32
  %v2227 = vpop.permute.xlu0 %2226
  %2228 = vrot.lane.b32.xlu0 %v2221, 32
  %v2229 = vpop.permute.xlu0 %2228
  %v2232 = vmul.f32 %v2204, %v2227
  %v2233 = vmul.f32 %v2219, %v2229
  %2236 = vrot.lane.b32.xlu0 %v2232, 32
  %v2237 = vpop.permute.xlu0 %2236
  %2238 = vrot.lane.b32.xlu0 %v2233, 32
  %v2239 = vpop.permute.xlu0 %2238
  %v2242 = vadd.f32 %v2222, %v2237
  %v2243 = vadd.f32 %v2223, %v2239
  %v2244 = vtanh.pop %v2242
  %v2245 = vtanh.pop %v2243
  %2248 = vrot.lane.b32.xlu0 %v2244, 32
  %v2249 = vpop.permute.xlu0 %2248
  %2250 = vrot.lane.b32.xlu0 %v2245, 32
  %v2251 = vpop.permute.xlu0 %2250
  %v2254 = vmul.f32 %v2204, %v2249
  %v2255 = vmul.f32 %v2219, %v2251
  %2257 = vrot.lane.b32.xlu0 %v2254, 64
  %v2258 = vpop.permute.xlu0 %2257
  %s2260 = scalar_lea.vmem [#allocation5], 24
  %2261 = vst.msk [vmem:[%s2260] sm:$0xff] %vm693, %v2258
  %2263 = vrot.lane.b32.xlu0 %v2255, 64
  %v2264 = vpop.permute.xlu0 %2263
  %s2266 = scalar_lea.vmem [#allocation6], 32
  %2267 = vst.msk [vmem:[%s2266] sm:$0xff] %vm693, %v2264
  %v2268 = vld [vmem:[%s973] sm:$0xff]
  %v2269 = vld [vmem:[%s971 + $0x8] sm:$0xff]
  %v2270 = vpack.c.bf16 %v2255, %v2254
  %2272 = vrot.lane.b32.xlu0 %v2270, 64
  %v2273 = vpop.permute.xlu0 %2272
  %v2275 = vsel %vm693, %v2273, 0
  %2277 = vmatpush.bf16.msra.mxu0 0
  %2278 = vmatpush.bf16.msra.mxu0 0
  %2279 = vmatpush.bf16.msra.mxu0 0
  %2280 = vmatpush.bf16.msra.mxu0 0
  %2281 = vmatpush.bf16.msra.mxu0 0
  %2282 = vmatpush.bf16.msra.mxu0 0
  %2283 = vmatpush.bf16.msra.mxu0 %v1899
  %2284 = vmatpush.bf16.msra.mxu0 %v1897
  %2285 = vmatmul.bf16.gmra.mxu0 %v2275
  %v2286 = vpop.f32.mrf.mxu0
  %v2287 = vadd.f32 0.0, %v2286
  %v2288 = vpop.f32.mrf.mxu0
  %2289 = vdwg.mxu0
  %2290 = vmatpush.bf16.msra.mxu0 0
  %2291 = vmatpush.bf16.msra.mxu0 0
  %2292 = vmatpush.bf16.msra.mxu0 0
  %2293 = vmatpush.bf16.msra.mxu0 0
  %2294 = vmatpush.bf16.msra.mxu0 0
  %2295 = vmatpush.bf16.msra.mxu0 0
  %2296 = vmatpush.bf16.msra.mxu0 %v1900
  %2297 = vmatpush.bf16.msra.mxu0 %v1898
  %2298 = vmatmul.bf16.gmra.mxu0 %v2275
  %v2299 = vpop.f32.mrf.mxu0
  %v2300 = vpop.f32.mrf.mxu0
  %v2301 = vadd.f32 0.0, %v2300
  %2302 = vdwg.mxu0
  %v2303 = vadd.f32 %v2268, %v2287
  %v2304 = vadd.f32 %v2269, %v2301
  %v2305 = vxor.u32 %v2303, 2147483648
  %v2306 = vxor.u32 %v2304, 2147483648
  %v2307 = vmul.f32 %v2305, 1.442695
  %v2308 = vpow.pop %v2307
  %v2309 = vmul.f32 %v2306, 1.442695
  %v2310 = vpow.pop %v2309
  %v2311 = vadd.f32 %v2308, 1.0
  %v2312 = vadd.f32 %v2310, 1.0
  %v2313 = vrcp.pop %v2311
  %v2314 = vmul.f32 %v2311, %v2313
  %v2315 = vsub.f32 1.0, %v2314
  %v2316 = vmul.f32 %v2313, %v2315
  %v2317 = vadd.f32 %v2313, %v2316
  %vm2318 = vweird.f32 %v2311
  %vm2319 = vweird.f32 %v2313
  %vm2320 = vmor %vm2318, %vm2319
  %v2321 = vsel %vm2320, %v2313, %v2317
  %v2322 = vand.u32 2147483647, %v2311
  %vm2323 = vcmp.eq.f32.partialorder %v2322, 8.507059e+37
  %v2324 = vand.u32 %v2311, 2147483648
  %v2325 = vor.u32 1.1754944e-38, %v2324
  %v2326 = vsel %vm2323, %v2325, %v2321
  %v2327 = vmul.f32 1.0, %v2326
  %v2328 = vrcp.pop %v2312
  %v2329 = vmul.f32 %v2312, %v2328
  %v2330 = vsub.f32 1.0, %v2329
  %v2331 = vmul.f32 %v2328, %v2330
  %v2332 = vadd.f32 %v2328, %v2331
  %vm2333 = vweird.f32 %v2312
  %vm2334 = vweird.f32 %v2328
  %vm2335 = vmor %vm2333, %vm2334
  %v2336 = vsel %vm2335, %v2328, %v2332
  %v2337 = vand.u32 2147483647, %v2312
  %vm2338 = vcmp.eq.f32.partialorder %v2337, 8.507059e+37
  %v2339 = vand.u32 %v2312, 2147483648
  %v2340 = vor.u32 1.1754944e-38, %v2339
  %v2341 = vsel %vm2338, %v2340, %v2336
  %v2342 = vmul.f32 1.0, %v2341
  %v2343 = vtanh.pop %v2303
  %v2344 = vtanh.pop %v2304
  %v2345 = vmul.f32 %v2327, %v2242
  %v2346 = vmul.f32 %v2342, %v2243
  %2349 = vrot.lane.b32.xlu0 %v2343, 32
  %v2350 = vpop.permute.xlu0 %2349
  %2351 = vrot.lane.b32.xlu0 %v2344, 32
  %v2352 = vpop.permute.xlu0 %2351
  %v2355 = vmul.f32 %v2327, %v2350
  %v2356 = vmul.f32 %v2342, %v2352
  %2359 = vrot.lane.b32.xlu0 %v2355, 32
  %v2360 = vpop.permute.xlu0 %2359
  %2361 = vrot.lane.b32.xlu0 %v2356, 32
  %v2362 = vpop.permute.xlu0 %2361
  %v2365 = vadd.f32 %v2345, %v2360
  %v2366 = vadd.f32 %v2346, %v2362
  %v2367 = vtanh.pop %v2365
  %v2368 = vtanh.pop %v2366
  %2371 = vrot.lane.b32.xlu0 %v2367, 32
  %v2372 = vpop.permute.xlu0 %2371
  %2373 = vrot.lane.b32.xlu0 %v2368, 32
  %v2374 = vpop.permute.xlu0 %2373
  %v2377 = vmul.f32 %v2327, %v2372
  %v2378 = vmul.f32 %v2342, %v2374
  %2380 = vrot.lane.b32.xlu0 %v2377, 64
  %v2381 = vpop.permute.xlu0 %2380
  %s2383 = scalar_lea.vmem [#allocation5], 32
  %2384 = vst.msk [vmem:[%s2383] sm:$0xff] %vm693, %v2381
  %2386 = vrot.lane.b32.xlu0 %v2378, 64
  %v2387 = vpop.permute.xlu0 %2386
  %s2389 = scalar_lea.vmem [#allocation6], 24
  %2390 = vst.msk [vmem:[%s2389] sm:$0xff] %vm693, %v2387
  %v2391 = vld [vmem:[%s848] sm:$0xff]
  %v2392 = vld [vmem:[%s846 + $0x8] sm:$0xff]
  %v2393 = vpack.c.bf16 %v2378, %v2377
  %2395 = vrot.lane.b32.xlu0 %v2393, 64
  %v2396 = vpop.permute.xlu0 %2395
  %v2398 = vsel %vm693, %v2396, 0
  %2400 = vmatpush.bf16.msra.mxu0 0
  %2401 = vmatpush.bf16.msra.mxu0 0
  %2402 = vmatpush.bf16.msra.mxu0 0
  %2403 = vmatpush.bf16.msra.mxu0 0
  %2404 = vmatpush.bf16.msra.mxu0 0
  %2405 = vmatpush.bf16.msra.mxu0 0
  %2406 = vmatpush.bf16.msra.mxu0 %v1899
  %2407 = vmatpush.bf16.msra.mxu0 %v1897
  %2408 = vmatmul.bf16.gmra.mxu0 %v2398
  %v2409 = vpop.f32.mrf.mxu0
  %v2410 = vadd.f32 0.0, %v2409
  %v2411 = vpop.f32.mrf.mxu0
  %2412 = vdwg.mxu0
  %2413 = vmatpush.bf16.msra.mxu0 0
  %2414 = vmatpush.bf16.msra.mxu0 0
  %2415 = vmatpush.bf16.msra.mxu0 0
  %2416 = vmatpush.bf16.msra.mxu0 0
  %2417 = vmatpush.bf16.msra.mxu0 0
  %2418 = vmatpush.bf16.msra.mxu0 0
  %2419 = vmatpush.bf16.msra.mxu0 %v1900
  %2420 = vmatpush.bf16.msra.mxu0 %v1898
  %2421 = vmatmul.bf16.gmra.mxu0 %v2398
  %v2422 = vpop.f32.mrf.mxu0
  %v2423 = vpop.f32.mrf.mxu0
  %v2424 = vadd.f32 0.0, %v2423
  %2425 = vdwg.mxu0
  %v2426 = vadd.f32 %v2391, %v2410
  %v2427 = vadd.f32 %v2392, %v2424
  %v2428 = vxor.u32 %v2426, 2147483648
  %v2429 = vxor.u32 %v2427, 2147483648
  %v2430 = vmul.f32 %v2428, 1.442695
  %v2431 = vpow.pop %v2430
  %v2432 = vmul.f32 %v2429, 1.442695
  %v2433 = vpow.pop %v2432
  %v2434 = vadd.f32 %v2431, 1.0
  %v2435 = vadd.f32 %v2433, 1.0
  %v2436 = vrcp.pop %v2434
  %v2437 = vmul.f32 %v2434, %v2436
  %v2438 = vsub.f32 1.0, %v2437
  %v2439 = vmul.f32 %v2436, %v2438
  %v2440 = vadd.f32 %v2436, %v2439
  %vm2441 = vweird.f32 %v2434
  %vm2442 = vweird.f32 %v2436
  %vm2443 = vmor %vm2441, %vm2442
  %v2444 = vsel %vm2443, %v2436, %v2440
  %v2445 = vand.u32 2147483647, %v2434
  %vm2446 = vcmp.eq.f32.partialorder %v2445, 8.507059e+37
  %v2447 = vand.u32 %v2434, 2147483648
  %v2448 = vor.u32 1.1754944e-38, %v2447
  %v2449 = vsel %vm2446, %v2448, %v2444
  %v2450 = vmul.f32 1.0, %v2449
  %v2451 = vrcp.pop %v2435
  %v2452 = vmul.f32 %v2435, %v2451
  %v2453 = vsub.f32 1.0, %v2452
  %v2454 = vmul.f32 %v2451, %v2453
  %v2455 = vadd.f32 %v2451, %v2454
  %vm2456 = vweird.f32 %v2435
  %vm2457 = vweird.f32 %v2451
  %vm2458 = vmor %vm2456, %vm2457
  %v2459 = vsel %vm2458, %v2451, %v2455
  %v2460 = vand.u32 2147483647, %v2435
  %vm2461 = vcmp.eq.f32.partialorder %v2460, 8.507059e+37
  %v2462 = vand.u32 %v2435, 2147483648
  %v2463 = vor.u32 1.1754944e-38, %v2462
  %v2464 = vsel %vm2461, %v2463, %v2459
  %v2465 = vmul.f32 1.0, %v2464
  %v2466 = vtanh.pop %v2426
  %v2467 = vtanh.pop %v2427
  %v2468 = vmul.f32 %v2450, %v2365
  %v2469 = vmul.f32 %v2465, %v2366
  %2472 = vrot.lane.b32.xlu0 %v2466, 32
  %v2473 = vpop.permute.xlu0 %2472
  %2474 = vrot.lane.b32.xlu0 %v2467, 32
  %v2475 = vpop.permute.xlu0 %2474
  %v2478 = vmul.f32 %v2450, %v2473
  %v2479 = vmul.f32 %v2465, %v2475
  %2482 = vrot.lane.b32.xlu0 %v2478, 32
  %v2483 = vpop.permute.xlu0 %2482
  %2484 = vrot.lane.b32.xlu0 %v2479, 32
  %v2485 = vpop.permute.xlu0 %2484
  %v2488 = vadd.f32 %v2468, %v2483
  %v2489 = vadd.f32 %v2469, %v2485
  %v2490 = vtanh.pop %v2488
  %v2491 = vtanh.pop %v2489
  %2494 = vrot.lane.b32.xlu0 %v2490, 32
  %v2495 = vpop.permute.xlu0 %2494
  %2496 = vrot.lane.b32.xlu0 %v2491, 32
  %v2497 = vpop.permute.xlu0 %2496
  %v2500 = vmul.f32 %v2450, %v2495
  %v2501 = vmul.f32 %v2465, %v2497
  %2503 = vrot.lane.b32.xlu0 %v2500, 64
  %v2504 = vpop.permute.xlu0 %2503
  %s2506 = scalar_lea.vmem [#allocation5], 40
  %2507 = vst.msk [vmem:[%s2506] sm:$0xff] %vm693, %v2504
  %2509 = vrot.lane.b32.xlu0 %v2501, 64
  %v2510 = vpop.permute.xlu0 %2509
  %s2512 = scalar_lea.vmem [#allocation6], 16
  %2513 = vst.msk [vmem:[%s2512] sm:$0xff] %vm693, %v2510
  %v2514 = vld [vmem:[%s703] sm:$0xff]
  %v2515 = vld [vmem:[%s701 + $0x8] sm:$0xff]
  %v2516 = vpack.c.bf16 %v2501, %v2500
  %2518 = vrot.lane.b32.xlu0 %v2516, 64
  %v2519 = vpop.permute.xlu0 %2518
  %v2521 = vsel %vm693, %v2519, 0
  %2523 = vmatpush.bf16.msra.mxu0 0
  %2524 = vmatpush.bf16.msra.mxu0 0
  %2525 = vmatpush.bf16.msra.mxu0 0
  %2526 = vmatpush.bf16.msra.mxu0 0
  %2527 = vmatpush.bf16.msra.mxu0 0
  %2528 = vmatpush.bf16.msra.mxu0 0
  %2529 = vmatpush.bf16.msra.mxu0 %v1899
  %2530 = vmatpush.bf16.msra.mxu0 %v1897
  %2531 = vmatmul.bf16.gmra.mxu0 %v2521
  %v2532 = vpop.f32.mrf.mxu0
  %v2533 = vadd.f32 0.0, %v2532
  %v2534 = vpop.f32.mrf.mxu0
  %2535 = vdwg.mxu0
  %2536 = vmatpush.bf16.msra.mxu0 0
  %2537 = vmatpush.bf16.msra.mxu0 0
  %2538 = vmatpush.bf16.msra.mxu0 0
  %2539 = vmatpush.bf16.msra.mxu0 0
  %2540 = vmatpush.bf16.msra.mxu0 0
  %2541 = vmatpush.bf16.msra.mxu0 0
  %2542 = vmatpush.bf16.msra.mxu0 %v1900
  %2543 = vmatpush.bf16.msra.mxu0 %v1898
  %2544 = vmatmul.bf16.gmra.mxu0 %v2521
  %v2545 = vpop.f32.mrf.mxu0
  %v2546 = vpop.f32.mrf.mxu0
  %v2547 = vadd.f32 0.0, %v2546
  %2548 = vdwg.mxu0
  %v2549 = vadd.f32 %v2514, %v2533
  %v2550 = vadd.f32 %v2515, %v2547
  %v2551 = vxor.u32 %v2549, 2147483648
  %v2552 = vxor.u32 %v2550, 2147483648
  %v2553 = vmul.f32 %v2551, 1.442695
  %v2554 = vpow.pop %v2553
  %v2555 = vmul.f32 %v2552, 1.442695
  %v2556 = vpow.pop %v2555
  %v2557 = vadd.f32 %v2554, 1.0
  %v2558 = vadd.f32 %v2556, 1.0
  %v2559 = vrcp.pop %v2557
  %v2560 = vmul.f32 %v2557, %v2559
  %v2561 = vsub.f32 1.0, %v2560
  %v2562 = vmul.f32 %v2559, %v2561
  %v2563 = vadd.f32 %v2559, %v2562
  %vm2564 = vweird.f32 %v2557
  %vm2565 = vweird.f32 %v2559
  %vm2566 = vmor %vm2564, %vm2565
  %v2567 = vsel %vm2566, %v2559, %v2563
  %v2568 = vand.u32 2147483647, %v2557
  %vm2569 = vcmp.eq.f32.partialorder %v2568, 8.507059e+37
  %v2570 = vand.u32 %v2557, 2147483648
  %v2571 = vor.u32 1.1754944e-38, %v2570
  %v2572 = vsel %vm2569, %v2571, %v2567
  %v2573 = vmul.f32 1.0, %v2572
  %v2574 = vrcp.pop %v2558
  %v2575 = vmul.f32 %v2558, %v2574
  %v2576 = vsub.f32 1.0, %v2575
  %v2577 = vmul.f32 %v2574, %v2576
  %v2578 = vadd.f32 %v2574, %v2577
  %vm2579 = vweird.f32 %v2558
  %vm2580 = vweird.f32 %v2574
  %vm2581 = vmor %vm2579, %vm2580
  %v2582 = vsel %vm2581, %v2574, %v2578
  %v2583 = vand.u32 2147483647, %v2558
  %vm2584 = vcmp.eq.f32.partialorder %v2583, 8.507059e+37
  %v2585 = vand.u32 %v2558, 2147483648
  %v2586 = vor.u32 1.1754944e-38, %v2585
  %v2587 = vsel %vm2584, %v2586, %v2582
  %v2588 = vmul.f32 1.0, %v2587
  %v2589 = vtanh.pop %v2549
  %v2590 = vtanh.pop %v2550
  %v2591 = vmul.f32 %v2573, %v2488
  %v2592 = vmul.f32 %v2588, %v2489
  %2595 = vrot.lane.b32.xlu0 %v2589, 32
  %v2596 = vpop.permute.xlu0 %2595
  %2597 = vrot.lane.b32.xlu0 %v2590, 32
  %v2598 = vpop.permute.xlu0 %2597
  %v2601 = vmul.f32 %v2573, %v2596
  %v2602 = vmul.f32 %v2588, %v2598
  %2605 = vrot.lane.b32.xlu0 %v2601, 32
  %v2606 = vpop.permute.xlu0 %2605
  %2607 = vrot.lane.b32.xlu0 %v2602, 32
  %v2608 = vpop.permute.xlu0 %2607
  %v2611 = vadd.f32 %v2591, %v2606
  %v2612 = vadd.f32 %v2592, %v2608
  %v2613 = vtanh.pop %v2611
  %v2614 = vtanh.pop %v2612
  %2617 = vrot.lane.b32.xlu0 %v2613, 32
  %v2618 = vpop.permute.xlu0 %2617
  %2619 = vrot.lane.b32.xlu0 %v2614, 32
  %v2620 = vpop.permute.xlu0 %2619
  %v2623 = vmul.f32 %v2573, %v2618
  %v2624 = vmul.f32 %v2588, %v2620
  %2626 = vrot.lane.b32.xlu0 %v2623, 64
  %v2627 = vpop.permute.xlu0 %2626
  %s2629 = scalar_lea.vmem [#allocation5], 48
  %2630 = vst.msk [vmem:[%s2629] sm:$0xff] %vm693, %v2627
  %2632 = vrot.lane.b32.xlu0 %v2624, 64
  %v2633 = vpop.permute.xlu0 %2632
  %s2635 = scalar_lea.vmem [#allocation6], 8
  %2636 = vst.msk [vmem:[%s2635] sm:$0xff] %vm693, %v2633
  %v2637 = vld [vmem:[%s613] sm:$0xff]
  %v2638 = vld [vmem:[#allocation2 + $0x8] sm:$0xff]
  %v2639 = vpack.c.bf16 %v2624, %v2623
  %2641 = vrot.lane.b32.xlu0 %v2639, 64
  %v2642 = vpop.permute.xlu0 %2641
  %v2644 = vsel %vm693, %v2642, 0
  %2646 = vmatpush.bf16.msra.mxu0 0
  %2647 = vmatpush.bf16.msra.mxu0 0
  %2648 = vmatpush.bf16.msra.mxu0 0
  %2649 = vmatpush.bf16.msra.mxu0 0
  %2650 = vmatpush.bf16.msra.mxu0 0
  %2651 = vmatpush.bf16.msra.mxu0 0
  %2652 = vmatpush.bf16.msra.mxu0 %v1899
  %2653 = vmatpush.bf16.msra.mxu0 %v1897
  %2654 = vmatmul.bf16.gmra.mxu0 %v2644
  %v2655 = vpop.f32.mrf.mxu0
  %v2656 = vadd.f32 0.0, %v2655
  %v2657 = vpop.f32.mrf.mxu0
  %2658 = vdwg.mxu0
  %2659 = vmatpush.bf16.msra.mxu0 0
  %2660 = vmatpush.bf16.msra.mxu0 0
  %2661 = vmatpush.bf16.msra.mxu0 0
  %2662 = vmatpush.bf16.msra.mxu0 0
  %2663 = vmatpush.bf16.msra.mxu0 0
  %2664 = vmatpush.bf16.msra.mxu0 0
  %2665 = vmatpush.bf16.msra.mxu0 %v1900
  %2666 = vmatpush.bf16.msra.mxu0 %v1898
  %2667 = vmatmul.bf16.gmra.mxu0 %v2644
  %v2668 = vpop.f32.mrf.mxu0
  %v2669 = vpop.f32.mrf.mxu0
  %v2670 = vadd.f32 0.0, %v2669
  %2671 = vdwg.mxu0
  %v2672 = vadd.f32 %v2637, %v2656
  %v2673 = vadd.f32 %v2638, %v2670
  %v2674 = vxor.u32 %v2672, 2147483648
  %v2675 = vxor.u32 %v2673, 2147483648
  %v2676 = vmul.f32 %v2674, 1.442695
  %v2677 = vpow.pop %v2676
  %v2678 = vmul.f32 %v2675, 1.442695
  %v2679 = vpow.pop %v2678
  %v2680 = vadd.f32 %v2677, 1.0
  %v2681 = vadd.f32 %v2679, 1.0
  %v2682 = vrcp.pop %v2680
  %v2683 = vmul.f32 %v2680, %v2682
  %v2684 = vsub.f32 1.0, %v2683
  %v2685 = vmul.f32 %v2682, %v2684
  %v2686 = vadd.f32 %v2682, %v2685
  %vm2687 = vweird.f32 %v2680
  %vm2688 = vweird.f32 %v2682
  %vm2689 = vmor %vm2687, %vm2688
  %v2690 = vsel %vm2689, %v2682, %v2686
  %v2691 = vand.u32 2147483647, %v2680
  %vm2692 = vcmp.eq.f32.partialorder %v2691, 8.507059e+37
  %v2693 = vand.u32 %v2680, 2147483648
  %v2694 = vor.u32 1.1754944e-38, %v2693
  %v2695 = vsel %vm2692, %v2694, %v2690
  %v2696 = vmul.f32 1.0, %v2695
  %v2697 = vrcp.pop %v2681
  %v2698 = vmul.f32 %v2681, %v2697
  %v2699 = vsub.f32 1.0, %v2698
  %v2700 = vmul.f32 %v2697, %v2699
  %v2701 = vadd.f32 %v2697, %v2700
  %vm2702 = vweird.f32 %v2681
  %vm2703 = vweird.f32 %v2697
  %vm2704 = vmor %vm2702, %vm2703
  %v2705 = vsel %vm2704, %v2697, %v2701
  %v2706 = vand.u32 2147483647, %v2681
  %vm2707 = vcmp.eq.f32.partialorder %v2706, 8.507059e+37
  %v2708 = vand.u32 %v2681, 2147483648
  %v2709 = vor.u32 1.1754944e-38, %v2708
  %v2710 = vsel %vm2707, %v2709, %v2705
  %v2711 = vmul.f32 1.0, %v2710
  %v2712 = vtanh.pop %v2672
  %v2713 = vtanh.pop %v2673
  %v2714 = vmul.f32 %v2696, %v2611
  %v2715 = vmul.f32 %v2711, %v2612
  %2718 = vrot.lane.b32.xlu0 %v2712, 32
  %v2719 = vpop.permute.xlu0 %2718
  %2720 = vrot.lane.b32.xlu0 %v2713, 32
  %v2721 = vpop.permute.xlu0 %2720
  %v2724 = vmul.f32 %v2696, %v2719
  %v2725 = vmul.f32 %v2711, %v2721
  %2728 = vrot.lane.b32.xlu0 %v2724, 32
  %v2729 = vpop.permute.xlu0 %2728
  %2730 = vrot.lane.b32.xlu0 %v2725, 32
  %v2731 = vpop.permute.xlu0 %2730
  %v2734 = vadd.f32 %v2714, %v2729
  %v2735 = vadd.f32 %v2715, %v2731
  %v2736 = vtanh.pop %v2734
  %v2737 = vtanh.pop %v2735
  %2740 = vrot.lane.b32.xlu0 %v2736, 32
  %v2741 = vpop.permute.xlu0 %2740
  %2742 = vrot.lane.b32.xlu0 %v2737, 32
  %v2743 = vpop.permute.xlu0 %2742
  %v2746 = vmul.f32 %v2696, %v2741
  %v2747 = vmul.f32 %v2711, %v2743
  %2749 = vrot.lane.b32.xlu0 %v2746, 64
  %v2750 = vpop.permute.xlu0 %2749
  %s2752 = scalar_lea.vmem [#allocation5], 56
  %2753 = vst.msk [vmem:[%s2752] sm:$0xff] %vm693, %v2750
  %2755 = vrot.lane.b32.xlu0 %v2747, 64
  %v2756 = vpop.permute.xlu0 %2755
  %2758 = vst.msk [vmem:[#allocation6] sm:$0xff] %vm693, %v2756
  %v2759 = vld [vmem:[#allocation5] sm:$0xff]
  %v2760 = vld [vmem:[#allocation5 + $0x8] sm:$0xff]
  %v2761 = vld [vmem:[#allocation5 + $0x10] sm:$0xff]
  %v2762 = vld [vmem:[#allocation5 + $0x18] sm:$0xff]
  %v2763 = vld [vmem:[#allocation5 + $0x20] sm:$0xff]
  %v2764 = vld [vmem:[#allocation5 + $0x28] sm:$0xff]
  %v2765 = vld [vmem:[#allocation5 + $0x30] sm:$0xff]
  %v2766 = vld [vmem:[#allocation5 + $0x38] sm:$0xff]
  %v2767 = vld [vmem:[#allocation6] sm:$0xff]
  %v2768 = vld [vmem:[#allocation6 + $0x8] sm:$0xff]
  %v2769 = vld [vmem:[#allocation6 + $0x10] sm:$0xff]
  %v2770 = vld [vmem:[#allocation6 + $0x18] sm:$0xff]
  %v2771 = vld [vmem:[#allocation6 + $0x20] sm:$0xff]
  %v2772 = vld [vmem:[#allocation6 + $0x28] sm:$0xff]
  %v2773 = vld [vmem:[#allocation6 + $0x30] sm:$0xff]
  %v2774 = vld [vmem:[#allocation6 + $0x38] sm:$0xff]
  %2783 = vrot.lane.b32.xlu0 %v2767, 32
  %v2784 = vpop.permute.xlu0 %2783
  %2785 = vrot.lane.b32.xlu0 %v2768, 32
  %v2786 = vpop.permute.xlu0 %2785
  %2787 = vrot.lane.b32.xlu0 %v2769, 32
  %v2788 = vpop.permute.xlu0 %2787
  %2789 = vrot.lane.b32.xlu0 %v2770, 32
  %v2790 = vpop.permute.xlu0 %2789
  %2791 = vrot.lane.b32.xlu0 %v2771, 32
  %v2792 = vpop.permute.xlu0 %2791
  %2793 = vrot.lane.b32.xlu0 %v2772, 32
  %v2794 = vpop.permute.xlu0 %2793
  %2795 = vrot.lane.b32.xlu0 %v2773, 32
  %v2796 = vpop.permute.xlu0 %2795
  %2797 = vrot.lane.b32.xlu0 %v2774, 32
  %v2798 = vpop.permute.xlu0 %2797
  %v2807 = vsel %vm693, %v2759, %v2784
  %v2808 = vsel %vm693, %v2760, %v2786
  %v2809 = vsel %vm693, %v2761, %v2788
  %v2810 = vsel %vm693, %v2762, %v2790
  %v2811 = vsel %vm693, %v2763, %v2792
  %v2812 = vsel %vm693, %v2764, %v2794
  %v2813 = vsel %vm693, %v2765, %v2796
  %v2814 = vsel %vm693, %v2766, %v2798
  %v2815 = vld [vmem:[%s7] sm:$0xf]
  %v2816 = vlaneseq
  %v2817 = vshrl.u32 %v2816, 7
  %v2818 = vperm.slane %v2815, 0
  %vm2819 = vcmp.eq.s32.totalorder %v2817, %v2818
  %v2820 = vsel %vm2819, 1, 0
  %v2821 = vcvt.s32.f32 %v2820
  %v2822 = vperm.slane %v2821, 0
  %v2823 = vlaneseq
  %v2824 = vshrl.u32 %v2823, 7
  %2826 = vset.pattern.permute.xlu0 %v2824
  %2827 = vperm.xlu0 %2826, %v2822
  %v2828 = vpop.permute.xlu0 %2827
  %v2829 = vperm.slane %v2821, 1
  %v2830 = vlaneseq
  %v2831 = vshrl.u32 %v2830, 7
  %2833 = vset.pattern.permute.xlu0 %v2831
  %2834 = vperm.xlu0 %2833, %v2829
  %v2835 = vpop.permute.xlu0 %2834
  %v2836 = vperm.slane %v2821, 2
  %v2837 = vlaneseq
  %v2838 = vshrl.u32 %v2837, 7
  %2840 = vset.pattern.permute.xlu0 %v2838
  %2841 = vperm.xlu0 %2840, %v2836
  %v2842 = vpop.permute.xlu0 %2841
  %v2843 = vperm.slane %v2821, 3
  %v2844 = vlaneseq
  %v2845 = vshrl.u32 %v2844, 7
  %2847 = vset.pattern.permute.xlu0 %v2845
  %2848 = vperm.xlu0 %2847, %v2843
  %v2849 = vpop.permute.xlu0 %2848
  %v2850 = vperm.slane %v2821, 4
  %v2851 = vlaneseq
  %v2852 = vshrl.u32 %v2851, 7
  %2854 = vset.pattern.permute.xlu0 %v2852
  %2855 = vperm.xlu0 %2854, %v2850
  %v2856 = vpop.permute.xlu0 %2855
  %v2857 = vperm.slane %v2821, 5
  %v2858 = vlaneseq
  %v2859 = vshrl.u32 %v2858, 7
  %2861 = vset.pattern.permute.xlu0 %v2859
  %2862 = vperm.xlu0 %2861, %v2857
  %v2863 = vpop.permute.xlu0 %2862
  %v2864 = vperm.slane %v2821, 6
  %v2865 = vlaneseq
  %v2866 = vshrl.u32 %v2865, 7
  %2868 = vset.pattern.permute.xlu0 %v2866
  %2869 = vperm.xlu0 %2868, %v2864
  %v2870 = vpop.permute.xlu0 %2869
  %v2871 = vperm.slane %v2821, 7
  %v2872 = vlaneseq
  %v2873 = vshrl.u32 %v2872, 7
  %2875 = vset.pattern.permute.xlu0 %v2873
  %2876 = vperm.xlu0 %2875, %v2871
  %v2877 = vpop.permute.xlu0 %2876
  %v2878 = vmul.f32 %v2807, %v2828
  %v2879 = vmul.f32 %v2808, %v2835
  %v2880 = vmul.f32 %v2809, %v2842
  %v2881 = vmul.f32 %v2810, %v2849
  %v2882 = vmul.f32 %v2811, %v2856
  %v2883 = vmul.f32 %v2812, %v2863
  %v2884 = vmul.f32 %v2813, %v2870
  %v2885 = vmul.f32 %v2814, %v2877
  %vm2886 = vcmask 519168
  %v2887 = vsel %vm2886, %v2878, 0.0
  %v2888 = vsel %vm2886, %v2879, 0.0
  %v2889 = vadd.f32 %v2887, %v2888
  %v2890 = vsel %vm2886, %v2880, 0.0
  %v2891 = vadd.f32 %v2889, %v2890
  %v2892 = vsel %vm2886, %v2881, 0.0
  %v2893 = vadd.f32 %v2891, %v2892
  %v2894 = vsel %vm2886, %v2882, 0.0
  %v2895 = vadd.f32 %v2893, %v2894
  %v2896 = vsel %vm2886, %v2883, 0.0
  %v2897 = vadd.f32 %v2895, %v2896
  %v2898 = vsel %vm2886, %v2884, 0.0
  %v2899 = vadd.f32 %v2897, %v2898
  %v2900 = vsel %vm2886, %v2885, 0.0
  %v2901 = vadd.f32 %v2899, %v2900
  %v2902 = vperm.slane %v2815, 1
  %vm2903 = vcmp.eq.s32.totalorder %v2817, %v2902
  %v2904 = vsel %vm2903, 1, 0
  %v2905 = vcvt.s32.f32 %v2904
  %v2906 = vperm.slane %v2905, 0
  %v2907 = vlaneseq
  %v2908 = vshrl.u32 %v2907, 7
  %2910 = vset.pattern.permute.xlu0 %v2908
  %2911 = vperm.xlu0 %2910, %v2906
  %v2912 = vpop.permute.xlu0 %2911
  %v2913 = vperm.slane %v2905, 1
  %v2914 = vlaneseq
  %v2915 = vshrl.u32 %v2914, 7
  %2917 = vset.pattern.permute.xlu0 %v2915
  %2918 = vperm.xlu0 %2917, %v2913
  %v2919 = vpop.permute.xlu0 %2918
  %v2920 = vperm.slane %v2905, 2
  %v2921 = vlaneseq
  %v2922 = vshrl.u32 %v2921, 7
  %2924 = vset.pattern.permute.xlu0 %v2922
  %2925 = vperm.xlu0 %2924, %v2920
  %v2926 = vpop.permute.xlu0 %2925
  %v2927 = vperm.slane %v2905, 3
  %v2928 = vlaneseq
  %v2929 = vshrl.u32 %v2928, 7
  %2931 = vset.pattern.permute.xlu0 %v2929
  %2932 = vperm.xlu0 %2931, %v2927
  %v2933 = vpop.permute.xlu0 %2932
  %v2934 = vperm.slane %v2905, 4
  %v2935 = vlaneseq
  %v2936 = vshrl.u32 %v2935, 7
  %2938 = vset.pattern.permute.xlu0 %v2936
  %2939 = vperm.xlu0 %2938, %v2934
  %v2940 = vpop.permute.xlu0 %2939
  %v2941 = vperm.slane %v2905, 5
  %v2942 = vlaneseq
  %v2943 = vshrl.u32 %v2942, 7
  %2945 = vset.pattern.permute.xlu0 %v2943
  %2946 = vperm.xlu0 %2945, %v2941
  %v2947 = vpop.permute.xlu0 %2946
  %v2948 = vperm.slane %v2905, 6
  %v2949 = vlaneseq
  %v2950 = vshrl.u32 %v2949, 7
  %2952 = vset.pattern.permute.xlu0 %v2950
  %2953 = vperm.xlu0 %2952, %v2948
  %v2954 = vpop.permute.xlu0 %2953
  %v2955 = vperm.slane %v2905, 7
  %v2956 = vlaneseq
  %v2957 = vshrl.u32 %v2956, 7
  %2959 = vset.pattern.permute.xlu0 %v2957
  %2960 = vperm.xlu0 %2959, %v2955
  %v2961 = vpop.permute.xlu0 %2960
  %v2970 = vrot.slane %v2912, 4
  %v2971 = vrot.slane %v2919, 4
  %v2972 = vrot.slane %v2926, 4
  %v2973 = vrot.slane %v2933, 4
  %v2974 = vrot.slane %v2940, 4
  %v2975 = vrot.slane %v2947, 4
  %v2976 = vrot.slane %v2954, 4
  %v2977 = vrot.slane %v2961, 4
  %v2986 = vmul.f32 %v2807, %v2970
  %v2987 = vmul.f32 %v2808, %v2971
  %v2988 = vmul.f32 %v2809, %v2972
  %v2989 = vmul.f32 %v2810, %v2973
  %v2990 = vmul.f32 %v2811, %v2974
  %v2991 = vmul.f32 %v2812, %v2975
  %v2992 = vmul.f32 %v2813, %v2976
  %v2993 = vmul.f32 %v2814, %v2977
  %vm2994 = vcmask 523268
  %v2995 = vsel %vm2994, %v2986, 0.0
  %v2996 = vsel %vm2994, %v2987, 0.0
  %v2997 = vadd.f32 %v2995, %v2996
  %v2998 = vsel %vm2994, %v2988, 0.0
  %v2999 = vadd.f32 %v2997, %v2998
  %v3000 = vsel %vm2994, %v2989, 0.0
  %v3001 = vadd.f32 %v2999, %v3000
  %v3002 = vsel %vm2994, %v2990, 0.0
  %v3003 = vadd.f32 %v3001, %v3002
  %v3004 = vsel %vm2994, %v2991, 0.0
  %v3005 = vadd.f32 %v3003, %v3004
  %v3006 = vsel %vm2994, %v2992, 0.0
  %v3007 = vadd.f32 %v3005, %v3006
  %v3008 = vsel %vm2994, %v2993, 0.0
  %v3009 = vadd.f32 %v3007, %v3008
  %v3010 = vperm.slane %v2815, 2
  %vm3011 = vcmp.eq.s32.totalorder %v2817, %v3010
  %v3012 = vsel %vm3011, 1, 0
  %v3013 = vcvt.s32.f32 %v3012
  %v3014 = vperm.slane %v3013, 0
  %v3015 = vlaneseq
  %v3016 = vshrl.u32 %v3015, 7
  %3018 = vset.pattern.permute.xlu0 %v3016
  %3019 = vperm.xlu0 %3018, %v3014
  %v3020 = vpop.permute.xlu0 %3019
  %v3021 = vperm.slane %v3013, 1
  %v3022 = vlaneseq
  %v3023 = vshrl.u32 %v3022, 7
  %3025 = vset.pattern.permute.xlu0 %v3023
  %3026 = vperm.xlu0 %3025, %v3021
  %v3027 = vpop.permute.xlu0 %3026
  %v3028 = vperm.slane %v3013, 2
  %v3029 = vlaneseq
  %v3030 = vshrl.u32 %v3029, 7
  %3032 = vset.pattern.permute.xlu0 %v3030
  %3033 = vperm.xlu0 %3032, %v3028
  %v3034 = vpop.permute.xlu0 %3033
  %v3035 = vperm.slane %v3013, 3
  %v3036 = vlaneseq
  %v3037 = vshrl.u32 %v3036, 7
  %3039 = vset.pattern.permute.xlu0 %v3037
  %3040 = vperm.xlu0 %3039, %v3035
  %v3041 = vpop.permute.xlu0 %3040
  %v3042 = vperm.slane %v3013, 4
  %v3043 = vlaneseq
  %v3044 = vshrl.u32 %v3043, 7
  %3046 = vset.pattern.permute.xlu0 %v3044
  %3047 = vperm.xlu0 %3046, %v3042
  %v3048 = vpop.permute.xlu0 %3047
  %v3049 = vperm.slane %v3013, 5
  %v3050 = vlaneseq
  %v3051 = vshrl.u32 %v3050, 7
  %3053 = vset.pattern.permute.xlu0 %v3051
  %3054 = vperm.xlu0 %3053, %v3049
  %v3055 = vpop.permute.xlu0 %3054
  %v3056 = vperm.slane %v3013, 6
  %v3057 = vlaneseq
  %v3058 = vshrl.u32 %v3057, 7
  %3060 = vset.pattern.permute.xlu0 %v3058
  %3061 = vperm.xlu0 %3060, %v3056
  %v3062 = vpop.permute.xlu0 %3061
  %v3063 = vperm.slane %v3013, 7
  %v3064 = vlaneseq
  %v3065 = vshrl.u32 %v3064, 7
  %3067 = vset.pattern.permute.xlu0 %v3065
  %3068 = vperm.xlu0 %3067, %v3063
  %v3069 = vpop.permute.xlu0 %3068
  %v3070 = vmul.f32 %v2807, %v3020
  %v3071 = vmul.f32 %v2808, %v3027
  %v3072 = vmul.f32 %v2809, %v3034
  %v3073 = vmul.f32 %v2810, %v3041
  %v3074 = vmul.f32 %v2811, %v3048
  %v3075 = vmul.f32 %v2812, %v3055
  %v3076 = vmul.f32 %v2813, %v3062
  %v3077 = vmul.f32 %v2814, %v3069
  %vm3078 = vcmask 257024
  %v3079 = vsel %vm3078, %v3070, 0.0
  %v3080 = vsel %vm3078, %v3071, 0.0
  %v3081 = vadd.f32 %v3079, %v3080
  %v3082 = vsel %vm3078, %v3072, 0.0
  %v3083 = vadd.f32 %v3081, %v3082
  %v3084 = vsel %vm3078, %v3073, 0.0
  %v3085 = vadd.f32 %v3083, %v3084
  %v3086 = vsel %vm3078, %v3074, 0.0
  %v3087 = vadd.f32 %v3085, %v3086
  %v3088 = vsel %vm3078, %v3075, 0.0
  %v3089 = vadd.f32 %v3087, %v3088
  %v3090 = vsel %vm3078, %v3076, 0.0
  %v3091 = vadd.f32 %v3089, %v3090
  %v3092 = vsel %vm3078, %v3077, 0.0
  %v3093 = vadd.f32 %v3091, %v3092
  %v3094 = vperm.slane %v2815, 3
  %vm3095 = vcmp.eq.s32.totalorder %v2817, %v3094
  %v3096 = vsel %vm3095, 1, 0
  %v3097 = vcvt.s32.f32 %v3096
  %v3098 = vperm.slane %v3097, 0
  %v3099 = vlaneseq
  %v3100 = vshrl.u32 %v3099, 7
  %3102 = vset.pattern.permute.xlu0 %v3100
  %3103 = vperm.xlu0 %3102, %v3098
  %v3104 = vpop.permute.xlu0 %3103
  %v3105 = vperm.slane %v3097, 1
  %v3106 = vlaneseq
  %v3107 = vshrl.u32 %v3106, 7
  %3109 = vset.pattern.permute.xlu0 %v3107
  %3110 = vperm.xlu0 %3109, %v3105
  %v3111 = vpop.permute.xlu0 %3110
  %v3112 = vperm.slane %v3097, 2
  %v3113 = vlaneseq
  %v3114 = vshrl.u32 %v3113, 7
  %3116 = vset.pattern.permute.xlu0 %v3114
  %3117 = vperm.xlu0 %3116, %v3112
  %v3118 = vpop.permute.xlu0 %3117
  %v3119 = vperm.slane %v3097, 3
  %v3120 = vlaneseq
  %v3121 = vshrl.u32 %v3120, 7
  %3123 = vset.pattern.permute.xlu0 %v3121
  %3124 = vperm.xlu0 %3123, %v3119
  %v3125 = vpop.permute.xlu0 %3124
  %v3126 = vperm.slane %v3097, 4
  %v3127 = vlaneseq
  %v3128 = vshrl.u32 %v3127, 7
  %3130 = vset.pattern.permute.xlu0 %v3128
  %3131 = vperm.xlu0 %3130, %v3126
  %v3132 = vpop.permute.xlu0 %3131
  %v3133 = vperm.slane %v3097, 5
  %v3134 = vlaneseq
  %v3135 = vshrl.u32 %v3134, 7
  %3137 = vset.pattern.permute.xlu0 %v3135
  %3138 = vperm.xlu0 %3137, %v3133
  %v3139 = vpop.permute.xlu0 %3138
  %v3140 = vperm.slane %v3097, 6
  %v3141 = vlaneseq
  %v3142 = vshrl.u32 %v3141, 7
  %3144 = vset.pattern.permute.xlu0 %v3142
  %3145 = vperm.xlu0 %3144, %v3140
  %v3146 = vpop.permute.xlu0 %3145
  %v3147 = vperm.slane %v3097, 7
  %v3148 = vlaneseq
  %v3149 = vshrl.u32 %v3148, 7
  %3151 = vset.pattern.permute.xlu0 %v3149
  %3152 = vperm.xlu0 %3151, %v3147
  %v3153 = vpop.permute.xlu0 %3152
  %v3162 = vrot.slane %v3104, 4
  %v3163 = vrot.slane %v3111, 4
  %v3164 = vrot.slane %v3118, 4
  %v3165 = vrot.slane %v3125, 4
  %v3166 = vrot.slane %v3132, 4
  %v3167 = vrot.slane %v3139, 4
  %v3168 = vrot.slane %v3146, 4
  %v3169 = vrot.slane %v3153, 4
  %v3178 = vmul.f32 %v2807, %v3162
  %v3179 = vmul.f32 %v2808, %v3163
  %v3180 = vmul.f32 %v2809, %v3164
  %v3181 = vmul.f32 %v2810, %v3165
  %v3182 = vmul.f32 %v2811, %v3166
  %v3183 = vmul.f32 %v2812, %v3167
  %v3184 = vmul.f32 %v2813, %v3168
  %v3185 = vmul.f32 %v2814, %v3169
  %vm3186 = vcmask 261124
  %v3187 = vsel %vm3186, %v3178, 0.0
  %v3188 = vsel %vm3186, %v3179, 0.0
  %v3189 = vadd.f32 %v3187, %v3188
  %v3190 = vsel %vm3186, %v3180, 0.0
  %v3191 = vadd.f32 %v3189, %v3190
  %v3192 = vsel %vm3186, %v3181, 0.0
  %v3193 = vadd.f32 %v3191, %v3192
  %v3194 = vsel %vm3186, %v3182, 0.0
  %v3195 = vadd.f32 %v3193, %v3194
  %v3196 = vsel %vm3186, %v3183, 0.0
  %v3197 = vadd.f32 %v3195, %v3196
  %v3198 = vsel %vm3186, %v3184, 0.0
  %v3199 = vadd.f32 %v3197, %v3198
  %v3200 = vsel %vm3186, %v3185, 0.0
  %v3201 = vadd.f32 %v3199, %v3200
  %v3203 = vrot.slane %v3009, 4
  %v3205 = vsub.f32 %v2901, %v3203
  %v3206 = vand.u32 2147483647, %v3205
  %v3208 = vrot.slane %v2807, 4
  %v3210 = vsub.f32 %v2807, %v3208
  %v3211 = vand.u32 2147483647, %v3210
  %v3213 = vrot.slane %v3201, 4
  %v3215 = vsub.f32 %v3093, %v3213
  %v3216 = vand.u32 2147483647, %v3215
  %v3217 = vmul.f32 %v2901, %v3203
  %v3218 = vsel %vm2886, %v3217, 0.0
  %3219 = vadd.xlane.f32.xlu0 %v3218
  %v3220 = vpop.xlane.xlu0 %3219
  %v3221 = vmul.f32 %v2901, %v2901
  %v3222 = vsel %vm2886, %v3221, 0.0
  %3223 = vadd.xlane.f32.xlu0 %v3222
  %v3224 = vpop.xlane.xlu0 %3223
  %v3225 = vmul.f32 %v3009, %v3009
  %v3226 = vsel %vm2994, %v3225, 0.0
  %3227 = vadd.xlane.f32.xlu0 %v3226
  %v3228 = vpop.xlane.xlu0 %3227
  %v3230 = vrot.slane %v3228, 4
  %v3232 = vmul.f32 %v3224, %v3230
  %v3233 = vmax.f32 %v3232, 1e-12
  %v3234 = vrsqrt.pop %v3233
  %v3235 = vmul.f32 %v3234, %v3233
  %v3236 = vmul.f32 %v3235, %v3234
  %v3237 = vmul.f32 0.5, %v3236
  %v3238 = vsub.f32 1.5, %v3237
  %v3239 = vmul.f32 %v3234, %v3238
  %v3240 = vmul.f32 %v3233, %v3239
  %vm3241 = vcmp.eq.f32.partialorder %v3233, inf
  %v3242 = vsel %vm3241, %v3233, %v3240
  %vm3243 = vcmp.eq.f32.partialorder %v3233, 0.0
  %v3244 = vand.u32 %v3233, 2147483648
  %v3245 = vsel %vm3243, %v3244, %v3242
  %v3246 = vrcp.pop %v3245
  %v3247 = vmul.f32 %v3245, %v3246
  %v3248 = vsub.f32 1.0, %v3247
  %v3249 = vmul.f32 %v3246, %v3248
  %v3250 = vadd.f32 %v3246, %v3249
  %vm3251 = vweird.f32 %v3245
  %vm3252 = vweird.f32 %v3246
  %vm3253 = vmor %vm3251, %vm3252
  %v3254 = vsel %vm3253, %v3246, %v3250
  %v3255 = vand.u32 2147483647, %v3245
  %vm3256 = vcmp.eq.f32.partialorder %v3255, 8.507059e+37
  %v3257 = vand.u32 %v3245, 2147483648
  %v3258 = vor.u32 1.1754944e-38, %v3257
  %v3259 = vsel %vm3256, %v3258, %v3254
  %v3260 = vmul.f32 %v3220, %v3259
  %v3261 = vmul.f32 %v2807, %v3208
  %3263 = vrot.lane.b32.xlu0 %v3261, 96
  %v3264 = vpop.permute.xlu0 %3263
  %v3266 = vsel %vm3078, %v3264, 0.0
  %3267 = vadd.xlane.f32.xlu0 %v3266
  %v3268 = vpop.xlane.xlu0 %3267
  %v3269 = vmul.f32 %v2807, %v2807
  %3271 = vrot.lane.b32.xlu0 %v3269, 96
  %v3272 = vpop.permute.xlu0 %3271
  %v3274 = vsel %vm3078, %v3272, 0.0
  %3275 = vadd.xlane.f32.xlu0 %v3274
  %v3276 = vpop.xlane.xlu0 %3275
  %v3277 = vsel %vm3186, %v3272, 0.0
  %3278 = vadd.xlane.f32.xlu0 %v3277
  %v3279 = vpop.xlane.xlu0 %3278
  %v3281 = vrot.slane %v3279, 4
  %v3283 = vmul.f32 %v3276, %v3281
  %v3284 = vmax.f32 %v3283, 1e-12
  %v3285 = vrsqrt.pop %v3284
  %v3286 = vmul.f32 %v3285, %v3284
  %v3287 = vmul.f32 %v3286, %v3285
  %v3288 = vmul.f32 0.5, %v3287
  %v3289 = vsub.f32 1.5, %v3288
  %v3290 = vmul.f32 %v3285, %v3289
  %v3291 = vmul.f32 %v3284, %v3290
  %vm3292 = vcmp.eq.f32.partialorder %v3284, inf
  %v3293 = vsel %vm3292, %v3284, %v3291
  %vm3294 = vcmp.eq.f32.partialorder %v3284, 0.0
  %v3295 = vand.u32 %v3284, 2147483648
  %v3296 = vsel %vm3294, %v3295, %v3293
  %v3297 = vrcp.pop %v3296
  %v3298 = vmul.f32 %v3296, %v3297
  %v3299 = vsub.f32 1.0, %v3298
  %v3300 = vmul.f32 %v3297, %v3299
  %v3301 = vadd.f32 %v3297, %v3300
  %vm3302 = vweird.f32 %v3296
  %vm3303 = vweird.f32 %v3297
  %vm3304 = vmor %vm3302, %vm3303
  %v3305 = vsel %vm3304, %v3297, %v3301
  %v3306 = vand.u32 2147483647, %v3296
  %vm3307 = vcmp.eq.f32.partialorder %v3306, 8.507059e+37
  %v3308 = vand.u32 %v3296, 2147483648
  %v3309 = vor.u32 1.1754944e-38, %v3308
  %v3310 = vsel %vm3307, %v3309, %v3305
  %v3311 = vmul.f32 %v3268, %v3310
  %v3312 = vmul.f32 %v3093, %v3213
  %v3313 = vsel %vm3078, %v3312, 0.0
  %3314 = vadd.xlane.f32.xlu0 %v3313
  %v3315 = vpop.xlane.xlu0 %3314
  %v3316 = vmul.f32 %v3093, %v3093
  %v3317 = vsel %vm3078, %v3316, 0.0
  %3318 = vadd.xlane.f32.xlu0 %v3317
  %v3319 = vpop.xlane.xlu0 %3318
  %v3320 = vmul.f32 %v3201, %v3201
  %v3321 = vsel %vm3186, %v3320, 0.0
  %3322 = vadd.xlane.f32.xlu0 %v3321
  %v3323 = vpop.xlane.xlu0 %3322
  %v3325 = vrot.slane %v3323, 4
  %v3327 = vmul.f32 %v3319, %v3325
  %v3328 = vmax.f32 %v3327, 1e-12
  %v3329 = vrsqrt.pop %v3328
  %v3330 = vmul.f32 %v3329, %v3328
  %v3331 = vmul.f32 %v3330, %v3329
  %v3332 = vmul.f32 0.5, %v3331
  %v3333 = vsub.f32 1.5, %v3332
  %v3334 = vmul.f32 %v3329, %v3333
  %v3335 = vmul.f32 %v3328, %v3334
  %vm3336 = vcmp.eq.f32.partialorder %v3328, inf
  %v3337 = vsel %vm3336, %v3328, %v3335
  %vm3338 = vcmp.eq.f32.partialorder %v3328, 0.0
  %v3339 = vand.u32 %v3328, 2147483648
  %v3340 = vsel %vm3338, %v3339, %v3337
  %v3341 = vrcp.pop %v3340
  %v3342 = vmul.f32 %v3340, %v3341
  %v3343 = vsub.f32 1.0, %v3342
  %v3344 = vmul.f32 %v3341, %v3343
  %v3345 = vadd.f32 %v3341, %v3344
  %vm3346 = vweird.f32 %v3340
  %vm3347 = vweird.f32 %v3341
  %vm3348 = vmor %vm3346, %vm3347
  %v3349 = vsel %vm3348, %v3341, %v3345
  %v3350 = vand.u32 2147483647, %v3340
  %vm3351 = vcmp.eq.f32.partialorder %v3350, 8.507059e+37
  %v3352 = vand.u32 %v3340, 2147483648
  %v3353 = vor.u32 1.1754944e-38, %v3352
  %v3354 = vsel %vm3351, %v3353, %v3349
  %v3355 = vmul.f32 %v3315, %v3354
  %3357 = vrot.lane.b32.xlu0 %v3211, 32
  %v3358 = vpop.permute.xlu0 %3357
  %3361 = vrot.lane.b32.xlu0 %v3216, 96
  %v3362 = vpop.permute.xlu0 %3361
  %3365 = vrot.lane.b32.xlu0 %v3311, 1
  %v3366 = vpop.permute.xlu0 %3365
  %3369 = vrot.lane.b32.xlu0 %v3355, 2
  %v3370 = vpop.permute.xlu0 %3369
  %v3372 = vsel %vm1701, %v3206, %v3358
  %vm3373 = vcmask 785408
  %v3374 = vsel %vm3373, %v3372, %v3362
  %vm3375 = vcmask 7168
  %v3376 = vsel %vm3375, %v3260, %v3366
  %vm3377 = vcmask 15360
  %v3378 = vsel %vm3377, %v3376, %v3370
  %vm3379 = vcmask 23552
  %v3380 = vsel %vm3379, %v3378, 0.0
  %v3381 = vpack.c.bf16 %v3374, %v3374
  %v3382 = vpack.c.bf16 %v3380, %v3380
  %v3383 = vld [vmem:[%s8] sm:$0xf]
  %v3384 = vld [vmem:[%s8 + $0x4] sm:$0xf]
  %v3385 = vld [vmem:[%s8 + $0x8] sm:$0xf]
  %v3386 = vld [vmem:[%s8 + $0xc] sm:$0xf]
  %v3387 = vld [vmem:[%s8 + $0x10] sm:$0xf]
  %v3388 = vld [vmem:[%s8 + $0x14] sm:$0xf]
  %v3389 = vld [vmem:[%s8 + $0x18] sm:$0xf]
  %v3390 = vld [vmem:[%s8 + $0x1c] sm:$0xf]
  %v3391 = vld [vmem:[%s8 + $0x20] sm:$0xf]
  %v3392 = vld [vmem:[%s8 + $0x24] sm:$0xf]
  %v3393 = vld [vmem:[%s8 + $0x28] sm:$0xf]
  %v3394 = vld [vmem:[%s8 + $0x2c] sm:$0xf]
  %v3395 = vld [vmem:[%s8 + $0x30] sm:$0xf]
  %v3396 = vld [vmem:[%s8 + $0x34] sm:$0xf]
  %v3397 = vld [vmem:[%s8 + $0x38] sm:$0xf]
  %v3398 = vld [vmem:[%s8 + $0x3c] sm:$0xf]
  %v3399 = vld [vmem:[%s8 + $0x40] sm:$0xf]
  %v3400 = vld [vmem:[%s8 + $0x44] sm:$0xf]
  %v3401 = vld [vmem:[%s8 + $0x48] sm:$0xf]
  %v3402 = vld [vmem:[%s8 + $0x4c] sm:$0xf]
  %v3403 = vld [vmem:[%s8 + $0x50] sm:$0xf]
  %v3404 = vld [vmem:[%s8 + $0x54] sm:$0xf]
  %v3405 = vld [vmem:[%s8 + $0x58] sm:$0xf]
  %v3406 = vld [vmem:[%s8 + $0x5c] sm:$0xf]
  %v3407 = vld [vmem:[%s8 + $0x60] sm:$0xf]
  %v3408 = vld [vmem:[%s8 + $0x64] sm:$0xf]
  %v3409 = vld [vmem:[%s8 + $0x68] sm:$0xf]
  %v3410 = vld [vmem:[%s8 + $0x6c] sm:$0xf]
  %v3411 = vld [vmem:[%s8 + $0x70] sm:$0xf]
  %v3412 = vld [vmem:[%s8 + $0x74] sm:$0xf]
  %v3413 = vld [vmem:[%s8 + $0x78] sm:$0xf]
  %v3414 = vld [vmem:[%s8 + $0x7c] sm:$0xf]
  %v3415 = vld [vmem:[%s9] sm:$0x1]
  %v3417 = vperm.slane %v3415, 0
  %v3451 = vunpack.c.l.b16 %v3383
  %v3452 = vunpack.c.l.b16 %v3384
  %v3453 = vunpack.c.l.b16 %v3385
  %v3454 = vunpack.c.l.b16 %v3386
  %v3455 = vunpack.c.l.b16 %v3387
  %v3456 = vunpack.c.l.b16 %v3388
  %v3457 = vunpack.c.l.b16 %v3389
  %v3458 = vunpack.c.l.b16 %v3390
  %v3459 = vunpack.c.l.b16 %v3391
  %v3460 = vunpack.c.l.b16 %v3392
  %v3461 = vunpack.c.l.b16 %v3393
  %v3462 = vunpack.c.l.b16 %v3394
  %v3463 = vunpack.c.l.b16 %v3395
  %v3464 = vunpack.c.l.b16 %v3396
  %v3465 = vunpack.c.l.b16 %v3397
  %v3466 = vunpack.c.l.b16 %v3398
  %v3467 = vunpack.c.l.b16 %v3399
  %v3468 = vunpack.c.l.b16 %v3400
  %v3469 = vunpack.c.l.b16 %v3401
  %v3470 = vunpack.c.l.b16 %v3402
  %v3471 = vunpack.c.l.b16 %v3403
  %v3472 = vunpack.c.l.b16 %v3404
  %v3473 = vunpack.c.l.b16 %v3405
  %v3474 = vunpack.c.l.b16 %v3406
  %v3475 = vunpack.c.l.b16 %v3407
  %v3476 = vunpack.c.l.b16 %v3408
  %v3477 = vunpack.c.l.b16 %v3409
  %v3478 = vunpack.c.l.b16 %v3410
  %v3479 = vunpack.c.l.b16 %v3411
  %v3480 = vunpack.c.l.b16 %v3412
  %v3481 = vunpack.c.l.b16 %v3413
  %v3482 = vunpack.c.l.b16 %v3414
  %v3483 = vpack.c.b16 %v3452, %v3451
  %v3484 = vpack.c.b16 %v3454, %v3453
  %v3485 = vpack.c.b16 %v3456, %v3455
  %v3486 = vpack.c.b16 %v3458, %v3457
  %v3487 = vpack.c.b16 %v3460, %v3459
  %v3488 = vpack.c.b16 %v3462, %v3461
  %v3489 = vpack.c.b16 %v3464, %v3463
  %v3490 = vpack.c.b16 %v3466, %v3465
  %v3491 = vpack.c.b16 %v3468, %v3467
  %v3492 = vpack.c.b16 %v3470, %v3469
  %v3493 = vpack.c.b16 %v3472, %v3471
  %v3494 = vpack.c.b16 %v3474, %v3473
  %v3495 = vpack.c.b16 %v3476, %v3475
  %v3496 = vpack.c.b16 %v3478, %v3477
  %v3497 = vpack.c.b16 %v3480, %v3479
  %v3498 = vpack.c.b16 %v3482, %v3481
  %3515 = vmatpush.bf16.msra.mxu0 %v3490
  %3516 = vmatpush.bf16.msra.mxu0 %v3489
  %3517 = vmatpush.bf16.msra.mxu0 %v3488
  %3518 = vmatpush.bf16.msra.mxu0 %v3487
  %3519 = vmatpush.bf16.msra.mxu0 %v3486
  %3520 = vmatpush.bf16.msra.mxu0 %v3485
  %3521 = vmatpush.bf16.msra.mxu0 %v3484
  %3522 = vmatpush.bf16.msra.mxu0 %v3483
  %3523 = vmatmul.bf16.gmra.mxu0 %v3381
  %v3524 = vpop.f32.mrf.mxu0
  %v3525 = vadd.f32 %v3417, %v3524
  %v3526 = vpop.f32.mrf.mxu0
  %3527 = vdwg.mxu0
  %3528 = vmatpush.bf16.msra.mxu0 %v3498
  %3529 = vmatpush.bf16.msra.mxu0 %v3497
  %3530 = vmatpush.bf16.msra.mxu0 %v3496
  %3531 = vmatpush.bf16.msra.mxu0 %v3495
  %3532 = vmatpush.bf16.msra.mxu0 %v3494
  %3533 = vmatpush.bf16.msra.mxu0 %v3493
  %3534 = vmatpush.bf16.msra.mxu0 %v3492
  %3535 = vmatpush.bf16.msra.mxu0 %v3491
  %3536 = vmatmul.bf16.gmra.mxu0 %v3382
  %v3537 = vpop.f32.mrf.mxu0
  %v3538 = vadd.f32 %v3525, %v3537
  %v3539 = vpop.f32.mrf.mxu0
  %3540 = vdwg.mxu0
  %v3541 = vmax.f32 %v3538, 0.0
  %v3542 = vld [vmem:[%s10] sm:$0x1]
  %v3544 = vperm.slane %v3542, 0
  %v3546 = vmul.f32 %v3541, %v3544
  %v3547 = vsel %vm3078, %v3546, 0.0
  %3548 = vadd.xlane.f32.xlu0 %v3547
  %v3549 = vpop.xlane.xlu0 %3548
  %v3550 = vld [vmem:[#allocation7] sm:$0x1]
  %v3552 = vperm.slane %v3550, 0
  %v3554 = vadd.f32 %v3549, %v3552
  %v3555 = vxor.u32 %v3554, 2147483648
  %v3556 = vmul.f32 %v3555, 1.442695
  %v3557 = vpow.pop %v3556
  %v3558 = vadd.f32 %v3557, 1.0
  %v3559 = vrcp.pop %v3558
  %v3560 = vmul.f32 %v3558, %v3559
  %v3561 = vsub.f32 1.0, %v3560
  %v3562 = vmul.f32 %v3559, %v3561
  %v3563 = vadd.f32 %v3559, %v3562
  %vm3564 = vweird.f32 %v3558
  %vm3565 = vweird.f32 %v3559
  %vm3566 = vmor %vm3564, %vm3565
  %v3567 = vsel %vm3566, %v3559, %v3563
  %v3568 = vand.u32 2147483647, %v3558
  %vm3569 = vcmp.eq.f32.partialorder %v3568, 8.507059e+37
  %v3570 = vand.u32 %v3558, 2147483648
  %v3571 = vor.u32 1.1754944e-38, %v3570
  %v3572 = vsel %vm3569, %v3571, %v3567
  %v3573 = vmul.f32 1.0, %v3572
  %3575 = vrot.lane.b32.xlu0 %v3573, 1
  %v3576 = vpop.permute.xlu0 %3575
  %v3578 = vsel %vm3375, %v3554, %v3576
  %vm3579 = vcmask 11264
  %3580 = vst.msk [vmem:[%s12] sm:$0xf] %vm3579, %v3578
  // Predicated region
  $region50: #{classifier_forward.1} parent=0 // pred_check
    _
  $region51: #{classifier_forward.1} parent=0 // pred_check_branch
    %3582 = sbr.rel (0) target = $region53
  $region52: #{classifier_forward.1} parent=0 // pred_region
    _
  $region53: #{classifier_forward.1} parent=0 // pred_fallthru
    _
  // Predicated region
  $region54: #{classifier_forward.1} parent=0 // pred_check
    _
  $region55: #{classifier_forward.1} parent=0 // pred_check_branch
    %3584 = sbr.rel (0) target = $region57
  $region56: #{classifier_forward.1} parent=0 // pred_region
    _
  $region57: #{classifier_forward.1} parent=0 // pred_fallthru
    _

</llo_original>
